<compile_context>
chip_gen: v7x
topology: tpu7x:2x2x1
jax: 0.10.0
libtpu: 0.0.40
codegen_flags: <defaults>
</compile_context>

<pallas_src>
import math
from functools import partial

import jax
import jax.numpy as jnp
from jax import lax
from jax.experimental import pallas as pl
from jax.experimental.pallas import tpu as pltpu


def _layernorm(h, w, b, eps=1e-5):
    mu = jnp.mean(h, axis=-1, keepdims=True)
    var = jnp.mean((h - mu) ** 2, axis=-1, keepdims=True)
    return (h - mu) * lax.rsqrt(var + eps) * w + b


def _new_gelu(x):
    c = math.sqrt(2.0 / math.pi)
    return 0.5 * x * (1.0 + jnp.tanh(c * (x + 0.044715 * x ** 3)))


def _pick_tile(n, target, aligns=(128, 8)):
    """Largest divisor of n that is <= target, preferring hw-aligned sizes."""
    cands = [d for d in range(1, min(n, target) + 1) if n % d == 0]
    for a in aligns:
        aligned = [d for d in cands if d % a == 0]
        if aligned:
            return max(aligned)
    return max(cands)


def _physical_vmem_bytes():
    """Architecture-aware VMEM capacity (falls back to the v7x 64 MiB floor)."""
    try:
        info = pltpu.get_tpu_info()
        v = getattr(info, "vmem_capacity_bytes", None)
        if v:
            return int(v)
    except Exception:
        pass
    return 64 << 20


def block_kernel(x_ref,
                 ln1w_ref, ln1b_ref,
                 wqkv_ref, bqkv_ref,
                 wpro_ref, bpro_ref,
                 ln2w_ref, ln2b_ref,
                 wfc_ref, bfc_ref,
                 wmp_ref, bmp_ref,
                 o_ref,
                 qkv_scr, y_scr,
                 *, n_head, tq, tf, tm):
    f32 = jnp.float32
    bf16 = jnp.bfloat16

    # One batch element per grid step.
    x = x_ref[0].astype(f32)                                 # (T, C)
    T, C = x.shape
    hd = C // n_head
    n_qt = T // tq
    n_ff = wfc_ref.shape[1] // tf
    n_rt = T // tm
    scale = 1.0 / math.sqrt(hd)

    # ---- ln_1 + fused qkv projection (bf16 MXU inputs, f32 accumulate) ----
    h1 = _layernorm(x, ln1w_ref[0], ln1b_ref[0])
    qkv = jnp.dot(h1.astype(bf16), wqkv_ref[...],
                  preferred_element_type=f32) + bqkv_ref[0]           # (T, 3C)
    qkv_scr[...] = qkv.astype(bf16)        # bf16 scratch: half VMEM / load bytes

    # ---- causal self-attention: qt outer, heads inner ----
    # Causal mask built once per query tile; only the causally visible keys
    # (kv_len = (qt+1)*tq) are touched, so fully-masked kv tiles are skipped.
    # NOTE: per-head contraction K = hd underfills the 256-wide v6e/v7x MXU.
    for qt in range(n_qt):
        r0 = qt * tq
        kv_len = (qt + 1) * tq
        row = r0 + lax.broadcasted_iota(jnp.int32, (tq, kv_len), 0)
        col = lax.broadcasted_iota(jnp.int32, (tq, kv_len), 1)
        causal = col <= row                     # hoisted out of the head loop

        head_outs = []
        for h in range(n_head):
            qo = h * hd
            ko = C + h * hd
            vo = 2 * C + h * hd
            q_t = qkv_scr[r0:r0 + tq, qo:qo + hd]           # (tq, hd) bf16
            k_a = qkv_scr[0:kv_len, ko:ko + hd]             # (kv, hd) bf16
            v_a = qkv_scr[0:kv_len, vo:vo + hd]             # (kv, hd) bf16

            # q @ k^T without materializing a transpose.
            s = lax.dot_general(q_t, k_a, (((1,), (1,)), ((), ())),
                                preferred_element_type=f32) * scale  # (tq, kv)
            s = jnp.where(causal, s, jnp.float32(-1e30))

            # numerically-stable softmax; reciprocal on the EUP slot.
            s = s - jnp.max(s, axis=-1, keepdims=True)
            p = jnp.exp(s)
            p = p * pl.reciprocal(jnp.sum(p, axis=-1, keepdims=True),
                                  approx=True)

            head_outs.append(jnp.dot(p.astype(bf16), v_a,
                                     preferred_element_type=f32))    # (tq, hd)

        # Lane-dense (tq, C) store: all heads concatenated, one unmasked vst.
        y_scr[r0:r0 + tq, :] = jnp.concatenate(head_outs, axis=-1).astype(bf16)

    # ---- output projection + residual 1 ----
    att = jnp.dot(y_scr[...], wpro_ref[...],
                  preferred_element_type=f32) + bpro_ref[0]
    x1 = x + att

    # ---- ln_2 + MLP, tiled over T rows and the 4C hidden dim ----
    # Accumulator stays (tm, C); the (T, 4C) intermediate never materializes;
    # each finished row tile is written straight to the output (residual 2).
    h2 = _layernorm(x1, ln2w_ref[0], ln2b_ref[0])
    for rt in range(n_rt):
        r0 = rt * tm
        h2_t = h2[r0:r0 + tm].astype(bf16)                            # (tm, C)
        acc = jnp.zeros((tm, C), f32)
        for j in range(n_ff):
            c0 = j * tf
            hf = jnp.dot(h2_t, wfc_ref[:, c0:c0 + tf],
                         preferred_element_type=f32) + bfc_ref[0, c0:c0 + tf]
            hf = _new_gelu(hf)                                        # f32 math
            acc = acc + jnp.dot(hf.astype(bf16), wmp_ref[c0:c0 + tf, :],
                                preferred_element_type=f32)
        o_ref[0, r0:r0 + tm, :] = (x1[r0:r0 + tm] + acc
                                   + bmp_ref[0]).astype(o_ref.dtype)


def transformer_block(x, params, n_head):
    B, T, C = x.shape
    (ln1w, ln1b, wqkv, bqkv, wpro, bpro,
     ln2w, ln2b, wfc, bfc, wmp, bmp) = params

    bf16 = jnp.bfloat16
    # bf16 weights: halves weight HBM->VMEM traffic and feeds the MXU natively.
    wqkv, wpro, wfc, wmp = (w.astype(bf16) for w in (wqkv, wpro, wfc, wmp))

    tq = _pick_tile(T, 256, (128, 8))          # query tile
    tm = _pick_tile(T, 256, (128, 8))          # MLP row tile
    tf = _pick_tile(4 * C, 512, (128, 8))      # MLP hidden tile

    consts = (ln1w, ln1b, wqkv, bqkv, wpro, bpro,
              ln2w, ln2b, wfc, bfc, wmp, bmp)

    # Architecture-aware VMEM budget (v7x only has 64 MiB physical per TC).
    wbytes = sum(int(w.size) * w.dtype.itemsize for w in (wqkv, wpro, wfc, wmp))
    bbytes = sum(int(p.size) * p.dtype.itemsize
                 for p in (ln1w, ln1b, bqkv, bpro, ln2w, ln2b, bfc, bmp))
    scr_bytes = T * 3 * C * 2 + T * C * 2                   # bf16 scratches
    io_bytes = 2 * 2 * T * C * 4                            # x / out, 2-buffered
    live_bytes = 5 * T * C * 4 + tq * T * 4 + tm * tf * 4   # f32 live values
    need = 2 * (wbytes + bbytes) + scr_bytes + io_bytes + live_bytes + (4 << 20)
    cap = max(_physical_vmem_bytes() - (8 << 20), 16 << 20)
    vmem_limit = int(min(max(need, 32 << 20), cap))

    cost = pl.CostEstimate(
        flops=int(B * (24 * T * C * C + 2 * C * T * T)),
        transcendentals=int(B * (n_head * T * T // 2 + 4 * T * C)),
        bytes_accessed=int(2 * B * T * C * 4 + wbytes + bbytes
                           + 2 * B * scr_bytes),
    )

    def run(pmode):
        def const_spec(a):
            # Constant block across the (B,) grid.
            if pmode is None:
                return pl.BlockSpec(a.shape, lambda b, nd=a.ndim: (0,) * nd)
            return pl.BlockSpec(a.shape, lambda b, nd=a.ndim: (0,) * nd,
                                pipeline_mode=pmode)

        return pl.pallas_call(
            partial(block_kernel, n_head=n_head, tq=tq, tf=tf, tm=tm),
            out_shape=jax.ShapeDtypeStruct((B, T, C), x.dtype),
            grid_spec=pltpu.PrefetchScalarGridSpec(
                num_scalar_prefetch=0,
                grid=(B,),
                in_specs=[pl.BlockSpec((1, T, C), lambda b: (b, 0, 0))]  # x
                         + [const_spec(a) for a in consts],
                out_specs=pl.BlockSpec((1, T, C), lambda b: (b, 0, 0)),
                scratch_shapes=[
                    pltpu.VMEM((T, 3 * C), bf16),   # qkv (biased), per batch
                    pltpu.VMEM((T, C), bf16),       # attention output (heads)
                ],
            ),
            compiler_params=pltpu.CompilerParams(
                dimension_semantics=("parallel",),
                vmem_limit_bytes=vmem_limit,
            ),
            cost_estimate=cost,
        )(x, *consts)

    try:
        # Single-buffer constant-index weights/biases: halves their VMEM cost.
        return run(pl.Buffered(1))
    except Exception:
        # Fallback for jax versions without single-buffer pipeline_mode support.
        return run(None)


# ------------------------- pure-JAX reference -------------------------
def reference_block(x, params, n_head):
    (ln1w, ln1b, wqkv, bqkv, wpro, bpro,
     ln2w, ln2b, wfc, bfc, wmp, bmp) = params
    B, T, C = x.shape
    hd = C // n_head

    h = _layernorm(x, ln1w[0], ln1b[0])
    qkv = h @ wqkv + bqkv[0]
    q, k, v = jnp.split(qkv, 3, axis=-1)
    q = q.reshape(B, T, n_head, hd).transpose(0, 2, 1, 3)
    k = k.reshape(B, T, n_head, hd).transpose(0, 2, 1, 3)
    v = v.reshape(B, T, n_head, hd).transpose(0, 2, 1, 3)
    att = jnp.einsum('bhtd,bhsd->bhts', q, k) / math.sqrt(hd)
    mask = jnp.tril(jnp.ones((T, T), bool))
    att = jnp.where(mask[None, None], att, -jnp.inf)
    att = jax.nn.softmax(att, axis=-1)
    y = jnp.einsum('bhts,bhsd->bhtd', att, v)
    y = y.transpose(0, 2, 1, 3).reshape(B, T, C)
    x = x + (y @ wpro + bpro[0])
    h2 = _layernorm(x, ln2w[0], ln2b[0])
    hf = _new_gelu(h2 @ wfc + bfc[0])
    return x + (hf @ wmp + bmp[0])


if __name__ == "__main__":
    B, T, C, n_head = 2, 8, 32, 4

    key = jax.random.PRNGKey(0)
    keys = jax.random.split(key, 8)

    # Deterministic parameter init (weights ~ N(0, 0.02), biases small).
    # Linear weights stored as (in_features, out_features); 1-D params as (1, N).
    ln1w = jnp.ones((1, C), jnp.float32)
    ln1b = jnp.zeros((1, C), jnp.float32)
    ln2w = jnp.ones((1, C), jnp.float32)
    ln2b = jnp.zeros((1, C), jnp.float32)
    wqkv = 0.02 * jax.random.normal(keys[0], (C, 3 * C), jnp.float32)
    bqkv = 0.01 * jax.random.normal(keys[1], (1, 3 * C), jnp.float32)
    wpro = 0.02 * jax.random.normal(keys[2], (C, C), jnp.float32)
    bpro = 0.01 * jax.random.normal(keys[3], (1, C), jnp.float32)
    wfc = 0.02 * jax.random.normal(keys[4], (C, 4 * C), jnp.float32)
    bfc = 0.01 * jax.random.normal(keys[5], (1, 4 * C), jnp.float32)
    wmp = 0.02 * jax.random.normal(keys[6], (4 * C, C), jnp.float32)
    bmp = 0.01 * jax.random.normal(keys[7], (1, C), jnp.float32)

    params = (ln1w, ln1b, wqkv, bqkv, wpro, bpro,
              ln2w, ln2b, wfc, bfc, wmp, bmp)

    x = jax.random.normal(jax.random.PRNGKey(42), (B, T, C), jnp.float32)

    out = transformer_block(x, params, n_head)
    out = jax.block_until_ready(out)

    ref = reference_block(x, params, n_head)
    assert out.shape == (B, T, C)
    err = float(jnp.max(jnp.abs(out - ref)))
    # bf16 MXU inputs / bf16 scratches + approx reciprocal => bf16-level tolerance.
    assert err < 1e-2, f"max err {err}"

    print("KERNEL_OK")
</pallas_src>

<mosaic_0001>
module attributes {stable_mosaic.version = 11 : i64} {
  func.func @block_kernel(%arg0: i32, %arg1: memref<1x8x32xf32, #tpu.memory_space<vmem>>, %arg2: memref<1x32xf32, #tpu.memory_space<vmem>>, %arg3: memref<1x32xf32, #tpu.memory_space<vmem>>, %arg4: memref<32x96xbf16, #tpu.memory_space<vmem>>, %arg5: memref<1x96xf32, #tpu.memory_space<vmem>>, %arg6: memref<32x32xbf16, #tpu.memory_space<vmem>>, %arg7: memref<1x32xf32, #tpu.memory_space<vmem>>, %arg8: memref<1x32xf32, #tpu.memory_space<vmem>>, %arg9: memref<1x32xf32, #tpu.memory_space<vmem>>, %arg10: memref<32x128xbf16, #tpu.memory_space<vmem>>, %arg11: memref<1x128xf32, #tpu.memory_space<vmem>>, %arg12: memref<128x32xbf16, #tpu.memory_space<vmem>>, %arg13: memref<1x32xf32, #tpu.memory_space<vmem>>, %arg14: memref<1x8x32xf32, #tpu.memory_space<vmem>>, %arg15: memref<8x96xbf16, #tpu.memory_space<vmem>>, %arg16: memref<8x32xbf16, #tpu.memory_space<vmem>>) attributes {dimension_semantics = [#tpu.dimension_semantics<parallel>], iteration_bounds = array<i64: 2>, scalar_prefetch = 0 : i64, scratch_operands = 2 : i64, tpu.core_type = #tpu.core_type<tc>, window_params = [{transform_indices = @transform_0, window_bounds = array<i64: 1, 8, 32>}, {pipeline_mode = #tpu.pipeline_mode<synchronous>, transform_indices = @transform_1, window_bounds = array<i64: 1, 32>}, {pipeline_mode = #tpu.pipeline_mode<synchronous>, transform_indices = @transform_2, window_bounds = array<i64: 1, 32>}, {pipeline_mode = #tpu.pipeline_mode<synchronous>, transform_indices = @transform_3, window_bounds = array<i64: 32, 96>}, {pipeline_mode = #tpu.pipeline_mode<synchronous>, transform_indices = @transform_4, window_bounds = array<i64: 1, 96>}, {pipeline_mode = #tpu.pipeline_mode<synchronous>, transform_indices = @transform_5, window_bounds = array<i64: 32, 32>}, {pipeline_mode = #tpu.pipeline_mode<synchronous>, transform_indices = @transform_6, window_bounds = array<i64: 1, 32>}, {pipeline_mode = #tpu.pipeline_mode<synchronous>, transform_indices = @transform_7, window_bounds = array<i64: 1, 32>}, {pipeline_mode = #tpu.pipeline_mode<synchronous>, transform_indices = @transform_8, window_bounds = array<i64: 1, 32>}, {pipeline_mode = #tpu.pipeline_mode<synchronous>, transform_indices = @transform_9, window_bounds = array<i64: 32, 128>}, {pipeline_mode = #tpu.pipeline_mode<synchronous>, transform_indices = @transform_10, window_bounds = array<i64: 1, 128>}, {pipeline_mode = #tpu.pipeline_mode<synchronous>, transform_indices = @transform_11, window_bounds = array<i64: 128, 32>}, {pipeline_mode = #tpu.pipeline_mode<synchronous>, transform_indices = @transform_12, window_bounds = array<i64: 1, 32>}, {transform_indices = @transform_13, window_bounds = array<i64: 1, 8, 32>}]} {
    %c0 = arith.constant 0 : index
    %c0_0 = arith.constant 0 : index
    %c0_1 = arith.constant 0 : index
    %0 = vector.load %arg1[%c0, %c0_0, %c0_1] : memref<1x8x32xf32, #tpu.memory_space<vmem>>, vector<1x8x32xf32>
    %1 = vector.shape_cast %0 : vector<1x8x32xf32> to vector<8x32xf32>
    %c0_2 = arith.constant 0 : index
    %c0_3 = arith.constant 0 : index
    %2 = vector.load %arg2[%c0_2, %c0_3] : memref<1x32xf32, #tpu.memory_space<vmem>>, vector<1x32xf32>
    %3 = vector.shape_cast %2 : vector<1x32xf32> to vector<32xf32>
    %c0_4 = arith.constant 0 : index
    %c0_5 = arith.constant 0 : index
    %4 = vector.load %arg3[%c0_4, %c0_5] : memref<1x32xf32, #tpu.memory_space<vmem>>, vector<1x32xf32>
    %5 = vector.shape_cast %4 : vector<1x32xf32> to vector<32xf32>
    %cst = arith.constant dense<0.000000e+00> : vector<8xf32>
    %6 = vector.multi_reduction <add>, %1, %cst [1] : vector<8x32xf32> to vector<8xf32>
    %7 = vector.shape_cast %6 : vector<8xf32> to vector<8x1xf32>
    %cst_6 = arith.constant 3.200000e+01 : f32
    %8 = vector.broadcast %cst_6 : f32 to vector<8x1xf32>
    %9 = arith.divf %7, %8 : vector<8x1xf32>
    %10 = vector.broadcast %9 : vector<8x1xf32> to vector<8x32xf32>
    %11 = arith.subf %1, %10 : vector<8x32xf32>
    %12 = arith.mulf %11, %11 : vector<8x32xf32>
    %cst_7 = arith.constant dense<0.000000e+00> : vector<8xf32>
    %13 = vector.multi_reduction <add>, %12, %cst_7 [1] : vector<8x32xf32> to vector<8xf32>
    %14 = vector.shape_cast %13 : vector<8xf32> to vector<8x1xf32>
    %cst_8 = arith.constant 3.200000e+01 : f32
    %15 = vector.broadcast %cst_8 : f32 to vector<8x1xf32>
    %16 = arith.divf %14, %15 : vector<8x1xf32>
    %17 = vector.broadcast %9 : vector<8x1xf32> to vector<8x32xf32>
    %18 = arith.subf %1, %17 : vector<8x32xf32>
    %cst_9 = arith.constant 9.99999974E-6 : f32
    %19 = vector.broadcast %cst_9 : f32 to vector<8x1xf32>
    %20 = arith.addf %16, %19 : vector<8x1xf32>
    %21 = math.rsqrt %20 : vector<8x1xf32>
    %22 = vector.broadcast %21 : vector<8x1xf32> to vector<8x32xf32>
    %23 = arith.mulf %18, %22 : vector<8x32xf32>
    %24 = vector.shape_cast %3 : vector<32xf32> to vector<1x32xf32>
    %25 = vector.broadcast %24 : vector<1x32xf32> to vector<8x32xf32>
    %26 = arith.mulf %23, %25 : vector<8x32xf32>
    %27 = vector.shape_cast %5 : vector<32xf32> to vector<1x32xf32>
    %28 = vector.broadcast %27 : vector<1x32xf32> to vector<8x32xf32>
    %29 = arith.addf %26, %28 : vector<8x32xf32>
    %30 = arith.truncf %29 : vector<8x32xf32> to vector<8x32xbf16>
    %c0_10 = arith.constant 0 : index
    %c0_11 = arith.constant 0 : index
    %31 = vector.load %arg4[%c0_10, %c0_11] : memref<32x96xbf16, #tpu.memory_space<vmem>>, vector<32x96xbf16>
    %cst_12 = arith.constant dense<0.000000e+00> : vector<8x96xf32>
    %32 = tpu.matmul %30, %31, %cst_12 {dimension_numbers = #tpu.dot_dimension_numbers<[1], [0], [0], [1], [0, 0, 1, 1], [], []>} : vector<8x32xbf16>, vector<32x96xbf16>, vector<8x96xf32> -> vector<8x96xf32>
    %c0_13 = arith.constant 0 : index
    %c0_14 = arith.constant 0 : index
    %33 = vector.load %arg5[%c0_13, %c0_14] : memref<1x96xf32, #tpu.memory_space<vmem>>, vector<1x96xf32>
    %34 = vector.shape_cast %33 : vector<1x96xf32> to vector<96xf32>
    %35 = vector.shape_cast %34 : vector<96xf32> to vector<1x96xf32>
    %36 = vector.broadcast %35 : vector<1x96xf32> to vector<8x96xf32>
    %37 = arith.addf %32, %36 : vector<8x96xf32>
    %38 = arith.truncf %37 : vector<8x96xf32> to vector<8x96xbf16>
    %c0_15 = arith.constant 0 : index
    %c0_16 = arith.constant 0 : index
    %39 = vector.load %arg15[%c0_15, %c0_16] : memref<8x96xbf16, #tpu.memory_space<vmem>>, vector<8x96xbf16>
    tpu.vector_store %arg15[%c0_15, %c0_16], %38 {strides = array<i32>} : memref<8x96xbf16, #tpu.memory_space<vmem>>, vector<8x96xbf16>,
    %40 = tpu.iota {dimensions = array<i32: 0>} : vector<8x8xi32>
    %c0_i32 = arith.constant 0 : i32
    %41 = vector.broadcast %c0_i32 : i32 to vector<8x8xi32>
    %42 = arith.addi %41, %40 : vector<8x8xi32>
    %43 = tpu.iota {dimensions = array<i32: 1>} : vector<8x8xi32>
    %44 = arith.cmpi sle, %43, %42 : vector<8x8xi32>
    %c0_17 = arith.constant 0 : index
    %c0_18 = arith.constant 0 : index
    %45 = vector.load %arg15[%c0_17, %c0_18] : memref<8x96xbf16, #tpu.memory_space<vmem>>, vector<8x8xbf16>
    %c0_19 = arith.constant 0 : index
    %c32 = arith.constant 32 : index
    %46 = vector.load %arg15[%c0_19, %c32] : memref<8x96xbf16, #tpu.memory_space<vmem>>, vector<8x8xbf16>
    %c0_20 = arith.constant 0 : index
    %c64 = arith.constant 64 : index
    %47 = vector.load %arg15[%c0_20, %c64] : memref<8x96xbf16, #tpu.memory_space<vmem>>, vector<8x8xbf16>
    %cst_21 = arith.constant dense<0.000000e+00> : vector<8x8xf32>
    %48 = tpu.matmul %45, %46, %cst_21 {dimension_numbers = #tpu.dot_dimension_numbers<[1], [1], [0], [0], [0, 0, 1, 0], [], []>} : vector<8x8xbf16>, vector<8x8xbf16>, vector<8x8xf32> -> vector<8x8xf32>
    %cst_22 = arith.constant 0.353553385 : f32
    %49 = vector.broadcast %cst_22 : f32 to vector<8x8xf32>
    %50 = arith.mulf %48, %49 : vector<8x8xf32>
    %cst_23 = arith.constant -1.000000e+30 : f32
    %51 = vector.broadcast %cst_23 : f32 to vector<8x8xf32>
    %52 = arith.select %44, %50, %51 : vector<8x8xi1>, vector<8x8xf32>
    %cst_24 = arith.constant dense<0xFF800000> : vector<8xf32>
    %53 = vector.multi_reduction <maximumf>, %52, %cst_24 [1] : vector<8x8xf32> to vector<8xf32>
    %54 = vector.shape_cast %53 : vector<8xf32> to vector<8x1xf32>
    %55 = vector.broadcast %54 : vector<8x1xf32> to vector<8x8xf32>
    %56 = arith.subf %52, %55 : vector<8x8xf32>
    %57 = math.exp %56 : vector<8x8xf32>
    %cst_25 = arith.constant dense<0.000000e+00> : vector<8xf32>
    %58 = vector.multi_reduction <add>, %57, %cst_25 [1] : vector<8x8xf32> to vector<8xf32>
    %59 = vector.shape_cast %58 : vector<8xf32> to vector<8x1xf32>
    %60 = tpu.reciprocal %59 {approx = true} : vector<8x1xf32> -> vector<8x1xf32>
    %61 = vector.broadcast %60 : vector<8x1xf32> to vector<8x8xf32>
    %62 = arith.mulf %57, %61 : vector<8x8xf32>
    %63 = arith.truncf %62 : vector<8x8xf32> to vector<8x8xbf16>
    %cst_26 = arith.constant dense<0.000000e+00> : vector<8x8xf32>
    %64 = tpu.matmul %63, %47, %cst_26 {dimension_numbers = #tpu.dot_dimension_numbers<[1], [0], [0], [1], [0, 0, 1, 1], [], []>} : vector<8x8xbf16>, vector<8x8xbf16>, vector<8x8xf32> -> vector<8x8xf32>
    %c0_27 = arith.constant 0 : index
    %c8 = arith.constant 8 : index
    %65 = vector.load %arg15[%c0_27, %c8] : memref<8x96xbf16, #tpu.memory_space<vmem>>, vector<8x8xbf16>
    %c0_28 = arith.constant 0 : index
    %c40 = arith.constant 40 : index
    %66 = vector.load %arg15[%c0_28, %c40] : memref<8x96xbf16, #tpu.memory_space<vmem>>, vector<8x8xbf16>
    %c0_29 = arith.constant 0 : index
    %c72 = arith.constant 72 : index
    %67 = vector.load %arg15[%c0_29, %c72] : memref<8x96xbf16, #tpu.memory_space<vmem>>, vector<8x8xbf16>
    %cst_30 = arith.constant dense<0.000000e+00> : vector<8x8xf32>
    %68 = tpu.matmul %65, %66, %cst_30 {dimension_numbers = #tpu.dot_dimension_numbers<[1], [1], [0], [0], [0, 0, 1, 0], [], []>} : vector<8x8xbf16>, vector<8x8xbf16>, vector<8x8xf32> -> vector<8x8xf32>
    %cst_31 = arith.constant 0.353553385 : f32
    %69 = vector.broadcast %cst_31 : f32 to vector<8x8xf32>
    %70 = arith.mulf %68, %69 : vector<8x8xf32>
    %cst_32 = arith.constant -1.000000e+30 : f32
    %71 = vector.broadcast %cst_32 : f32 to vector<8x8xf32>
    %72 = arith.select %44, %70, %71 : vector<8x8xi1>, vector<8x8xf32>
    %cst_33 = arith.constant dense<0xFF800000> : vector<8xf32>
    %73 = vector.multi_reduction <maximumf>, %72, %cst_33 [1] : vector<8x8xf32> to vector<8xf32>
    %74 = vector.shape_cast %73 : vector<8xf32> to vector<8x1xf32>
    %75 = vector.broadcast %74 : vector<8x1xf32> to vector<8x8xf32>
    %76 = arith.subf %72, %75 : vector<8x8xf32>
    %77 = math.exp %76 : vector<8x8xf32>
    %cst_34 = arith.constant dense<0.000000e+00> : vector<8xf32>
    %78 = vector.multi_reduction <add>, %77, %cst_34 [1] : vector<8x8xf32> to vector<8xf32>
    %79 = vector.shape_cast %78 : vector<8xf32> to vector<8x1xf32>
    %80 = tpu.reciprocal %79 {approx = true} : vector<8x1xf32> -> vector<8x1xf32>
    %81 = vector.broadcast %80 : vector<8x1xf32> to vector<8x8xf32>
    %82 = arith.mulf %77, %81 : vector<8x8xf32>
    %83 = arith.truncf %82 : vector<8x8xf32> to vector<8x8xbf16>
    %cst_35 = arith.constant dense<0.000000e+00> : vector<8x8xf32>
    %84 = tpu.matmul %83, %67, %cst_35 {dimension_numbers = #tpu.dot_dimension_numbers<[1], [0], [0], [1], [0, 0, 1, 1], [], []>} : vector<8x8xbf16>, vector<8x8xbf16>, vector<8x8xf32> -> vector<8x8xf32>
    %c0_36 = arith.constant 0 : index
    %c16 = arith.constant 16 : index
    %85 = vector.load %arg15[%c0_36, %c16] : memref<8x96xbf16, #tpu.memory_space<vmem>>, vector<8x8xbf16>
    %c0_37 = arith.constant 0 : index
    %c48 = arith.constant 48 : index
    %86 = vector.load %arg15[%c0_37, %c48] : memref<8x96xbf16, #tpu.memory_space<vmem>>, vector<8x8xbf16>
    %c0_38 = arith.constant 0 : index
    %c80 = arith.constant 80 : index
    %87 = vector.load %arg15[%c0_38, %c80] : memref<8x96xbf16, #tpu.memory_space<vmem>>, vector<8x8xbf16>
    %cst_39 = arith.constant dense<0.000000e+00> : vector<8x8xf32>
    %88 = tpu.matmul %85, %86, %cst_39 {dimension_numbers = #tpu.dot_dimension_numbers<[1], [1], [0], [0], [0, 0, 1, 0], [], []>} : vector<8x8xbf16>, vector<8x8xbf16>, vector<8x8xf32> -> vector<8x8xf32>
    %cst_40 = arith.constant 0.353553385 : f32
    %89 = vector.broadcast %cst_40 : f32 to vector<8x8xf32>
    %90 = arith.mulf %88, %89 : vector<8x8xf32>
    %cst_41 = arith.constant -1.000000e+30 : f32
    %91 = vector.broadcast %cst_41 : f32 to vector<8x8xf32>
    %92 = arith.select %44, %90, %91 : vector<8x8xi1>, vector<8x8xf32>
    %cst_42 = arith.constant dense<0xFF800000> : vector<8xf32>
    %93 = vector.multi_reduction <maximumf>, %92, %cst_42 [1] : vector<8x8xf32> to vector<8xf32>
    %94 = vector.shape_cast %93 : vector<8xf32> to vector<8x1xf32>
    %95 = vector.broadcast %94 : vector<8x1xf32> to vector<8x8xf32>
    %96 = arith.subf %92, %95 : vector<8x8xf32>
    %97 = math.exp %96 : vector<8x8xf32>
    %cst_43 = arith.constant dense<0.000000e+00> : vector<8xf32>
    %98 = vector.multi_reduction <add>, %97, %cst_43 [1] : vector<8x8xf32> to vector<8xf32>
    %99 = vector.shape_cast %98 : vector<8xf32> to vector<8x1xf32>
    %100 = tpu.reciprocal %99 {approx = true} : vector<8x1xf32> -> vector<8x1xf32>
    %101 = vector.broadcast %100 : vector<8x1xf32> to vector<8x8xf32>
    %102 = arith.mulf %97, %101 : vector<8x8xf32>
    %103 = arith.truncf %102 : vector<8x8xf32> to vector<8x8xbf16>
    %cst_44 = arith.constant dense<0.000000e+00> : vector<8x8xf32>
    %104 = tpu.matmul %103, %87, %cst_44 {dimension_numbers = #tpu.dot_dimension_numbers<[1], [0], [0], [1], [0, 0, 1, 1], [], []>} : vector<8x8xbf16>, vector<8x8xbf16>, vector<8x8xf32> -> vector<8x8xf32>
    %c0_45 = arith.constant 0 : index
    %c24 = arith.constant 24 : index
    %105 = vector.load %arg15[%c0_45, %c24] : memref<8x96xbf16, #tpu.memory_space<vmem>>, vector<8x8xbf16>
    %c0_46 = arith.constant 0 : index
    %c56 = arith.constant 56 : index
    %106 = vector.load %arg15[%c0_46, %c56] : memref<8x96xbf16, #tpu.memory_space<vmem>>, vector<8x8xbf16>
    %c0_47 = arith.constant 0 : index
    %c88 = arith.constant 88 : index
    %107 = vector.load %arg15[%c0_47, %c88] : memref<8x96xbf16, #tpu.memory_space<vmem>>, vector<8x8xbf16>
    %cst_48 = arith.constant dense<0.000000e+00> : vector<8x8xf32>
    %108 = tpu.matmul %105, %106, %cst_48 {dimension_numbers = #tpu.dot_dimension_numbers<[1], [1], [0], [0], [0, 0, 1, 0], [], []>} : vector<8x8xbf16>, vector<8x8xbf16>, vector<8x8xf32> -> vector<8x8xf32>
    %cst_49 = arith.constant 0.353553385 : f32
    %109 = vector.broadcast %cst_49 : f32 to vector<8x8xf32>
    %110 = arith.mulf %108, %109 : vector<8x8xf32>
    %cst_50 = arith.constant -1.000000e+30 : f32
    %111 = vector.broadcast %cst_50 : f32 to vector<8x8xf32>
    %112 = arith.select %44, %110, %111 : vector<8x8xi1>, vector<8x8xf32>
    %cst_51 = arith.constant dense<0xFF800000> : vector<8xf32>
    %113 = vector.multi_reduction <maximumf>, %112, %cst_51 [1] : vector<8x8xf32> to vector<8xf32>
    %114 = vector.shape_cast %113 : vector<8xf32> to vector<8x1xf32>
    %115 = vector.broadcast %114 : vector<8x1xf32> to vector<8x8xf32>
    %116 = arith.subf %112, %115 : vector<8x8xf32>
    %117 = math.exp %116 : vector<8x8xf32>
    %cst_52 = arith.constant dense<0.000000e+00> : vector<8xf32>
    %118 = vector.multi_reduction <add>, %117, %cst_52 [1] : vector<8x8xf32> to vector<8xf32>
    %119 = vector.shape_cast %118 : vector<8xf32> to vector<8x1xf32>
    %120 = tpu.reciprocal %119 {approx = true} : vector<8x1xf32> -> vector<8x1xf32>
    %121 = vector.broadcast %120 : vector<8x1xf32> to vector<8x8xf32>
    %122 = arith.mulf %117, %121 : vector<8x8xf32>
    %123 = arith.truncf %122 : vector<8x8xf32> to vector<8x8xbf16>
    %cst_53 = arith.constant dense<0.000000e+00> : vector<8x8xf32>
    %124 = tpu.matmul %123, %107, %cst_53 {dimension_numbers = #tpu.dot_dimension_numbers<[1], [0], [0], [1], [0, 0, 1, 1], [], []>} : vector<8x8xbf16>, vector<8x8xbf16>, vector<8x8xf32> -> vector<8x8xf32>
    %125 = tpu.concatenate %64, %84, %104, %124 in 1 : vector<8x8xf32>, vector<8x8xf32>, vector<8x8xf32>, vector<8x8xf32> -> vector<8x32xf32>
    %126 = arith.truncf %125 : vector<8x32xf32> to vector<8x32xbf16>
    %c0_54 = arith.constant 0 : index
    %c0_55 = arith.constant 0 : index
    %127 = vector.load %arg16[%c0_54, %c0_55] : memref<8x32xbf16, #tpu.memory_space<vmem>>, vector<8x32xbf16>
    tpu.vector_store %arg16[%c0_54, %c0_55], %126 {strides = array<i32>} : memref<8x32xbf16, #tpu.memory_space<vmem>>, vector<8x32xbf16>,
    %c0_56 = arith.constant 0 : index
    %c0_57 = arith.constant 0 : index
    %128 = vector.load %arg16[%c0_56, %c0_57] : memref<8x32xbf16, #tpu.memory_space<vmem>>, vector<8x32xbf16>
    %c0_58 = arith.constant 0 : index
    %c0_59 = arith.constant 0 : index
    %129 = vector.load %arg6[%c0_58, %c0_59] : memref<32x32xbf16, #tpu.memory_space<vmem>>, vector<32x32xbf16>
    %cst_60 = arith.constant dense<0.000000e+00> : vector<8x32xf32>
    %130 = tpu.matmul %128, %129, %cst_60 {dimension_numbers = #tpu.dot_dimension_numbers<[1], [0], [0], [1], [0, 0, 1, 1], [], []>} : vector<8x32xbf16>, vector<32x32xbf16>, vector<8x32xf32> -> vector<8x32xf32>
    %c0_61 = arith.constant 0 : index
    %c0_62 = arith.constant 0 : index
    %131 = vector.load %arg7[%c0_61, %c0_62] : memref<1x32xf32, #tpu.memory_space<vmem>>, vector<1x32xf32>
    %132 = vector.shape_cast %131 : vector<1x32xf32> to vector<32xf32>
    %133 = vector.shape_cast %132 : vector<32xf32> to vector<1x32xf32>
    %134 = vector.broadcast %133 : vector<1x32xf32> to vector<8x32xf32>
    %135 = arith.addf %130, %134 : vector<8x32xf32>
    %136 = arith.addf %1, %135 : vector<8x32xf32>
    %c0_63 = arith.constant 0 : index
    %c0_64 = arith.constant 0 : index
    %137 = vector.load %arg8[%c0_63, %c0_64] : memref<1x32xf32, #tpu.memory_space<vmem>>, vector<1x32xf32>
    %138 = vector.shape_cast %137 : vector<1x32xf32> to vector<32xf32>
    %c0_65 = arith.constant 0 : index
    %c0_66 = arith.constant 0 : index
    %139 = vector.load %arg9[%c0_65, %c0_66] : memref<1x32xf32, #tpu.memory_space<vmem>>, vector<1x32xf32>
    %140 = vector.shape_cast %139 : vector<1x32xf32> to vector<32xf32>
    %cst_67 = arith.constant dense<0.000000e+00> : vector<8xf32>
    %141 = vector.multi_reduction <add>, %136, %cst_67 [1] : vector<8x32xf32> to vector<8xf32>
    %142 = vector.shape_cast %141 : vector<8xf32> to vector<8x1xf32>
    %cst_68 = arith.constant 3.200000e+01 : f32
    %143 = vector.broadcast %cst_68 : f32 to vector<8x1xf32>
    %144 = arith.divf %142, %143 : vector<8x1xf32>
    %145 = vector.broadcast %144 : vector<8x1xf32> to vector<8x32xf32>
    %146 = arith.subf %136, %145 : vector<8x32xf32>
    %147 = arith.mulf %146, %146 : vector<8x32xf32>
    %cst_69 = arith.constant dense<0.000000e+00> : vector<8xf32>
    %148 = vector.multi_reduction <add>, %147, %cst_69 [1] : vector<8x32xf32> to vector<8xf32>
    %149 = vector.shape_cast %148 : vector<8xf32> to vector<8x1xf32>
    %cst_70 = arith.constant 3.200000e+01 : f32
    %150 = vector.broadcast %cst_70 : f32 to vector<8x1xf32>
    %151 = arith.divf %149, %150 : vector<8x1xf32>
    %152 = vector.broadcast %144 : vector<8x1xf32> to vector<8x32xf32>
    %153 = arith.subf %136, %152 : vector<8x32xf32>
    %cst_71 = arith.constant 9.99999974E-6 : f32
    %154 = vector.broadcast %cst_71 : f32 to vector<8x1xf32>
    %155 = arith.addf %151, %154 : vector<8x1xf32>
    %156 = math.rsqrt %155 : vector<8x1xf32>
    %157 = vector.broadcast %156 : vector<8x1xf32> to vector<8x32xf32>
    %158 = arith.mulf %153, %157 : vector<8x32xf32>
    %159 = vector.shape_cast %138 : vector<32xf32> to vector<1x32xf32>
    %160 = vector.broadcast %159 : vector<1x32xf32> to vector<8x32xf32>
    %161 = arith.mulf %158, %160 : vector<8x32xf32>
    %162 = vector.shape_cast %140 : vector<32xf32> to vector<1x32xf32>
    %163 = vector.broadcast %162 : vector<1x32xf32> to vector<8x32xf32>
    %164 = arith.addf %161, %163 : vector<8x32xf32>
    %165 = arith.truncf %164 : vector<8x32xf32> to vector<8x32xbf16>
    %cst_72 = arith.constant 0.000000e+00 : f32
    %166 = vector.broadcast %cst_72 : f32 to vector<8x32xf32>
    %c0_73 = arith.constant 0 : index
    %c0_74 = arith.constant 0 : index
    %167 = vector.load %arg10[%c0_73, %c0_74] : memref<32x128xbf16, #tpu.memory_space<vmem>>, vector<32x128xbf16>
    %cst_75 = arith.constant dense<0.000000e+00> : vector<8x128xf32>
    %168 = tpu.matmul %165, %167, %cst_75 {dimension_numbers = #tpu.dot_dimension_numbers<[1], [0], [0], [1], [0, 0, 1, 1], [], []>} : vector<8x32xbf16>, vector<32x128xbf16>, vector<8x128xf32> -> vector<8x128xf32>
    %c0_76 = arith.constant 0 : index
    %c0_77 = arith.constant 0 : index
    %169 = vector.load %arg11[%c0_76, %c0_77] : memref<1x128xf32, #tpu.memory_space<vmem>>, vector<1x128xf32>
    %170 = vector.shape_cast %169 : vector<1x128xf32> to vector<128xf32>
    %171 = vector.shape_cast %170 : vector<128xf32> to vector<1x128xf32>
    %172 = vector.broadcast %171 : vector<1x128xf32> to vector<8x128xf32>
    %173 = arith.addf %168, %172 : vector<8x128xf32>
    %cst_78 = arith.constant 5.000000e-01 : f32
    %174 = vector.broadcast %cst_78 : f32 to vector<8x128xf32>
    %175 = arith.mulf %174, %173 : vector<8x128xf32>
    %176 = arith.mulf %173, %173 : vector<8x128xf32>
    %177 = arith.mulf %173, %176 : vector<8x128xf32>
    %cst_79 = arith.constant 4.471500e-02 : f32
    %178 = vector.broadcast %cst_79 : f32 to vector<8x128xf32>
    %179 = arith.mulf %178, %177 : vector<8x128xf32>
    %180 = arith.addf %173, %179 : vector<8x128xf32>
    %cst_80 = arith.constant 0.797884583 : f32
    %181 = vector.broadcast %cst_80 : f32 to vector<8x128xf32>
    %182 = arith.mulf %181, %180 : vector<8x128xf32>
    %183 = math.tanh %182 : vector<8x128xf32>
    %cst_81 = arith.constant 1.000000e+00 : f32
    %184 = vector.broadcast %cst_81 : f32 to vector<8x128xf32>
    %185 = arith.addf %184, %183 : vector<8x128xf32>
    %186 = arith.mulf %175, %185 : vector<8x128xf32>
    %187 = arith.truncf %186 : vector<8x128xf32> to vector<8x128xbf16>
    %c0_82 = arith.constant 0 : index
    %c0_83 = arith.constant 0 : index
    %188 = vector.load %arg12[%c0_82, %c0_83] : memref<128x32xbf16, #tpu.memory_space<vmem>>, vector<128x32xbf16>
    %cst_84 = arith.constant dense<0.000000e+00> : vector<8x32xf32>
    %189 = tpu.matmul %187, %188, %cst_84 {dimension_numbers = #tpu.dot_dimension_numbers<[1], [0], [0], [1], [0, 0, 1, 1], [], []>} : vector<8x128xbf16>, vector<128x32xbf16>, vector<8x32xf32> -> vector<8x32xf32>
    %190 = arith.addf %166, %189 : vector<8x32xf32>
    %191 = arith.addf %136, %190 : vector<8x32xf32>
    %c0_85 = arith.constant 0 : index
    %c0_86 = arith.constant 0 : index
    %192 = vector.load %arg13[%c0_85, %c0_86] : memref<1x32xf32, #tpu.memory_space<vmem>>, vector<1x32xf32>
    %193 = vector.shape_cast %192 : vector<1x32xf32> to vector<32xf32>
    %194 = vector.shape_cast %193 : vector<32xf32> to vector<1x32xf32>
    %195 = vector.broadcast %194 : vector<1x32xf32> to vector<8x32xf32>
    %196 = arith.addf %191, %195 : vector<8x32xf32>
    %c0_87 = arith.constant 0 : index
    %c0_88 = arith.constant 0 : index
    %c0_89 = arith.constant 0 : index
    %197 = vector.load %arg14[%c0_87, %c0_88, %c0_89] : memref<1x8x32xf32, #tpu.memory_space<vmem>>, vector<1x8x32xf32>
    %198 = vector.shape_cast %197 : vector<1x8x32xf32> to vector<8x32xf32>
    %199 = vector.shape_cast %196 : vector<8x32xf32> to vector<1x8x32xf32>
    tpu.vector_store %arg14[%c0_87, %c0_88, %c0_89], %199 {strides = array<i32>} : memref<1x8x32xf32, #tpu.memory_space<vmem>>, vector<1x8x32xf32>,
    return
  }
  func.func @transform_0(%arg0: i32) -> (i32, i32, i32) {
    %c0_i32 = arith.constant 0 : i32
    %c0_i32_0 = arith.constant 0 : i32
    %c0_i32_1 = arith.constant 0 : i32
    return %arg0, %c0_i32, %c0_i32_0 : i32, i32, i32
  }
  func.func @transform_1(%arg0: i32) -> (i32, i32) {
    %c0_i32 = arith.constant 0 : i32
    %c0_i32_0 = arith.constant 0 : i32
    %c0_i32_1 = arith.constant 0 : i32
    return %c0_i32, %c0_i32_0 : i32, i32
  }
  func.func @transform_2(%arg0: i32) -> (i32, i32) {
    %c0_i32 = arith.constant 0 : i32
    %c0_i32_0 = arith.constant 0 : i32
    %c0_i32_1 = arith.constant 0 : i32
    return %c0_i32, %c0_i32_0 : i32, i32
  }
  func.func @transform_3(%arg0: i32) -> (i32, i32) {
    %c0_i32 = arith.constant 0 : i32
    %c0_i32_0 = arith.constant 0 : i32
    %c0_i32_1 = arith.constant 0 : i32
    return %c0_i32, %c0_i32_0 : i32, i32
  }
  func.func @transform_4(%arg0: i32) -> (i32, i32) {
    %c0_i32 = arith.constant 0 : i32
    %c0_i32_0 = arith.constant 0 : i32
    %c0_i32_1 = arith.constant 0 : i32
    return %c0_i32, %c0_i32_0 : i32, i32
  }
  func.func @transform_5(%arg0: i32) -> (i32, i32) {
    %c0_i32 = arith.constant 0 : i32
    %c0_i32_0 = arith.constant 0 : i32
    %c0_i32_1 = arith.constant 0 : i32
    return %c0_i32, %c0_i32_0 : i32, i32
  }
  func.func @transform_6(%arg0: i32) -> (i32, i32) {
    %c0_i32 = arith.constant 0 : i32
    %c0_i32_0 = arith.constant 0 : i32
    %c0_i32_1 = arith.constant 0 : i32
    return %c0_i32, %c0_i32_0 : i32, i32
  }
  func.func @transform_7(%arg0: i32) -> (i32, i32) {
    %c0_i32 = arith.constant 0 : i32
    %c0_i32_0 = arith.constant 0 : i32
    %c0_i32_1 = arith.constant 0 : i32
    return %c0_i32, %c0_i32_0 : i32, i32
  }
  func.func @transform_8(%arg0: i32) -> (i32, i32) {
    %c0_i32 = arith.constant 0 : i32
    %c0_i32_0 = arith.constant 0 : i32
    %c0_i32_1 = arith.constant 0 : i32
    return %c0_i32, %c0_i32_0 : i32, i32
  }
  func.func @transform_9(%arg0: i32) -> (i32, i32) {
    %c0_i32 = arith.constant 0 : i32
    %c0_i32_0 = arith.constant 0 : i32
    %c0_i32_1 = arith.constant 0 : i32
    return %c0_i32, %c0_i32_0 : i32, i32
  }
  func.func @transform_10(%arg0: i32) -> (i32, i32) {
    %c0_i32 = arith.constant 0 : i32
    %c0_i32_0 = arith.constant 0 : i32
    %c0_i32_1 = arith.constant 0 : i32
    return %c0_i32, %c0_i32_0 : i32, i32
  }
  func.func @transform_11(%arg0: i32) -> (i32, i32) {
    %c0_i32 = arith.constant 0 : i32
    %c0_i32_0 = arith.constant 0 : i32
    %c0_i32_1 = arith.constant 0 : i32
    return %c0_i32, %c0_i32_0 : i32, i32
  }
  func.func @transform_12(%arg0: i32) -> (i32, i32) {
    %c0_i32 = arith.constant 0 : i32
    %c0_i32_0 = arith.constant 0 : i32
    %c0_i32_1 = arith.constant 0 : i32
    return %c0_i32, %c0_i32_0 : i32, i32
  }
  func.func @transform_13(%arg0: i32) -> (i32, i32, i32) {
    %c0_i32 = arith.constant 0 : i32
    %c0_i32_0 = arith.constant 0 : i32
    %c0_i32_1 = arith.constant 0 : i32
    return %arg0, %c0_i32, %c0_i32_0 : i32, i32, i32
  }
}

module attributes {stable_mosaic.version = 11 : i64} {
  func.func @block_kernel(%arg0: i32, %arg1: memref<1x8x32xf32, #tpu.memory_space<vmem>>, %arg2: memref<1x32xf32, #tpu.memory_space<vmem>>, %arg3: memref<1x32xf32, #tpu.memory_space<vmem>>, %arg4: memref<32x96xbf16, #tpu.memory_space<vmem>>, %arg5: memref<1x96xf32, #tpu.memory_space<vmem>>, %arg6: memref<32x32xbf16, #tpu.memory_space<vmem>>, %arg7: memref<1x32xf32, #tpu.memory_space<vmem>>, %arg8: memref<1x32xf32, #tpu.memory_space<vmem>>, %arg9: memref<1x32xf32, #tpu.memory_space<vmem>>, %arg10: memref<32x128xbf16, #tpu.memory_space<vmem>>, %arg11: memref<1x128xf32, #tpu.memory_space<vmem>>, %arg12: memref<128x32xbf16, #tpu.memory_space<vmem>>, %arg13: memref<1x32xf32, #tpu.memory_space<vmem>>, %arg14: memref<1x8x32xf32, #tpu.memory_space<vmem>>, %arg15: memref<8x96xbf16, #tpu.memory_space<vmem>>, %arg16: memref<8x32xbf16, #tpu.memory_space<vmem>>) attributes {dimension_semantics = [#tpu.dimension_semantics<parallel>], iteration_bounds = array<i64: 2>, scalar_prefetch = 0 : i64, scratch_operands = 2 : i64, tpu.core_type = #tpu.core_type<tc>, window_params = [{transform_indices = @transform_0, window_bounds = array<i64: 1, 8, 32>}, {pipeline_mode = #tpu.pipeline_mode<synchronous>, transform_indices = @transform_1, window_bounds = array<i64: 1, 32>}, {pipeline_mode = #tpu.pipeline_mode<synchronous>, transform_indices = @transform_2, window_bounds = array<i64: 1, 32>}, {pipeline_mode = #tpu.pipeline_mode<synchronous>, transform_indices = @transform_3, window_bounds = array<i64: 32, 96>}, {pipeline_mode = #tpu.pipeline_mode<synchronous>, transform_indices = @transform_4, window_bounds = array<i64: 1, 96>}, {pipeline_mode = #tpu.pipeline_mode<synchronous>, transform_indices = @transform_5, window_bounds = array<i64: 32, 32>}, {pipeline_mode = #tpu.pipeline_mode<synchronous>, transform_indices = @transform_6, window_bounds = array<i64: 1, 32>}, {pipeline_mode = #tpu.pipeline_mode<synchronous>, transform_indices = @transform_7, window_bounds = array<i64: 1, 32>}, {pipeline_mode = #tpu.pipeline_mode<synchronous>, transform_indices = @transform_8, window_bounds = array<i64: 1, 32>}, {pipeline_mode = #tpu.pipeline_mode<synchronous>, transform_indices = @transform_9, window_bounds = array<i64: 32, 128>}, {pipeline_mode = #tpu.pipeline_mode<synchronous>, transform_indices = @transform_10, window_bounds = array<i64: 1, 128>}, {pipeline_mode = #tpu.pipeline_mode<synchronous>, transform_indices = @transform_11, window_bounds = array<i64: 128, 32>}, {pipeline_mode = #tpu.pipeline_mode<synchronous>, transform_indices = @transform_12, window_bounds = array<i64: 1, 32>}, {transform_indices = @transform_13, window_bounds = array<i64: 1, 8, 32>}]} {
    %c0 = arith.constant 0 : index
    %c0_0 = arith.constant 0 : index
    %c0_1 = arith.constant 0 : index
    %0 = vector.load %arg1[%c0, %c0_0, %c0_1] : memref<1x8x32xf32, #tpu.memory_space<vmem>>, vector<1x8x32xf32>
    %1 = vector.shape_cast %0 : vector<1x8x32xf32> to vector<8x32xf32>
    %c0_2 = arith.constant 0 : index
    %c0_3 = arith.constant 0 : index
    %2 = vector.load %arg2[%c0_2, %c0_3] : memref<1x32xf32, #tpu.memory_space<vmem>>, vector<1x32xf32>
    %3 = vector.shape_cast %2 : vector<1x32xf32> to vector<32xf32>
    %c0_4 = arith.constant 0 : index
    %c0_5 = arith.constant 0 : index
    %4 = vector.load %arg3[%c0_4, %c0_5] : memref<1x32xf32, #tpu.memory_space<vmem>>, vector<1x32xf32>
    %5 = vector.shape_cast %4 : vector<1x32xf32> to vector<32xf32>
    %cst = arith.constant dense<0.000000e+00> : vector<8xf32>
    %6 = vector.multi_reduction <add>, %1, %cst [1] : vector<8x32xf32> to vector<8xf32>
    %7 = vector.shape_cast %6 : vector<8xf32> to vector<8x1xf32>
    %cst_6 = arith.constant 3.200000e+01 : f32
    %8 = vector.broadcast %cst_6 : f32 to vector<8x1xf32>
    %9 = arith.divf %7, %8 : vector<8x1xf32>
    %10 = vector.broadcast %9 : vector<8x1xf32> to vector<8x32xf32>
    %11 = arith.subf %1, %10 : vector<8x32xf32>
    %12 = arith.mulf %11, %11 : vector<8x32xf32>
    %cst_7 = arith.constant dense<0.000000e+00> : vector<8xf32>
    %13 = vector.multi_reduction <add>, %12, %cst_7 [1] : vector<8x32xf32> to vector<8xf32>
    %14 = vector.shape_cast %13 : vector<8xf32> to vector<8x1xf32>
    %cst_8 = arith.constant 3.200000e+01 : f32
    %15 = vector.broadcast %cst_8 : f32 to vector<8x1xf32>
    %16 = arith.divf %14, %15 : vector<8x1xf32>
    %17 = vector.broadcast %9 : vector<8x1xf32> to vector<8x32xf32>
    %18 = arith.subf %1, %17 : vector<8x32xf32>
    %cst_9 = arith.constant 9.99999974E-6 : f32
    %19 = vector.broadcast %cst_9 : f32 to vector<8x1xf32>
    %20 = arith.addf %16, %19 : vector<8x1xf32>
    %21 = math.rsqrt %20 : vector<8x1xf32>
    %22 = vector.broadcast %21 : vector<8x1xf32> to vector<8x32xf32>
    %23 = arith.mulf %18, %22 : vector<8x32xf32>
    %24 = vector.shape_cast %3 : vector<32xf32> to vector<1x32xf32>
    %25 = vector.broadcast %24 : vector<1x32xf32> to vector<8x32xf32>
    %26 = arith.mulf %23, %25 : vector<8x32xf32>
    %27 = vector.shape_cast %5 : vector<32xf32> to vector<1x32xf32>
    %28 = vector.broadcast %27 : vector<1x32xf32> to vector<8x32xf32>
    %29 = arith.addf %26, %28 : vector<8x32xf32>
    %30 = arith.truncf %29 : vector<8x32xf32> to vector<8x32xbf16>
    %c0_10 = arith.constant 0 : index
    %c0_11 = arith.constant 0 : index
    %31 = vector.load %arg4[%c0_10, %c0_11] : memref<32x96xbf16, #tpu.memory_space<vmem>>, vector<32x96xbf16>
    %cst_12 = arith.constant dense<0.000000e+00> : vector<8x96xf32>
    %32 = tpu.matmul %30, %31, %cst_12 {dimension_numbers = #tpu.dot_dimension_numbers<[1], [0], [0], [1], [0, 0, 1, 1], [], []>} : vector<8x32xbf16>, vector<32x96xbf16>, vector<8x96xf32> -> vector<8x96xf32>
    %c0_13 = arith.constant 0 : index
    %c0_14 = arith.constant 0 : index
    %33 = vector.load %arg5[%c0_13, %c0_14] : memref<1x96xf32, #tpu.memory_space<vmem>>, vector<1x96xf32>
    %34 = vector.shape_cast %33 : vector<1x96xf32> to vector<96xf32>
    %35 = vector.shape_cast %34 : vector<96xf32> to vector<1x96xf32>
    %36 = vector.broadcast %35 : vector<1x96xf32> to vector<8x96xf32>
    %37 = arith.addf %32, %36 : vector<8x96xf32>
    %38 = arith.truncf %37 : vector<8x96xf32> to vector<8x96xbf16>
    %c0_15 = arith.constant 0 : index
    %c0_16 = arith.constant 0 : index
    %39 = vector.load %arg15[%c0_15, %c0_16] : memref<8x96xbf16, #tpu.memory_space<vmem>>, vector<8x96xbf16>
    tpu.vector_store %arg15[%c0_15, %c0_16], %38 {strides = array<i32>} : memref<8x96xbf16, #tpu.memory_space<vmem>>, vector<8x96xbf16>,
    %40 = tpu.iota {dimensions = array<i32: 0>} : vector<8x8xi32>
    %c0_i32 = arith.constant 0 : i32
    %41 = vector.broadcast %c0_i32 : i32 to vector<8x8xi32>
    %42 = arith.addi %41, %40 : vector<8x8xi32>
    %43 = tpu.iota {dimensions = array<i32: 1>} : vector<8x8xi32>
    %44 = arith.cmpi sle, %43, %42 : vector<8x8xi32>
    %c0_17 = arith.constant 0 : index
    %c0_18 = arith.constant 0 : index
    %45 = vector.load %arg15[%c0_17, %c0_18] : memref<8x96xbf16, #tpu.memory_space<vmem>>, vector<8x8xbf16>
    %c0_19 = arith.constant 0 : index
    %c32 = arith.constant 32 : index
    %46 = vector.load %arg15[%c0_19, %c32] : memref<8x96xbf16, #tpu.memory_space<vmem>>, vector<8x8xbf16>
    %c0_20 = arith.constant 0 : index
    %c64 = arith.constant 64 : index
    %47 = vector.load %arg15[%c0_20, %c64] : memref<8x96xbf16, #tpu.memory_space<vmem>>, vector<8x8xbf16>
    %cst_21 = arith.constant dense<0.000000e+00> : vector<8x8xf32>
    %48 = tpu.matmul %45, %46, %cst_21 {dimension_numbers = #tpu.dot_dimension_numbers<[1], [1], [0], [0], [0, 0, 1, 0], [], []>} : vector<8x8xbf16>, vector<8x8xbf16>, vector<8x8xf32> -> vector<8x8xf32>
    %cst_22 = arith.constant 0.353553385 : f32
    %49 = vector.broadcast %cst_22 : f32 to vector<8x8xf32>
    %50 = arith.mulf %48, %49 : vector<8x8xf32>
    %cst_23 = arith.constant -1.000000e+30 : f32
    %51 = vector.broadcast %cst_23 : f32 to vector<8x8xf32>
    %52 = arith.select %44, %50, %51 : vector<8x8xi1>, vector<8x8xf32>
    %cst_24 = arith.constant dense<0xFF800000> : vector<8xf32>
    %53 = vector.multi_reduction <maximumf>, %52, %cst_24 [1] : vector<8x8xf32> to vector<8xf32>
    %54 = vector.shape_cast %53 : vector<8xf32> to vector<8x1xf32>
    %55 = vector.broadcast %54 : vector<8x1xf32> to vector<8x8xf32>
    %56 = arith.subf %52, %55 : vector<8x8xf32>
    %57 = math.exp %56 : vector<8x8xf32>
    %cst_25 = arith.constant dense<0.000000e+00> : vector<8xf32>
    %58 = vector.multi_reduction <add>, %57, %cst_25 [1] : vector<8x8xf32> to vector<8xf32>
    %59 = vector.shape_cast %58 : vector<8xf32> to vector<8x1xf32>
    %60 = tpu.reciprocal %59 {approx = true} : vector<8x1xf32> -> vector<8x1xf32>
    %61 = vector.broadcast %60 : vector<8x1xf32> to vector<8x8xf32>
    %62 = arith.mulf %57, %61 : vector<8x8xf32>
    %63 = arith.truncf %62 : vector<8x8xf32> to vector<8x8xbf16>
    %cst_26 = arith.constant dense<0.000000e+00> : vector<8x8xf32>
    %64 = tpu.matmul %63, %47, %cst_26 {dimension_numbers = #tpu.dot_dimension_numbers<[1], [0], [0], [1], [0, 0, 1, 1], [], []>} : vector<8x8xbf16>, vector<8x8xbf16>, vector<8x8xf32> -> vector<8x8xf32>
    %c0_27 = arith.constant 0 : index
    %c8 = arith.constant 8 : index
    %65 = vector.load %arg15[%c0_27, %c8] : memref<8x96xbf16, #tpu.memory_space<vmem>>, vector<8x8xbf16>
    %c0_28 = arith.constant 0 : index
    %c40 = arith.constant 40 : index
    %66 = vector.load %arg15[%c0_28, %c40] : memref<8x96xbf16, #tpu.memory_space<vmem>>, vector<8x8xbf16>
    %c0_29 = arith.constant 0 : index
    %c72 = arith.constant 72 : index
    %67 = vector.load %arg15[%c0_29, %c72] : memref<8x96xbf16, #tpu.memory_space<vmem>>, vector<8x8xbf16>
    %cst_30 = arith.constant dense<0.000000e+00> : vector<8x8xf32>
    %68 = tpu.matmul %65, %66, %cst_30 {dimension_numbers = #tpu.dot_dimension_numbers<[1], [1], [0], [0], [0, 0, 1, 0], [], []>} : vector<8x8xbf16>, vector<8x8xbf16>, vector<8x8xf32> -> vector<8x8xf32>
    %cst_31 = arith.constant 0.353553385 : f32
    %69 = vector.broadcast %cst_31 : f32 to vector<8x8xf32>
    %70 = arith.mulf %68, %69 : vector<8x8xf32>
    %cst_32 = arith.constant -1.000000e+30 : f32
    %71 = vector.broadcast %cst_32 : f32 to vector<8x8xf32>
    %72 = arith.select %44, %70, %71 : vector<8x8xi1>, vector<8x8xf32>
    %cst_33 = arith.constant dense<0xFF800000> : vector<8xf32>
    %73 = vector.multi_reduction <maximumf>, %72, %cst_33 [1] : vector<8x8xf32> to vector<8xf32>
    %74 = vector.shape_cast %73 : vector<8xf32> to vector<8x1xf32>
    %75 = vector.broadcast %74 : vector<8x1xf32> to vector<8x8xf32>
    %76 = arith.subf %72, %75 : vector<8x8xf32>
    %77 = math.exp %76 : vector<8x8xf32>
    %cst_34 = arith.constant dense<0.000000e+00> : vector<8xf32>
    %78 = vector.multi_reduction <add>, %77, %cst_34 [1] : vector<8x8xf32> to vector<8xf32>
    %79 = vector.shape_cast %78 : vector<8xf32> to vector<8x1xf32>
    %80 = tpu.reciprocal %79 {approx = true} : vector<8x1xf32> -> vector<8x1xf32>
    %81 = vector.broadcast %80 : vector<8x1xf32> to vector<8x8xf32>
    %82 = arith.mulf %77, %81 : vector<8x8xf32>
    %83 = arith.truncf %82 : vector<8x8xf32> to vector<8x8xbf16>
    %cst_35 = arith.constant dense<0.000000e+00> : vector<8x8xf32>
    %84 = tpu.matmul %83, %67, %cst_35 {dimension_numbers = #tpu.dot_dimension_numbers<[1], [0], [0], [1], [0, 0, 1, 1], [], []>} : vector<8x8xbf16>, vector<8x8xbf16>, vector<8x8xf32> -> vector<8x8xf32>
    %c0_36 = arith.constant 0 : index
    %c16 = arith.constant 16 : index
    %85 = vector.load %arg15[%c0_36, %c16] : memref<8x96xbf16, #tpu.memory_space<vmem>>, vector<8x8xbf16>
    %c0_37 = arith.constant 0 : index
    %c48 = arith.constant 48 : index
    %86 = vector.load %arg15[%c0_37, %c48] : memref<8x96xbf16, #tpu.memory_space<vmem>>, vector<8x8xbf16>
    %c0_38 = arith.constant 0 : index
    %c80 = arith.constant 80 : index
    %87 = vector.load %arg15[%c0_38, %c80] : memref<8x96xbf16, #tpu.memory_space<vmem>>, vector<8x8xbf16>
    %cst_39 = arith.constant dense<0.000000e+00> : vector<8x8xf32>
    %88 = tpu.matmul %85, %86, %cst_39 {dimension_numbers = #tpu.dot_dimension_numbers<[1], [1], [0], [0], [0, 0, 1, 0], [], []>} : vector<8x8xbf16>, vector<8x8xbf16>, vector<8x8xf32> -> vector<8x8xf32>
    %cst_40 = arith.constant 0.353553385 : f32
    %89 = vector.broadcast %cst_40 : f32 to vector<8x8xf32>
    %90 = arith.mulf %88, %89 : vector<8x8xf32>
    %cst_41 = arith.constant -1.000000e+30 : f32
    %91 = vector.broadcast %cst_41 : f32 to vector<8x8xf32>
    %92 = arith.select %44, %90, %91 : vector<8x8xi1>, vector<8x8xf32>
    %cst_42 = arith.constant dense<0xFF800000> : vector<8xf32>
    %93 = vector.multi_reduction <maximumf>, %92, %cst_42 [1] : vector<8x8xf32> to vector<8xf32>
    %94 = vector.shape_cast %93 : vector<8xf32> to vector<8x1xf32>
    %95 = vector.broadcast %94 : vector<8x1xf32> to vector<8x8xf32>
    %96 = arith.subf %92, %95 : vector<8x8xf32>
    %97 = math.exp %96 : vector<8x8xf32>
    %cst_43 = arith.constant dense<0.000000e+00> : vector<8xf32>
    %98 = vector.multi_reduction <add>, %97, %cst_43 [1] : vector<8x8xf32> to vector<8xf32>
    %99 = vector.shape_cast %98 : vector<8xf32> to vector<8x1xf32>
    %100 = tpu.reciprocal %99 {approx = true} : vector<8x1xf32> -> vector<8x1xf32>
    %101 = vector.broadcast %100 : vector<8x1xf32> to vector<8x8xf32>
    %102 = arith.mulf %97, %101 : vector<8x8xf32>
    %103 = arith.truncf %102 : vector<8x8xf32> to vector<8x8xbf16>
    %cst_44 = arith.constant dense<0.000000e+00> : vector<8x8xf32>
    %104 = tpu.matmul %103, %87, %cst_44 {dimension_numbers = #tpu.dot_dimension_numbers<[1], [0], [0], [1], [0, 0, 1, 1], [], []>} : vector<8x8xbf16>, vector<8x8xbf16>, vector<8x8xf32> -> vector<8x8xf32>
    %c0_45 = arith.constant 0 : index
    %c24 = arith.constant 24 : index
    %105 = vector.load %arg15[%c0_45, %c24] : memref<8x96xbf16, #tpu.memory_space<vmem>>, vector<8x8xbf16>
    %c0_46 = arith.constant 0 : index
    %c56 = arith.constant 56 : index
    %106 = vector.load %arg15[%c0_46, %c56] : memref<8x96xbf16, #tpu.memory_space<vmem>>, vector<8x8xbf16>
    %c0_47 = arith.constant 0 : index
    %c88 = arith.constant 88 : index
    %107 = vector.load %arg15[%c0_47, %c88] : memref<8x96xbf16, #tpu.memory_space<vmem>>, vector<8x8xbf16>
    %cst_48 = arith.constant dense<0.000000e+00> : vector<8x8xf32>
    %108 = tpu.matmul %105, %106, %cst_48 {dimension_numbers = #tpu.dot_dimension_numbers<[1], [1], [0], [0], [0, 0, 1, 0], [], []>} : vector<8x8xbf16>, vector<8x8xbf16>, vector<8x8xf32> -> vector<8x8xf32>
    %cst_49 = arith.constant 0.353553385 : f32
    %109 = vector.broadcast %cst_49 : f32 to vector<8x8xf32>
    %110 = arith.mulf %108, %109 : vector<8x8xf32>
    %cst_50 = arith.constant -1.000000e+30 : f32
    %111 = vector.broadcast %cst_50 : f32 to vector<8x8xf32>
    %112 = arith.select %44, %110, %111 : vector<8x8xi1>, vector<8x8xf32>
    %cst_51 = arith.constant dense<0xFF800000> : vector<8xf32>
    %113 = vector.multi_reduction <maximumf>, %112, %cst_51 [1] : vector<8x8xf32> to vector<8xf32>
    %114 = vector.shape_cast %113 : vector<8xf32> to vector<8x1xf32>
    %115 = vector.broadcast %114 : vector<8x1xf32> to vector<8x8xf32>
    %116 = arith.subf %112, %115 : vector<8x8xf32>
    %117 = math.exp %116 : vector<8x8xf32>
    %cst_52 = arith.constant dense<0.000000e+00> : vector<8xf32>
    %118 = vector.multi_reduction <add>, %117, %cst_52 [1] : vector<8x8xf32> to vector<8xf32>
    %119 = vector.shape_cast %118 : vector<8xf32> to vector<8x1xf32>
    %120 = tpu.reciprocal %119 {approx = true} : vector<8x1xf32> -> vector<8x1xf32>
    %121 = vector.broadcast %120 : vector<8x1xf32> to vector<8x8xf32>
    %122 = arith.mulf %117, %121 : vector<8x8xf32>
    %123 = arith.truncf %122 : vector<8x8xf32> to vector<8x8xbf16>
    %cst_53 = arith.constant dense<0.000000e+00> : vector<8x8xf32>
    %124 = tpu.matmul %123, %107, %cst_53 {dimension_numbers = #tpu.dot_dimension_numbers<[1], [0], [0], [1], [0, 0, 1, 1], [], []>} : vector<8x8xbf16>, vector<8x8xbf16>, vector<8x8xf32> -> vector<8x8xf32>
    %125 = tpu.concatenate %64, %84, %104, %124 in 1 : vector<8x8xf32>, vector<8x8xf32>, vector<8x8xf32>, vector<8x8xf32> -> vector<8x32xf32>
    %126 = arith.truncf %125 : vector<8x32xf32> to vector<8x32xbf16>
    %c0_54 = arith.constant 0 : index
    %c0_55 = arith.constant 0 : index
    %127 = vector.load %arg16[%c0_54, %c0_55] : memref<8x32xbf16, #tpu.memory_space<vmem>>, vector<8x32xbf16>
    tpu.vector_store %arg16[%c0_54, %c0_55], %126 {strides = array<i32>} : memref<8x32xbf16, #tpu.memory_space<vmem>>, vector<8x32xbf16>,
    %c0_56 = arith.constant 0 : index
    %c0_57 = arith.constant 0 : index
    %128 = vector.load %arg16[%c0_56, %c0_57] : memref<8x32xbf16, #tpu.memory_space<vmem>>, vector<8x32xbf16>
    %c0_58 = arith.constant 0 : index
    %c0_59 = arith.constant 0 : index
    %129 = vector.load %arg6[%c0_58, %c0_59] : memref<32x32xbf16, #tpu.memory_space<vmem>>, vector<32x32xbf16>
    %cst_60 = arith.constant dense<0.000000e+00> : vector<8x32xf32>
    %130 = tpu.matmul %128, %129, %cst_60 {dimension_numbers = #tpu.dot_dimension_numbers<[1], [0], [0], [1], [0, 0, 1, 1], [], []>} : vector<8x32xbf16>, vector<32x32xbf16>, vector<8x32xf32> -> vector<8x32xf32>
    %c0_61 = arith.constant 0 : index
    %c0_62 = arith.constant 0 : index
    %131 = vector.load %arg7[%c0_61, %c0_62] : memref<1x32xf32, #tpu.memory_space<vmem>>, vector<1x32xf32>
    %132 = vector.shape_cast %131 : vector<1x32xf32> to vector<32xf32>
    %133 = vector.shape_cast %132 : vector<32xf32> to vector<1x32xf32>
    %134 = vector.broadcast %133 : vector<1x32xf32> to vector<8x32xf32>
    %135 = arith.addf %130, %134 : vector<8x32xf32>
    %136 = arith.addf %1, %135 : vector<8x32xf32>
    %c0_63 = arith.constant 0 : index
    %c0_64 = arith.constant 0 : index
    %137 = vector.load %arg8[%c0_63, %c0_64] : memref<1x32xf32, #tpu.memory_space<vmem>>, vector<1x32xf32>
    %138 = vector.shape_cast %137 : vector<1x32xf32> to vector<32xf32>
    %c0_65 = arith.constant 0 : index
    %c0_66 = arith.constant 0 : index
    %139 = vector.load %arg9[%c0_65, %c0_66] : memref<1x32xf32, #tpu.memory_space<vmem>>, vector<1x32xf32>
    %140 = vector.shape_cast %139 : vector<1x32xf32> to vector<32xf32>
    %cst_67 = arith.constant dense<0.000000e+00> : vector<8xf32>
    %141 = vector.multi_reduction <add>, %136, %cst_67 [1] : vector<8x32xf32> to vector<8xf32>
    %142 = vector.shape_cast %141 : vector<8xf32> to vector<8x1xf32>
    %cst_68 = arith.constant 3.200000e+01 : f32
    %143 = vector.broadcast %cst_68 : f32 to vector<8x1xf32>
    %144 = arith.divf %142, %143 : vector<8x1xf32>
    %145 = vector.broadcast %144 : vector<8x1xf32> to vector<8x32xf32>
    %146 = arith.subf %136, %145 : vector<8x32xf32>
    %147 = arith.mulf %146, %146 : vector<8x32xf32>
    %cst_69 = arith.constant dense<0.000000e+00> : vector<8xf32>
    %148 = vector.multi_reduction <add>, %147, %cst_69 [1] : vector<8x32xf32> to vector<8xf32>
    %149 = vector.shape_cast %148 : vector<8xf32> to vector<8x1xf32>
    %cst_70 = arith.constant 3.200000e+01 : f32
    %150 = vector.broadcast %cst_70 : f32 to vector<8x1xf32>
    %151 = arith.divf %149, %150 : vector<8x1xf32>
    %152 = vector.broadcast %144 : vector<8x1xf32> to vector<8x32xf32>
    %153 = arith.subf %136, %152 : vector<8x32xf32>
    %cst_71 = arith.constant 9.99999974E-6 : f32
    %154 = vector.broadcast %cst_71 : f32 to vector<8x1xf32>
    %155 = arith.addf %151, %154 : vector<8x1xf32>
    %156 = math.rsqrt %155 : vector<8x1xf32>
    %157 = vector.broadcast %156 : vector<8x1xf32> to vector<8x32xf32>
    %158 = arith.mulf %153, %157 : vector<8x32xf32>
    %159 = vector.shape_cast %138 : vector<32xf32> to vector<1x32xf32>
    %160 = vector.broadcast %159 : vector<1x32xf32> to vector<8x32xf32>
    %161 = arith.mulf %158, %160 : vector<8x32xf32>
    %162 = vector.shape_cast %140 : vector<32xf32> to vector<1x32xf32>
    %163 = vector.broadcast %162 : vector<1x32xf32> to vector<8x32xf32>
    %164 = arith.addf %161, %163 : vector<8x32xf32>
    %165 = arith.truncf %164 : vector<8x32xf32> to vector<8x32xbf16>
    %cst_72 = arith.constant 0.000000e+00 : f32
    %166 = vector.broadcast %cst_72 : f32 to vector<8x32xf32>
    %c0_73 = arith.constant 0 : index
    %c0_74 = arith.constant 0 : index
    %167 = vector.load %arg10[%c0_73, %c0_74] : memref<32x128xbf16, #tpu.memory_space<vmem>>, vector<32x128xbf16>
    %cst_75 = arith.constant dense<0.000000e+00> : vector<8x128xf32>
    %168 = tpu.matmul %165, %167, %cst_75 {dimension_numbers = #tpu.dot_dimension_numbers<[1], [0], [0], [1], [0, 0, 1, 1], [], []>} : vector<8x32xbf16>, vector<32x128xbf16>, vector<8x128xf32> -> vector<8x128xf32>
    %c0_76 = arith.constant 0 : index
    %c0_77 = arith.constant 0 : index
    %169 = vector.load %arg11[%c0_76, %c0_77] : memref<1x128xf32, #tpu.memory_space<vmem>>, vector<1x128xf32>
    %170 = vector.shape_cast %169 : vector<1x128xf32> to vector<128xf32>
    %171 = vector.shape_cast %170 : vector<128xf32> to vector<1x128xf32>
    %172 = vector.broadcast %171 : vector<1x128xf32> to vector<8x128xf32>
    %173 = arith.addf %168, %172 : vector<8x128xf32>
    %cst_78 = arith.constant 5.000000e-01 : f32
    %174 = vector.broadcast %cst_78 : f32 to vector<8x128xf32>
    %175 = arith.mulf %174, %173 : vector<8x128xf32>
    %176 = arith.mulf %173, %173 : vector<8x128xf32>
    %177 = arith.mulf %173, %176 : vector<8x128xf32>
    %cst_79 = arith.constant 4.471500e-02 : f32
    %178 = vector.broadcast %cst_79 : f32 to vector<8x128xf32>
    %179 = arith.mulf %178, %177 : vector<8x128xf32>
    %180 = arith.addf %173, %179 : vector<8x128xf32>
    %cst_80 = arith.constant 0.797884583 : f32
    %181 = vector.broadcast %cst_80 : f32 to vector<8x128xf32>
    %182 = arith.mulf %181, %180 : vector<8x128xf32>
    %183 = math.tanh %182 : vector<8x128xf32>
    %cst_81 = arith.constant 1.000000e+00 : f32
    %184 = vector.broadcast %cst_81 : f32 to vector<8x128xf32>
    %185 = arith.addf %184, %183 : vector<8x128xf32>
    %186 = arith.mulf %175, %185 : vector<8x128xf32>
    %187 = arith.truncf %186 : vector<8x128xf32> to vector<8x128xbf16>
    %c0_82 = arith.constant 0 : index
    %c0_83 = arith.constant 0 : index
    %188 = vector.load %arg12[%c0_82, %c0_83] : memref<128x32xbf16, #tpu.memory_space<vmem>>, vector<128x32xbf16>
    %cst_84 = arith.constant dense<0.000000e+00> : vector<8x32xf32>
    %189 = tpu.matmul %187, %188, %cst_84 {dimension_numbers = #tpu.dot_dimension_numbers<[1], [0], [0], [1], [0, 0, 1, 1], [], []>} : vector<8x128xbf16>, vector<128x32xbf16>, vector<8x32xf32> -> vector<8x32xf32>
    %190 = arith.addf %166, %189 : vector<8x32xf32>
    %191 = arith.addf %136, %190 : vector<8x32xf32>
    %c0_85 = arith.constant 0 : index
    %c0_86 = arith.constant 0 : index
    %192 = vector.load %arg13[%c0_85, %c0_86] : memref<1x32xf32, #tpu.memory_space<vmem>>, vector<1x32xf32>
    %193 = vector.shape_cast %192 : vector<1x32xf32> to vector<32xf32>
    %194 = vector.shape_cast %193 : vector<32xf32> to vector<1x32xf32>
    %195 = vector.broadcast %194 : vector<1x32xf32> to vector<8x32xf32>
    %196 = arith.addf %191, %195 : vector<8x32xf32>
    %c0_87 = arith.constant 0 : index
    %c0_88 = arith.constant 0 : index
    %c0_89 = arith.constant 0 : index
    %197 = vector.load %arg14[%c0_87, %c0_88, %c0_89] : memref<1x8x32xf32, #tpu.memory_space<vmem>>, vector<1x8x32xf32>
    %198 = vector.shape_cast %197 : vector<1x8x32xf32> to vector<8x32xf32>
    %199 = vector.shape_cast %196 : vector<8x32xf32> to vector<1x8x32xf32>
    tpu.vector_store %arg14[%c0_87, %c0_88, %c0_89], %199 {strides = array<i32>} : memref<1x8x32xf32, #tpu.memory_space<vmem>>, vector<1x8x32xf32>,
    return
  }
  func.func @transform_0(%arg0: i32) -> (i32, i32, i32) {
    %c0_i32 = arith.constant 0 : i32
    %c0_i32_0 = arith.constant 0 : i32
    %c0_i32_1 = arith.constant 0 : i32
    return %arg0, %c0_i32, %c0_i32_0 : i32, i32, i32
  }
  func.func @transform_1(%arg0: i32) -> (i32, i32) {
    %c0_i32 = arith.constant 0 : i32
    %c0_i32_0 = arith.constant 0 : i32
    %c0_i32_1 = arith.constant 0 : i32
    return %c0_i32, %c0_i32_0 : i32, i32
  }
  func.func @transform_2(%arg0: i32) -> (i32, i32) {
    %c0_i32 = arith.constant 0 : i32
    %c0_i32_0 = arith.constant 0 : i32
    %c0_i32_1 = arith.constant 0 : i32
    return %c0_i32, %c0_i32_0 : i32, i32
  }
  func.func @transform_3(%arg0: i32) -> (i32, i32) {
    %c0_i32 = arith.constant 0 : i32
    %c0_i32_0 = arith.constant 0 : i32
    %c0_i32_1 = arith.constant 0 : i32
    return %c0_i32, %c0_i32_0 : i32, i32
  }
  func.func @transform_4(%arg0: i32) -> (i32, i32) {
    %c0_i32 = arith.constant 0 : i32
    %c0_i32_0 = arith.constant 0 : i32
    %c0_i32_1 = arith.constant 0 : i32
    return %c0_i32, %c0_i32_0 : i32, i32
  }
  func.func @transform_5(%arg0: i32) -> (i32, i32) {
    %c0_i32 = arith.constant 0 : i32
    %c0_i32_0 = arith.constant 0 : i32
    %c0_i32_1 = arith.constant 0 : i32
    return %c0_i32, %c0_i32_0 : i32, i32
  }
  func.func @transform_6(%arg0: i32) -> (i32, i32) {
    %c0_i32 = arith.constant 0 : i32
    %c0_i32_0 = arith.constant 0 : i32
    %c0_i32_1 = arith.constant 0 : i32
    return %c0_i32, %c0_i32_0 : i32, i32
  }
  func.func @transform_7(%arg0: i32) -> (i32, i32) {
    %c0_i32 = arith.constant 0 : i32
    %c0_i32_0 = arith.constant 0 : i32
    %c0_i32_1 = arith.constant 0 : i32
    return %c0_i32, %c0_i32_0 : i32, i32
  }
  func.func @transform_8(%arg0: i32) -> (i32, i32) {
    %c0_i32 = arith.constant 0 : i32
    %c0_i32_0 = arith.constant 0 : i32
    %c0_i32_1 = arith.constant 0 : i32
    return %c0_i32, %c0_i32_0 : i32, i32
  }
  func.func @transform_9(%arg0: i32) -> (i32, i32) {
    %c0_i32 = arith.constant 0 : i32
    %c0_i32_0 = arith.constant 0 : i32
    %c0_i32_1 = arith.constant 0 : i32
    return %c0_i32, %c0_i32_0 : i32, i32
  }
  func.func @transform_10(%arg0: i32) -> (i32, i32) {
    %c0_i32 = arith.constant 0 : i32
    %c0_i32_0 = arith.constant 0 : i32
    %c0_i32_1 = arith.constant 0 : i32
    return %c0_i32, %c0_i32_0 : i32, i32
  }
  func.func @transform_11(%arg0: i32) -> (i32, i32) {
    %c0_i32 = arith.constant 0 : i32
    %c0_i32_0 = arith.constant 0 : i32
    %c0_i32_1 = arith.constant 0 : i32
    return %c0_i32, %c0_i32_0 : i32, i32
  }
  func.func @transform_12(%arg0: i32) -> (i32, i32) {
    %c0_i32 = arith.constant 0 : i32
    %c0_i32_0 = arith.constant 0 : i32
    %c0_i32_1 = arith.constant 0 : i32
    return %c0_i32, %c0_i32_0 : i32, i32
  }
  func.func @transform_13(%arg0: i32) -> (i32, i32, i32) {
    %c0_i32 = arith.constant 0 : i32
    %c0_i32_0 = arith.constant 0 : i32
    %c0_i32_1 = arith.constant 0 : i32
    return %arg0, %c0_i32, %c0_i32_0 : i32, i32, i32
  }
}

</mosaic_0001>

<llo_original>
// kernel: tpu_custom_call.1
$region0: #{tpu_custom_call.1}
  #allocation0 [shape = 'u32[]', space=smem, size = 0x4, offset = 0x4, fixed_abs, tag = 'smem constant byte address 0x4 - core index']
  #allocation1 [shape = 'u32[144,128]{1,0:T(1,128)}', space=vmem, size = 0x12000, scoped, tag = 'internal scratch']
  #allocation2 [shape = 'bf16[8,96]{1,0:T(8,128)(2,1)}', space=vmem, size = 0x800, scoped, tag = 'scratch operand']
  #allocation3 [shape = 'bf16[8,32]{1,0:T(8,128)(2,1)}', space=vmem, size = 0x800, scoped, tag = 'scratch operand']
  %s0 = inlined_call_operand.vmem [shape: f32[2,8,32], index: 0, kind: input, shape index: {}]
  %s1 = inlined_call_operand.vmem [shape: f32[1,32], index: 1, kind: input, shape index: {}]
  %s2 = inlined_call_operand.vmem [shape: f32[1,32], index: 2, kind: input, shape index: {}]
  %s3 = inlined_call_operand.vmem [shape: bf16[32,96], index: 3, kind: input, shape index: {}]
  %s4 = inlined_call_operand.vmem [shape: f32[1,96], index: 4, kind: input, shape index: {}]
  %s5 = inlined_call_operand.vmem [shape: bf16[32,32], index: 5, kind: input, shape index: {}]
  %s6 = inlined_call_operand.vmem [shape: f32[1,32], index: 6, kind: input, shape index: {}]
  %s7 = inlined_call_operand.vmem [shape: f32[1,32], index: 7, kind: input, shape index: {}]
  %s8 = inlined_call_operand.vmem [shape: f32[1,32], index: 8, kind: input, shape index: {}]
  %s9 = inlined_call_operand.vmem [shape: bf16[32,128], index: 9, kind: input, shape index: {}]
  %s10 = inlined_call_operand.vmem [shape: f32[1,128], index: 10, kind: input, shape index: {}]
  %s11 = inlined_call_operand.vmem [shape: bf16[128,32], index: 11, kind: input, shape index: {}]
  %s12 = inlined_call_operand.vmem [shape: f32[1,32], index: 12, kind: input, shape index: {}]
  %s13 = inlined_call_operand.hbm [shape: f32[2,8,32], index: 13, kind: output, shape index: {}]
  %s14 = sld [smem:[#allocation0]]
  $region85: #{tpu_custom_call.1} parent=0
    _
  %s16 = ssub.s32 1, %s14
  %s17 = scalar_select 0, %s16, %s14
  $region1: #{tpu_custom_call.1} parent=0
    #allocation4 [shape = 'u8[8192]{0}', space=vmem, size = 0x2000, scoped, tag = 'output window, operand 0']
    #allocation5 [shape = 's32[2]{0}', space=sflag, size = 0x8, scoped, tag = 'scoped memory for tpu_custom_call.1']
    %18 = vsyncpa [#allocation5], 0
    %s19 = scalar_lea.sflag [#allocation5], 1
    %20 = vsyncpa %s19, 0
    loop: start=0, step=1, limit=4
    $region2: #{tpu_custom_call.1} parent=1 // loop_pre_header
      _
    $region3: #{tpu_custom_call.1} parent=1 // loop_header
      %s22 = sphi 0, %s26
      %p23 = scmp.ge.s32.totalorder %s22, 4
      %s32 = sphi 0, %s34
      %s35 = sphi 0, %s32
      %s36 = sphi 0, %s35
      %s52 = sphi 0, %s36
      %s56 = sphi 0, %s56
      %s58 = sphi 0, %s56
      %s59 = sphi 0, %s58
      %s73 = sphi 0, %s59
      %s77 = sphi 0, %s77
      %s79 = sphi 0, %s77
      %s80 = sphi 0, %s79
      %s94 = sphi 0, %s80
      %s98 = sphi 0, %s98
      %s100 = sphi 0, %s98
      %s101 = sphi 0, %s100
      %s115 = sphi 0, %s101
      %s119 = sphi 0, %s119
      %s121 = sphi 0, %s119
      %s122 = sphi 0, %s121
      %s136 = sphi 0, %s122
      %s140 = sphi 0, %s140
      %s142 = sphi 0, %s140
      %s143 = sphi 0, %s142
      %s157 = sphi 0, %s143
      %s161 = sphi 0, %s161
      %s163 = sphi 0, %s161
      %s164 = sphi 0, %s163
      %s178 = sphi 0, %s164
      %s182 = sphi 0, %s182
      %s184 = sphi 0, %s182
      %s185 = sphi 0, %s184
      %s199 = sphi 0, %s185
      %s203 = sphi 0, %s203
      %s205 = sphi 0, %s203
      %s206 = sphi 0, %s205
      %s220 = sphi 0, %s206
      %s224 = sphi 0, %s224
      %s226 = sphi 0, %s224
      %s227 = sphi 0, %s226
      %s241 = sphi 0, %s227
      %s245 = sphi 0, %s245
      %s247 = sphi 0, %s245
      %s248 = sphi 0, %s247
      %s262 = sphi 0, %s248
      %s266 = sphi 0, %s266
      %s268 = sphi 0, %s266
      %s269 = sphi 0, %s268
      %s283 = sphi 0, %s269
      %s287 = sphi 0, %s287
      %s289 = sphi 0, %s287
      %s290 = sphi 0, %s289
      %s304 = sphi 0, %s290
      %s310 = sphi 0, %s312
      %s313 = sphi 0, %s310
      %s314 = sphi 0, %s313
      %s330 = sphi 0, %s314
    $region4: #{tpu_custom_call.1} parent=1 // loop_header_branch
      %25 = sbr.rel (%p23) target = $region8
    $region5: #{tpu_custom_call.1} parent=1 // loop_body
      %s27 = ssub.s32 %s22, 1
      %s28 = ssub.s32 %s22, 2
      %s29 = sadd.s32 %s22, 1
      %s30 = ssub.s32 %s22, %s29
      %p31 = scmp.eq.s32.totalorder %s30, 0
      %s33 = sadd.s32 %s32, 1
      %s34 = scalar_select %p31, %s32, %s33
      %p37 = pneg %p31
      %p38 = scmp.eq.s32.totalorder %s22, 1
      %p39 = por %p37, %p38
      %p40 = scmp.ne.s32.totalorder %s32, %s35
      %p41 = scmp.eq.s32.totalorder %s22, 0
      %p42 = por %p40, %p41
      %p43 = scmp.ne.s32.totalorder %s32, %s35
      %p44 = scmp.eq.s32.totalorder %s27, 1
      %p45 = por %p43, %p44
      %p46 = scmp.ne.s32.totalorder %s35, %s36
      %p47 = scmp.eq.s32.totalorder %s27, 0
      %p48 = por %p46, %p47
      %p49 = scmp.ne.s32.totalorder %s35, %s36
      %p50 = scmp.eq.s32.totalorder %s28, 1
      %p51 = por %p49, %p50
      %p53 = scmp.ne.s32.totalorder %s36, %s52
      %p54 = scmp.eq.s32.totalorder %s28, 0
      %p55 = por %p53, %p54
      %s57 = sadd.s32 %s56, 1
      %p60 = scmp.eq.s32.totalorder %s22, 1
      %p61 = scmp.ne.s32.totalorder %s56, %s58
      %p62 = scmp.eq.s32.totalorder %s22, 0
      %p63 = por %p61, %p62
      %p64 = scmp.ne.s32.totalorder %s56, %s58
      %p65 = scmp.eq.s32.totalorder %s27, 1
      %p66 = por %p64, %p65
      %p67 = scmp.ne.s32.totalorder %s58, %s59
      %p68 = scmp.eq.s32.totalorder %s27, 0
      %p69 = por %p67, %p68
      %p70 = scmp.ne.s32.totalorder %s58, %s59
      %p71 = scmp.eq.s32.totalorder %s28, 1
      %p72 = por %p70, %p71
      %p74 = scmp.ne.s32.totalorder %s59, %s73
      %p75 = scmp.eq.s32.totalorder %s28, 0
      %p76 = por %p74, %p75
      %s78 = sadd.s32 %s77, 1
      %p81 = scmp.eq.s32.totalorder %s22, 1
      %p82 = scmp.ne.s32.totalorder %s77, %s79
      %p83 = scmp.eq.s32.totalorder %s22, 0
      %p84 = por %p82, %p83
      %p85 = scmp.ne.s32.totalorder %s77, %s79
      %p86 = scmp.eq.s32.totalorder %s27, 1
      %p87 = por %p85, %p86
      %p88 = scmp.ne.s32.totalorder %s79, %s80
      %p89 = scmp.eq.s32.totalorder %s27, 0
      %p90 = por %p88, %p89
      %p91 = scmp.ne.s32.totalorder %s79, %s80
      %p92 = scmp.eq.s32.totalorder %s28, 1
      %p93 = por %p91, %p92
      %p95 = scmp.ne.s32.totalorder %s80, %s94
      %p96 = scmp.eq.s32.totalorder %s28, 0
      %p97 = por %p95, %p96
      %s99 = sadd.s32 %s98, 1
      %p102 = scmp.eq.s32.totalorder %s22, 1
      %p103 = scmp.ne.s32.totalorder %s98, %s100
      %p104 = scmp.eq.s32.totalorder %s22, 0
      %p105 = por %p103, %p104
      %p106 = scmp.ne.s32.totalorder %s98, %s100
      %p107 = scmp.eq.s32.totalorder %s27, 1
      %p108 = por %p106, %p107
      %p109 = scmp.ne.s32.totalorder %s100, %s101
      %p110 = scmp.eq.s32.totalorder %s27, 0
      %p111 = por %p109, %p110
      %p112 = scmp.ne.s32.totalorder %s100, %s101
      %p113 = scmp.eq.s32.totalorder %s28, 1
      %p114 = por %p112, %p113
      %p116 = scmp.ne.s32.totalorder %s101, %s115
      %p117 = scmp.eq.s32.totalorder %s28, 0
      %p118 = por %p116, %p117
      %s120 = sadd.s32 %s119, 1
      %p123 = scmp.eq.s32.totalorder %s22, 1
      %p124 = scmp.ne.s32.totalorder %s119, %s121
      %p125 = scmp.eq.s32.totalorder %s22, 0
      %p126 = por %p124, %p125
      %p127 = scmp.ne.s32.totalorder %s119, %s121
      %p128 = scmp.eq.s32.totalorder %s27, 1
      %p129 = por %p127, %p128
      %p130 = scmp.ne.s32.totalorder %s121, %s122
      %p131 = scmp.eq.s32.totalorder %s27, 0
      %p132 = por %p130, %p131
      %p133 = scmp.ne.s32.totalorder %s121, %s122
      %p134 = scmp.eq.s32.totalorder %s28, 1
      %p135 = por %p133, %p134
      %p137 = scmp.ne.s32.totalorder %s122, %s136
      %p138 = scmp.eq.s32.totalorder %s28, 0
      %p139 = por %p137, %p138
      %s141 = sadd.s32 %s140, 1
      %p144 = scmp.eq.s32.totalorder %s22, 1
      %p145 = scmp.ne.s32.totalorder %s140, %s142
      %p146 = scmp.eq.s32.totalorder %s22, 0
      %p147 = por %p145, %p146
      %p148 = scmp.ne.s32.totalorder %s140, %s142
      %p149 = scmp.eq.s32.totalorder %s27, 1
      %p150 = por %p148, %p149
      %p151 = scmp.ne.s32.totalorder %s142, %s143
      %p152 = scmp.eq.s32.totalorder %s27, 0
      %p153 = por %p151, %p152
      %p154 = scmp.ne.s32.totalorder %s142, %s143
      %p155 = scmp.eq.s32.totalorder %s28, 1
      %p156 = por %p154, %p155
      %p158 = scmp.ne.s32.totalorder %s143, %s157
      %p159 = scmp.eq.s32.totalorder %s28, 0
      %p160 = por %p158, %p159
      %s162 = sadd.s32 %s161, 1
      %p165 = scmp.eq.s32.totalorder %s22, 1
      %p166 = scmp.ne.s32.totalorder %s161, %s163
      %p167 = scmp.eq.s32.totalorder %s22, 0
      %p168 = por %p166, %p167
      %p169 = scmp.ne.s32.totalorder %s161, %s163
      %p170 = scmp.eq.s32.totalorder %s27, 1
      %p171 = por %p169, %p170
      %p172 = scmp.ne.s32.totalorder %s163, %s164
      %p173 = scmp.eq.s32.totalorder %s27, 0
      %p174 = por %p172, %p173
      %p175 = scmp.ne.s32.totalorder %s163, %s164
      %p176 = scmp.eq.s32.totalorder %s28, 1
      %p177 = por %p175, %p176
      %p179 = scmp.ne.s32.totalorder %s164, %s178
      %p180 = scmp.eq.s32.totalorder %s28, 0
      %p181 = por %p179, %p180
      %s183 = sadd.s32 %s182, 1
      %p186 = scmp.eq.s32.totalorder %s22, 1
      %p187 = scmp.ne.s32.totalorder %s182, %s184
      %p188 = scmp.eq.s32.totalorder %s22, 0
      %p189 = por %p187, %p188
      %p190 = scmp.ne.s32.totalorder %s182, %s184
      %p191 = scmp.eq.s32.totalorder %s27, 1
      %p192 = por %p190, %p191
      %p193 = scmp.ne.s32.totalorder %s184, %s185
      %p194 = scmp.eq.s32.totalorder %s27, 0
      %p195 = por %p193, %p194
      %p196 = scmp.ne.s32.totalorder %s184, %s185
      %p197 = scmp.eq.s32.totalorder %s28, 1
      %p198 = por %p196, %p197
      %p200 = scmp.ne.s32.totalorder %s185, %s199
      %p201 = scmp.eq.s32.totalorder %s28, 0
      %p202 = por %p200, %p201
      %s204 = sadd.s32 %s203, 1
      %p207 = scmp.eq.s32.totalorder %s22, 1
      %p208 = scmp.ne.s32.totalorder %s203, %s205
      %p209 = scmp.eq.s32.totalorder %s22, 0
      %p210 = por %p208, %p209
      %p211 = scmp.ne.s32.totalorder %s203, %s205
      %p212 = scmp.eq.s32.totalorder %s27, 1
      %p213 = por %p211, %p212
      %p214 = scmp.ne.s32.totalorder %s205, %s206
      %p215 = scmp.eq.s32.totalorder %s27, 0
      %p216 = por %p214, %p215
      %p217 = scmp.ne.s32.totalorder %s205, %s206
      %p218 = scmp.eq.s32.totalorder %s28, 1
      %p219 = por %p217, %p218
      %p221 = scmp.ne.s32.totalorder %s206, %s220
      %p222 = scmp.eq.s32.totalorder %s28, 0
      %p223 = por %p221, %p222
      %s225 = sadd.s32 %s224, 1
      %p228 = scmp.eq.s32.totalorder %s22, 1
      %p229 = scmp.ne.s32.totalorder %s224, %s226
      %p230 = scmp.eq.s32.totalorder %s22, 0
      %p231 = por %p229, %p230
      %p232 = scmp.ne.s32.totalorder %s224, %s226
      %p233 = scmp.eq.s32.totalorder %s27, 1
      %p234 = por %p232, %p233
      %p235 = scmp.ne.s32.totalorder %s226, %s227
      %p236 = scmp.eq.s32.totalorder %s27, 0
      %p237 = por %p235, %p236
      %p238 = scmp.ne.s32.totalorder %s226, %s227
      %p239 = scmp.eq.s32.totalorder %s28, 1
      %p240 = por %p238, %p239
      %p242 = scmp.ne.s32.totalorder %s227, %s241
      %p243 = scmp.eq.s32.totalorder %s28, 0
      %p244 = por %p242, %p243
      %s246 = sadd.s32 %s245, 1
      %p249 = scmp.eq.s32.totalorder %s22, 1
      %p250 = scmp.ne.s32.totalorder %s245, %s247
      %p251 = scmp.eq.s32.totalorder %s22, 0
      %p252 = por %p250, %p251
      %p253 = scmp.ne.s32.totalorder %s245, %s247
      %p254 = scmp.eq.s32.totalorder %s27, 1
      %p255 = por %p253, %p254
      %p256 = scmp.ne.s32.totalorder %s247, %s248
      %p257 = scmp.eq.s32.totalorder %s27, 0
      %p258 = por %p256, %p257
      %p259 = scmp.ne.s32.totalorder %s247, %s248
      %p260 = scmp.eq.s32.totalorder %s28, 1
      %p261 = por %p259, %p260
      %p263 = scmp.ne.s32.totalorder %s248, %s262
      %p264 = scmp.eq.s32.totalorder %s28, 0
      %p265 = por %p263, %p264
      %s267 = sadd.s32 %s266, 1
      %p270 = scmp.eq.s32.totalorder %s22, 1
      %p271 = scmp.ne.s32.totalorder %s266, %s268
      %p272 = scmp.eq.s32.totalorder %s22, 0
      %p273 = por %p271, %p272
      %p274 = scmp.ne.s32.totalorder %s266, %s268
      %p275 = scmp.eq.s32.totalorder %s27, 1
      %p276 = por %p274, %p275
      %p277 = scmp.ne.s32.totalorder %s268, %s269
      %p278 = scmp.eq.s32.totalorder %s27, 0
      %p279 = por %p277, %p278
      %p280 = scmp.ne.s32.totalorder %s268, %s269
      %p281 = scmp.eq.s32.totalorder %s28, 1
      %p282 = por %p280, %p281
      %p284 = scmp.ne.s32.totalorder %s269, %s283
      %p285 = scmp.eq.s32.totalorder %s28, 0
      %p286 = por %p284, %p285
      %s288 = sadd.s32 %s287, 1
      %p291 = scmp.eq.s32.totalorder %s22, 1
      %p292 = scmp.ne.s32.totalorder %s287, %s289
      %p293 = scmp.eq.s32.totalorder %s22, 0
      %p294 = por %p292, %p293
      %p295 = scmp.ne.s32.totalorder %s287, %s289
      %p296 = scmp.eq.s32.totalorder %s27, 1
      %p297 = por %p295, %p296
      %p298 = scmp.ne.s32.totalorder %s289, %s290
      %p299 = scmp.eq.s32.totalorder %s27, 0
      %p300 = por %p298, %p299
      %p301 = scmp.ne.s32.totalorder %s289, %s290
      %p302 = scmp.eq.s32.totalorder %s28, 1
      %p303 = por %p301, %p302
      %p305 = scmp.ne.s32.totalorder %s290, %s304
      %p306 = scmp.eq.s32.totalorder %s28, 0
      %p307 = por %p305, %p306
      %s308 = ssub.s32 %s22, %s29
      %p309 = scmp.eq.s32.totalorder %s308, 0
      %s311 = sadd.s32 %s310, 1
      %s312 = scalar_select %p309, %s310, %s311
      %p315 = pneg %p309
      %p316 = scmp.eq.s32.totalorder %s22, 1
      %p317 = por %p315, %p316
      %p318 = scmp.ne.s32.totalorder %s310, %s313
      %p319 = scmp.eq.s32.totalorder %s22, 0
      %p320 = por %p318, %p319
      %p321 = scmp.ne.s32.totalorder %s310, %s313
      %p322 = scmp.eq.s32.totalorder %s27, 1
      %p323 = por %p321, %p322
      %p324 = scmp.ne.s32.totalorder %s313, %s314
      %p325 = scmp.eq.s32.totalorder %s27, 0
      %p326 = por %p324, %p325
      %p327 = scmp.ne.s32.totalorder %s313, %s314
      %p328 = scmp.eq.s32.totalorder %s28, 1
      %p329 = por %p327, %p328
      %p331 = scmp.ne.s32.totalorder %s314, %s330
      %p332 = scmp.eq.s32.totalorder %s28, 0
      %p333 = por %p331, %p332
      %p334 = scmp.le.s32.totalorder 1, %s22
      %p335 = scmp.lt.s32.totalorder %s22, 3
      %p336 = pnand %p334, %p335
      %p337 = pneg %p336
      // Predicated region
      $region9: #{tpu_custom_call.1} parent=5 // pred_check
        _
      $region10: #{tpu_custom_call.1} parent=5 // pred_check_branch
        %339 = sbr.rel (%p336) target = $region12
      $region11: #{tpu_custom_call.1} parent=5 // pred_region
        %s340 = ssub.s32 %s22, 1
        // Predicated region
        $region13: #{tpu_custom_call.1} parent=11 // pred_check
          %p341 = pneg %p69
        $region14: #{tpu_custom_call.1} parent=11 // pred_check_branch
          %343 = sbr.rel (%p341) target = $region16
        $region15: #{tpu_custom_call.1} parent=11 // pred_region
          _
        $region16: #{tpu_custom_call.1} parent=11 // pred_fallthru
          _
        // Predicated region
        $region17: #{tpu_custom_call.1} parent=11 // pred_check
          %p344 = pneg %p90
        $region18: #{tpu_custom_call.1} parent=11 // pred_check_branch
          %346 = sbr.rel (%p344) target = $region20
        $region19: #{tpu_custom_call.1} parent=11 // pred_region
          _
        $region20: #{tpu_custom_call.1} parent=11 // pred_fallthru
          _
        // Predicated region
        $region21: #{tpu_custom_call.1} parent=11 // pred_check
          %p347 = pneg %p111
        $region22: #{tpu_custom_call.1} parent=11 // pred_check_branch
          %349 = sbr.rel (%p347) target = $region24
        $region23: #{tpu_custom_call.1} parent=11 // pred_region
          _
        $region24: #{tpu_custom_call.1} parent=11 // pred_fallthru
          _
        // Predicated region
        $region25: #{tpu_custom_call.1} parent=11 // pred_check
          %p350 = pneg %p132
        $region26: #{tpu_custom_call.1} parent=11 // pred_check_branch
          %352 = sbr.rel (%p350) target = $region28
        $region27: #{tpu_custom_call.1} parent=11 // pred_region
          _
        $region28: #{tpu_custom_call.1} parent=11 // pred_fallthru
          _
        // Predicated region
        $region29: #{tpu_custom_call.1} parent=11 // pred_check
          %p353 = pneg %p153
        $region30: #{tpu_custom_call.1} parent=11 // pred_check_branch
          %355 = sbr.rel (%p353) target = $region32
        $region31: #{tpu_custom_call.1} parent=11 // pred_region
          _
        $region32: #{tpu_custom_call.1} parent=11 // pred_fallthru
          _
        // Predicated region
        $region33: #{tpu_custom_call.1} parent=11 // pred_check
          %p356 = pneg %p174
        $region34: #{tpu_custom_call.1} parent=11 // pred_check_branch
          %358 = sbr.rel (%p356) target = $region36
        $region35: #{tpu_custom_call.1} parent=11 // pred_region
          _
        $region36: #{tpu_custom_call.1} parent=11 // pred_fallthru
          _
        // Predicated region
        $region37: #{tpu_custom_call.1} parent=11 // pred_check
          %p359 = pneg %p195
        $region38: #{tpu_custom_call.1} parent=11 // pred_check_branch
          %361 = sbr.rel (%p359) target = $region40
        $region39: #{tpu_custom_call.1} parent=11 // pred_region
          _
        $region40: #{tpu_custom_call.1} parent=11 // pred_fallthru
          _
        // Predicated region
        $region41: #{tpu_custom_call.1} parent=11 // pred_check
          %p362 = pneg %p216
        $region42: #{tpu_custom_call.1} parent=11 // pred_check_branch
          %364 = sbr.rel (%p362) target = $region44
        $region43: #{tpu_custom_call.1} parent=11 // pred_region
          _
        $region44: #{tpu_custom_call.1} parent=11 // pred_fallthru
          _
        // Predicated region
        $region45: #{tpu_custom_call.1} parent=11 // pred_check
          %p365 = pneg %p237
        $region46: #{tpu_custom_call.1} parent=11 // pred_check_branch
          %367 = sbr.rel (%p365) target = $region48
        $region47: #{tpu_custom_call.1} parent=11 // pred_region
          _
        $region48: #{tpu_custom_call.1} parent=11 // pred_fallthru
          _
        // Predicated region
        $region49: #{tpu_custom_call.1} parent=11 // pred_check
          %p368 = pneg %p258
        $region50: #{tpu_custom_call.1} parent=11 // pred_check_branch
          %370 = sbr.rel (%p368) target = $region52
        $region51: #{tpu_custom_call.1} parent=11 // pred_region
          _
        $region52: #{tpu_custom_call.1} parent=11 // pred_fallthru
          _
        // Predicated region
        $region53: #{tpu_custom_call.1} parent=11 // pred_check
          %p371 = pneg %p279
        $region54: #{tpu_custom_call.1} parent=11 // pred_check_branch
          %373 = sbr.rel (%p371) target = $region56
        $region55: #{tpu_custom_call.1} parent=11 // pred_region
          _
        $region56: #{tpu_custom_call.1} parent=11 // pred_fallthru
          _
        // Predicated region
        $region57: #{tpu_custom_call.1} parent=11 // pred_check
          %p374 = pneg %p300
        $region58: #{tpu_custom_call.1} parent=11 // pred_check_branch
          %376 = sbr.rel (%p374) target = $region60
        $region59: #{tpu_custom_call.1} parent=11 // pred_region
          _
        $region60: #{tpu_custom_call.1} parent=11 // pred_fallthru
          _
      $region12: #{tpu_custom_call.1} parent=5 // pred_fallthru
        _
      %p377 = scmp.lt.s32.totalorder %s22, 2
      // Predicated region
      $region61: #{tpu_custom_call.1} parent=5 // pred_check
        %p378 = pneg %p377
      $region62: #{tpu_custom_call.1} parent=5 // pred_check_branch
        %380 = sbr.rel (%p378) target = $region64
      $region63: #{tpu_custom_call.1} parent=5 // pred_region
        // Predicated region
        $region65: #{tpu_custom_call.1} parent=63 // pred_check
          %p381 = pneg %p42
        $region66: #{tpu_custom_call.1} parent=63 // pred_check_branch
          %383 = sbr.rel (%p381) target = $region68
        $region67: #{tpu_custom_call.1} parent=63 // pred_region
          %p384 = scmp.lt.s32.totalorder %s22, 1
          %s385 = scalar_select %p384, %s22, 1
          %s386 = smul.addr %s385, 8
          %s387 = scalar_lea.vmem %s0, %s386
        $region68: #{tpu_custom_call.1} parent=63 // pred_fallthru
          _
      $region64: #{tpu_custom_call.1} parent=5 // pred_fallthru
        _
      %p388 = scmp.le.s32.totalorder 1, %s22
      %p389 = scmp.lt.s32.totalorder %s22, 3
      %p390 = pnand %p388, %p389
      %p391 = pneg %p390
      // Predicated region
      $region69: #{tpu_custom_call.1} parent=5 // pred_check
        _
      $region70: #{tpu_custom_call.1} parent=5 // pred_check_branch
        %393 = sbr.rel (%p390) target = $region72
      $region71: #{tpu_custom_call.1} parent=5 // pred_region
        %s394 = ssub.s32 %s22, 1
        %p395 = scmp.lt.s32.totalorder %s27, 1
        %s396 = scalar_select %p395, %s27, 1
        %s397 = smul.addr %s396, 8
        %s398 = scalar_lea.vmem %s0, %s397
        %p399 = pneg %p48
        %p400 = pneg %p45
        %p401 = pneg %p69
        %p402 = pneg %p66
        %p403 = pneg %p90
        %p404 = pneg %p87
        %p405 = pneg %p111
        %p406 = pneg %p108
        %p407 = pneg %p132
        %p408 = pneg %p129
        %p409 = pneg %p153
        %p410 = pneg %p150
        %p411 = pneg %p174
        %p412 = pneg %p171
        %p413 = pneg %p195
        %p414 = pneg %p192
        %p415 = pneg %p216
        %p416 = pneg %p213
        %p417 = pneg %p237
        %p418 = pneg %p234
        %p419 = pneg %p258
        %p420 = pneg %p255
        %p421 = pneg %p279
        %p422 = pneg %p276
        %p423 = pneg %p300
        %p424 = pneg %p297
        %p425 = pneg %p326
        %p426 = pneg %p323
        %s427 = sand.u32 %s313, 1
        %s428 = scalar_lea.sflag [#allocation5], %s427
        %s429 = sand.u32 %s313, 1
        %s430 = smul.addr %s429, 8
        %s431 = scalar_lea.vmem [#allocation4], %s430
        %p432 = scmp.lt.s32.totalorder %s27, 1
        %s433 = scalar_select %p432, %s27, 1
        %s434 = smul.addr %s433, 8
        %s435 = scalar_lea.vmem %s0, %s434
        %v437 = vld [vmem:[%s435] sm:$0xff]
        %v438 = vld [vmem:[%s1] sm:$0x1]
        %v439 = vld [vmem:[%s2] sm:$0x1]
        %vm440 = vcmask 261120
        %v441 = vsel %vm440, %v437, 0.0
        %442 = vadd.xlane.f32.xlu0 %v441
        %v443 = vpop.xlane.xlu0 %442
        %v444 = vrcp.pop 32.0
        %v445 = vmul.f32 %v443, %v444
        %v446 = vsub.f32 %v437, %v445
        %v447 = vmul.f32 %v446, %v446
        %v448 = vsel %vm440, %v447, 0.0
        %449 = vadd.xlane.f32.xlu0 %v448
        %v450 = vpop.xlane.xlu0 %449
        %v451 = vmul.f32 %v450, %v444
        %v452 = vadd.f32 %v451, 1e-05
        %v453 = vrsqrt.pop %v452
        %v454 = vmul.f32 %v446, %v453
        %v456 = vlaneseq
        %v457 = vshrl.u32 %v456, 7
        %v458 = vsub.s32 0, %v457
        %v459 = vrot.slane %v438, %v458
        %v461 = vmul.f32 %v454, %v459
        %v463 = vlaneseq
        %v464 = vshrl.u32 %v463, 7
        %v465 = vsub.s32 0, %v464
        %v466 = vrot.slane %v439, %v465
        %v468 = vadd.f32 %v461, %v466
        %v469 = vpack.c.bf16 %v468, %v468
        %v470 = vld [vmem:[%s3] sm:$0xf]
        %v471 = vld [vmem:[%s3 + $0x4] sm:$0xf]
        %v472 = vld [vmem:[%s3 + $0x8] sm:$0xf]
        %v473 = vld [vmem:[%s3 + $0xc] sm:$0xf]
        %v474 = vld [vmem:[%s4] sm:$0x1]
        %v476 = vlaneseq
        %v477 = vshrl.u32 %v476, 7
        %v478 = vsub.s32 0, %v477
        %v479 = vrot.slane %v474, %v478
        %v485 = vunpack.c.l.b16 %v470
        %v486 = vunpack.c.l.b16 %v471
        %v487 = vunpack.c.l.b16 %v472
        %v488 = vunpack.c.l.b16 %v473
        %v489 = vpack.c.b16 %v486, %v485
        %v490 = vpack.c.b16 %v488, %v487
        %v494 = vsel %vm440, %v469, 0
        %496 = vmatprep.subr.bf16.mxu0 0
        %497 = vmatpush1.bf16.msra.mxu0 %v489
        %498 = vmatprep.subr.bf16.mxu0 0
        %499 = vmatpush1.bf16.msra.mxu0 %v490
        %500 = vmatprep.subr.bf16.mxu0 0
        %501 = vmatpush1.bf16.msra.mxu0 0
        %502 = vmatprep.subr.bf16.mxu0 0
        %503 = vmatpush1.bf16.msra.mxu0 0
        %504 = vmatprep.subr.bf16.mxu0 0
        %505 = vmatpush1.bf16.msra.mxu0 0
        %506 = vmatprep.subr.bf16.mxu0 0
        %507 = vmatpush1.bf16.msra.mxu0 0
        %508 = vmatprep.subr.bf16.mxu0 0
        %509 = vmatpush1.bf16.msra.mxu0 0
        %510 = vmatprep.subr.bf16.mxu0 0
        %511 = vmatpush1.bf16.msra.mxu0 0
        %512 = vmatprep.subr.bf16.mxu0 0
        %513 = vmatpush1.bf16.msra.mxu0 0
        %514 = vmatprep.subr.bf16.mxu0 0
        %515 = vmatpush1.bf16.msra.mxu0 0
        %516 = vmatprep.subr.bf16.mxu0 0
        %517 = vmatpush1.bf16.msra.mxu0 0
        %518 = vmatprep.subr.bf16.mxu0 0
        %519 = vmatpush1.bf16.msra.mxu0 0
        %520 = vmatprep.subr.bf16.mxu0 0
        %521 = vmatpush1.bf16.msra.mxu0 0
        %522 = vmatprep.subr.bf16.mxu0 0
        %523 = vmatpush1.bf16.msra.mxu0 0
        %524 = vmatprep.subr.bf16.mxu0 0
        %525 = vmatpush1.bf16.msra.mxu0 0
        %526 = vmatprep.subr.bf16.mxu0 0
        %527 = vmatpush1.bf16.msra.mxu0 0
        %528 = vmatprep.mubr.bf16.mxu0 0
        %529 = vmatmul.mubr.bf16.gmra.mrb[0].mxu0 %v494
        %v530 = vpop.f32.mrb[0].mxu0
        %v531 = vadd.f32 %v479, %v530
        %v532 = vpop.f32.mrb[0].mxu0
        %v533 = vpop.f32.mrb[0].mxu0
        %v534 = vpop.f32.mrb[0].mxu0
        %535 = vdwg.mxu0
        %v536 = vpack.c.bf16 %v531, %v531
        %vm537 = vcmask 781312
        %538 = vst.msk [vmem:[#allocation2] sm:$0xf] %vm537, %v536
        %v539 = vlaneseq
        %v540 = vshrl.u32 %v539, 7
        %v541 = vlaneseq
        %v542 = vand.u32 %v541, 127
        %vm543 = vcmp.le.s32.totalorder %v542, %v540
        %v544 = vld [vmem:[#allocation2] sm:$0xf]
        %v546 = vunpack.c.l.b16 %v544
        %v547 = vpack.c.b16 %v546, %v546
        %548 = vrot.lane.b32.xlu0 %v547, 96
        %v549 = vpop.permute.xlu0 %548
        %vm550 = vcmask 64512
        %v552 = vsel %vm550, %v544, 0
        %v555 = vsel %vm550, %v549, 0
        %557 = vmatprep.subr.bf16.mxu0 0
        %558 = vmatpush1.bf16.xpose.msra.mxu0 %v555
        %559 = vmatprep.subr.bf16.mxu0 0
        %560 = vmatpush1.bf16.xpose.msra.mxu0 0
        %561 = vmatprep.subr.bf16.mxu0 0
        %562 = vmatpush1.bf16.xpose.msra.mxu0 0
        %563 = vmatprep.subr.bf16.mxu0 0
        %564 = vmatpush1.bf16.xpose.msra.mxu0 0
        %565 = vmatprep.subr.bf16.mxu0 0
        %566 = vmatpush1.bf16.xpose.msra.mxu0 0
        %567 = vmatprep.subr.bf16.mxu0 0
        %568 = vmatpush1.bf16.xpose.msra.mxu0 0
        %569 = vmatprep.subr.bf16.mxu0 0
        %570 = vmatpush1.bf16.xpose.msra.mxu0 0
        %571 = vmatprep.subr.bf16.mxu0 0
        %572 = vmatpush1.bf16.xpose.msra.mxu0 0
        %573 = vmatprep.subr.bf16.mxu0 0
        %574 = vmatpush1.bf16.xpose.msra.mxu0 0
        %575 = vmatprep.subr.bf16.mxu0 0
        %576 = vmatpush1.bf16.xpose.msra.mxu0 0
        %577 = vmatprep.subr.bf16.mxu0 0
        %578 = vmatpush1.bf16.xpose.msra.mxu0 0
        %579 = vmatprep.subr.bf16.mxu0 0
        %580 = vmatpush1.bf16.xpose.msra.mxu0 0
        %581 = vmatprep.subr.bf16.mxu0 0
        %582 = vmatpush1.bf16.xpose.msra.mxu0 0
        %583 = vmatprep.subr.bf16.mxu0 0
        %584 = vmatpush1.bf16.xpose.msra.mxu0 0
        %585 = vmatprep.subr.bf16.mxu0 0
        %586 = vmatpush1.bf16.xpose.msra.mxu0 0
        %587 = vmatprep.subr.bf16.mxu0 0
        %588 = vmatpush1.bf16.xpose.msra.mxu0 0
        %589 = vmatprep.mubr.bf16.mxu0 0
        %590 = vmatmul.mubr.bf16.gmra.mrb[0].mxu0 %v552
        %v591 = vpop.f32.mrb[0].mxu0
        %v592 = vadd.f32 0.0, %v591
        %v593 = vpop.f32.mrb[0].mxu0
        %v594 = vpop.f32.mrb[0].mxu0
        %v595 = vpop.f32.mrb[0].mxu0
        %596 = vdwg.mxu0
        %v597 = vmul.f32 %v592, 0.35355338
        %v598 = vsel %vm543, %v597, -1e+30
        %v599 = vsel %vm550, %v598, -inf
        %600 = vmax.xlane.f32.xlu0 %v599
        %v601 = vpop.xlane.xlu0 %600
        %v602 = vsub.f32 %v598, %v601
        %v603 = vmul.f32 %v602, 1.442695
        %v604 = vpow.pop %v603
        %v605 = vsel %vm550, %v604, 0.0
        %606 = vadd.xlane.f32.xlu0 %v605
        %v607 = vpop.xlane.xlu0 %606
        %v608 = vrcp.pop %v607
        %v609 = vmul.f32 %v604, %v608
        %v610 = vpack.c.bf16 %v609, %v609
        %611 = vrot.lane.b32.xlu0 %v547, 64
        %v612 = vpop.permute.xlu0 %611
        %v614 = vsel %vm550, %v610, 0
        %vm616 = vcmask 1043456
        %v618 = vsel %vm616, %v612, 0
        %620 = vmatprep.subr.bf16.mxu0 0
        %621 = vmatpush1.bf16.msra.mxu0 %v618
        %622 = vmatprep.subr.bf16.mxu0 0
        %623 = vmatpush1.bf16.msra.mxu0 0
        %624 = vmatprep.subr.bf16.mxu0 0
        %625 = vmatpush1.bf16.msra.mxu0 0
        %626 = vmatprep.subr.bf16.mxu0 0
        %627 = vmatpush1.bf16.msra.mxu0 0
        %628 = vmatprep.subr.bf16.mxu0 0
        %629 = vmatpush1.bf16.msra.mxu0 0
        %630 = vmatprep.subr.bf16.mxu0 0
        %631 = vmatpush1.bf16.msra.mxu0 0
        %632 = vmatprep.subr.bf16.mxu0 0
        %633 = vmatpush1.bf16.msra.mxu0 0
        %634 = vmatprep.subr.bf16.mxu0 0
        %635 = vmatpush1.bf16.msra.mxu0 0
        %636 = vmatprep.subr.bf16.mxu0 0
        %637 = vmatpush1.bf16.msra.mxu0 0
        %638 = vmatprep.subr.bf16.mxu0 0
        %639 = vmatpush1.bf16.msra.mxu0 0
        %640 = vmatprep.subr.bf16.mxu0 0
        %641 = vmatpush1.bf16.msra.mxu0 0
        %642 = vmatprep.subr.bf16.mxu0 0
        %643 = vmatpush1.bf16.msra.mxu0 0
        %644 = vmatprep.subr.bf16.mxu0 0
        %645 = vmatpush1.bf16.msra.mxu0 0
        %646 = vmatprep.subr.bf16.mxu0 0
        %647 = vmatpush1.bf16.msra.mxu0 0
        %648 = vmatprep.subr.bf16.mxu0 0
        %649 = vmatpush1.bf16.msra.mxu0 0
        %650 = vmatprep.subr.bf16.mxu0 0
        %651 = vmatpush1.bf16.msra.mxu0 0
        %652 = vmatprep.mubr.bf16.mxu0 0
        %653 = vmatmul.mubr.bf16.gmra.mrb[0].mxu0 %v614
        %v654 = vpop.f32.mrb[0].mxu0
        %v655 = vadd.f32 0.0, %v654
        %v656 = vpop.f32.mrb[0].mxu0
        %v657 = vpop.f32.mrb[0].mxu0
        %v658 = vpop.f32.mrb[0].mxu0
        %659 = vdwg.mxu0
        %660 = vrot.lane.b32.xlu0 %v547, 120
        %v661 = vpop.permute.xlu0 %660
        %662 = vrot.lane.b32.xlu0 %v547, 88
        %v663 = vpop.permute.xlu0 %662
        %v665 = vsel %vm550, %v661, 0
        %v668 = vsel %vm550, %v663, 0
        %670 = vmatprep.subr.bf16.mxu0 0
        %671 = vmatpush1.bf16.xpose.msra.mxu0 %v668
        %672 = vmatprep.subr.bf16.mxu0 0
        %673 = vmatpush1.bf16.xpose.msra.mxu0 0
        %674 = vmatprep.subr.bf16.mxu0 0
        %675 = vmatpush1.bf16.xpose.msra.mxu0 0
        %676 = vmatprep.subr.bf16.mxu0 0
        %677 = vmatpush1.bf16.xpose.msra.mxu0 0
        %678 = vmatprep.subr.bf16.mxu0 0
        %679 = vmatpush1.bf16.xpose.msra.mxu0 0
        %680 = vmatprep.subr.bf16.mxu0 0
        %681 = vmatpush1.bf16.xpose.msra.mxu0 0
        %682 = vmatprep.subr.bf16.mxu0 0
        %683 = vmatpush1.bf16.xpose.msra.mxu0 0
        %684 = vmatprep.subr.bf16.mxu0 0
        %685 = vmatpush1.bf16.xpose.msra.mxu0 0
        %686 = vmatprep.subr.bf16.mxu0 0
        %687 = vmatpush1.bf16.xpose.msra.mxu0 0
        %688 = vmatprep.subr.bf16.mxu0 0
        %689 = vmatpush1.bf16.xpose.msra.mxu0 0
        %690 = vmatprep.subr.bf16.mxu0 0
        %691 = vmatpush1.bf16.xpose.msra.mxu0 0
        %692 = vmatprep.subr.bf16.mxu0 0
        %693 = vmatpush1.bf16.xpose.msra.mxu0 0
        %694 = vmatprep.subr.bf16.mxu0 0
        %695 = vmatpush1.bf16.xpose.msra.mxu0 0
        %696 = vmatprep.subr.bf16.mxu0 0
        %697 = vmatpush1.bf16.xpose.msra.mxu0 0
        %698 = vmatprep.subr.bf16.mxu0 0
        %699 = vmatpush1.bf16.xpose.msra.mxu0 0
        %700 = vmatprep.subr.bf16.mxu0 0
        %701 = vmatpush1.bf16.xpose.msra.mxu0 0
        %702 = vmatprep.mubr.bf16.mxu0 0
        %703 = vmatmul.mubr.bf16.gmra.mrb[0].mxu0 %v665
        %v704 = vpop.f32.mrb[0].mxu0
        %v705 = vadd.f32 0.0, %v704
        %v706 = vpop.f32.mrb[0].mxu0
        %v707 = vpop.f32.mrb[0].mxu0
        %v708 = vpop.f32.mrb[0].mxu0
        %709 = vdwg.mxu0
        %v710 = vmul.f32 %v705, 0.35355338
        %v711 = vsel %vm543, %v710, -1e+30
        %v712 = vsel %vm550, %v711, -inf
        %713 = vmax.xlane.f32.xlu0 %v712
        %v714 = vpop.xlane.xlu0 %713
        %v715 = vsub.f32 %v711, %v714
        %v716 = vmul.f32 %v715, 1.442695
        %v717 = vpow.pop %v716
        %v718 = vsel %vm550, %v717, 0.0
        %719 = vadd.xlane.f32.xlu0 %v718
        %v720 = vpop.xlane.xlu0 %719
        %v721 = vrcp.pop %v720
        %v722 = vmul.f32 %v717, %v721
        %v723 = vpack.c.bf16 %v722, %v722
        %724 = vrot.lane.b32.xlu0 %v547, 56
        %v725 = vpop.permute.xlu0 %724
        %v727 = vsel %vm550, %v723, 0
        %v730 = vsel %vm616, %v725, 0
        %732 = vmatprep.subr.bf16.mxu0 0
        %733 = vmatpush1.bf16.msra.mxu0 %v730
        %734 = vmatprep.subr.bf16.mxu0 0
        %735 = vmatpush1.bf16.msra.mxu0 0
        %736 = vmatprep.subr.bf16.mxu0 0
        %737 = vmatpush1.bf16.msra.mxu0 0
        %738 = vmatprep.subr.bf16.mxu0 0
        %739 = vmatpush1.bf16.msra.mxu0 0
        %740 = vmatprep.subr.bf16.mxu0 0
        %741 = vmatpush1.bf16.msra.mxu0 0
        %742 = vmatprep.subr.bf16.mxu0 0
        %743 = vmatpush1.bf16.msra.mxu0 0
        %744 = vmatprep.subr.bf16.mxu0 0
        %745 = vmatpush1.bf16.msra.mxu0 0
        %746 = vmatprep.subr.bf16.mxu0 0
        %747 = vmatpush1.bf16.msra.mxu0 0
        %748 = vmatprep.subr.bf16.mxu0 0
        %749 = vmatpush1.bf16.msra.mxu0 0
        %750 = vmatprep.subr.bf16.mxu0 0
        %751 = vmatpush1.bf16.msra.mxu0 0
        %752 = vmatprep.subr.bf16.mxu0 0
        %753 = vmatpush1.bf16.msra.mxu0 0
        %754 = vmatprep.subr.bf16.mxu0 0
        %755 = vmatpush1.bf16.msra.mxu0 0
        %756 = vmatprep.subr.bf16.mxu0 0
        %757 = vmatpush1.bf16.msra.mxu0 0
        %758 = vmatprep.subr.bf16.mxu0 0
        %759 = vmatpush1.bf16.msra.mxu0 0
        %760 = vmatprep.subr.bf16.mxu0 0
        %761 = vmatpush1.bf16.msra.mxu0 0
        %762 = vmatprep.subr.bf16.mxu0 0
        %763 = vmatpush1.bf16.msra.mxu0 0
        %764 = vmatprep.mubr.bf16.mxu0 0
        %765 = vmatmul.mubr.bf16.gmra.mrb[0].mxu0 %v727
        %v766 = vpop.f32.mrb[0].mxu0
        %v767 = vadd.f32 0.0, %v766
        %v768 = vpop.f32.mrb[0].mxu0
        %v769 = vpop.f32.mrb[0].mxu0
        %v770 = vpop.f32.mrb[0].mxu0
        %771 = vdwg.mxu0
        %772 = vrot.lane.b32.xlu0 %v547, 112
        %v773 = vpop.permute.xlu0 %772
        %774 = vrot.lane.b32.xlu0 %v547, 80
        %v775 = vpop.permute.xlu0 %774
        %v777 = vsel %vm550, %v773, 0
        %v780 = vsel %vm550, %v775, 0
        %782 = vmatprep.subr.bf16.mxu0 0
        %783 = vmatpush1.bf16.xpose.msra.mxu0 %v780
        %784 = vmatprep.subr.bf16.mxu0 0
        %785 = vmatpush1.bf16.xpose.msra.mxu0 0
        %786 = vmatprep.subr.bf16.mxu0 0
        %787 = vmatpush1.bf16.xpose.msra.mxu0 0
        %788 = vmatprep.subr.bf16.mxu0 0
        %789 = vmatpush1.bf16.xpose.msra.mxu0 0
        %790 = vmatprep.subr.bf16.mxu0 0
        %791 = vmatpush1.bf16.xpose.msra.mxu0 0
        %792 = vmatprep.subr.bf16.mxu0 0
        %793 = vmatpush1.bf16.xpose.msra.mxu0 0
        %794 = vmatprep.subr.bf16.mxu0 0
        %795 = vmatpush1.bf16.xpose.msra.mxu0 0
        %796 = vmatprep.subr.bf16.mxu0 0
        %797 = vmatpush1.bf16.xpose.msra.mxu0 0
        %798 = vmatprep.subr.bf16.mxu0 0
        %799 = vmatpush1.bf16.xpose.msra.mxu0 0
        %800 = vmatprep.subr.bf16.mxu0 0
        %801 = vmatpush1.bf16.xpose.msra.mxu0 0
        %802 = vmatprep.subr.bf16.mxu0 0
        %803 = vmatpush1.bf16.xpose.msra.mxu0 0
        %804 = vmatprep.subr.bf16.mxu0 0
        %805 = vmatpush1.bf16.xpose.msra.mxu0 0
        %806 = vmatprep.subr.bf16.mxu0 0
        %807 = vmatpush1.bf16.xpose.msra.mxu0 0
        %808 = vmatprep.subr.bf16.mxu0 0
        %809 = vmatpush1.bf16.xpose.msra.mxu0 0
        %810 = vmatprep.subr.bf16.mxu0 0
        %811 = vmatpush1.bf16.xpose.msra.mxu0 0
        %812 = vmatprep.subr.bf16.mxu0 0
        %813 = vmatpush1.bf16.xpose.msra.mxu0 0
        %814 = vmatprep.mubr.bf16.mxu0 0
        %815 = vmatmul.mubr.bf16.gmra.mrb[0].mxu0 %v777
        %v816 = vpop.f32.mrb[0].mxu0
        %v817 = vadd.f32 0.0, %v816
        %v818 = vpop.f32.mrb[0].mxu0
        %v819 = vpop.f32.mrb[0].mxu0
        %v820 = vpop.f32.mrb[0].mxu0
        %821 = vdwg.mxu0
        %v822 = vmul.f32 %v817, 0.35355338
        %v823 = vsel %vm543, %v822, -1e+30
        %v824 = vsel %vm550, %v823, -inf
        %825 = vmax.xlane.f32.xlu0 %v824
        %v826 = vpop.xlane.xlu0 %825
        %v827 = vsub.f32 %v823, %v826
        %v828 = vmul.f32 %v827, 1.442695
        %v829 = vpow.pop %v828
        %v830 = vsel %vm550, %v829, 0.0
        %831 = vadd.xlane.f32.xlu0 %v830
        %v832 = vpop.xlane.xlu0 %831
        %v833 = vrcp.pop %v832
        %v834 = vmul.f32 %v829, %v833
        %v835 = vpack.c.bf16 %v834, %v834
        %836 = vrot.lane.b32.xlu0 %v547, 48
        %v837 = vpop.permute.xlu0 %836
        %v839 = vsel %vm550, %v835, 0
        %v842 = vsel %vm616, %v837, 0
        %844 = vmatprep.subr.bf16.mxu0 0
        %845 = vmatpush1.bf16.msra.mxu0 %v842
        %846 = vmatprep.subr.bf16.mxu0 0
        %847 = vmatpush1.bf16.msra.mxu0 0
        %848 = vmatprep.subr.bf16.mxu0 0
        %849 = vmatpush1.bf16.msra.mxu0 0
        %850 = vmatprep.subr.bf16.mxu0 0
        %851 = vmatpush1.bf16.msra.mxu0 0
        %852 = vmatprep.subr.bf16.mxu0 0
        %853 = vmatpush1.bf16.msra.mxu0 0
        %854 = vmatprep.subr.bf16.mxu0 0
        %855 = vmatpush1.bf16.msra.mxu0 0
        %856 = vmatprep.subr.bf16.mxu0 0
        %857 = vmatpush1.bf16.msra.mxu0 0
        %858 = vmatprep.subr.bf16.mxu0 0
        %859 = vmatpush1.bf16.msra.mxu0 0
        %860 = vmatprep.subr.bf16.mxu0 0
        %861 = vmatpush1.bf16.msra.mxu0 0
        %862 = vmatprep.subr.bf16.mxu0 0
        %863 = vmatpush1.bf16.msra.mxu0 0
        %864 = vmatprep.subr.bf16.mxu0 0
        %865 = vmatpush1.bf16.msra.mxu0 0
        %866 = vmatprep.subr.bf16.mxu0 0
        %867 = vmatpush1.bf16.msra.mxu0 0
        %868 = vmatprep.subr.bf16.mxu0 0
        %869 = vmatpush1.bf16.msra.mxu0 0
        %870 = vmatprep.subr.bf16.mxu0 0
        %871 = vmatpush1.bf16.msra.mxu0 0
        %872 = vmatprep.subr.bf16.mxu0 0
        %873 = vmatpush1.bf16.msra.mxu0 0
        %874 = vmatprep.subr.bf16.mxu0 0
        %875 = vmatpush1.bf16.msra.mxu0 0
        %876 = vmatprep.mubr.bf16.mxu0 0
        %877 = vmatmul.mubr.bf16.gmra.mrb[0].mxu0 %v839
        %v878 = vpop.f32.mrb[0].mxu0
        %v879 = vadd.f32 0.0, %v878
        %v880 = vpop.f32.mrb[0].mxu0
        %v881 = vpop.f32.mrb[0].mxu0
        %v882 = vpop.f32.mrb[0].mxu0
        %883 = vdwg.mxu0
        %884 = vrot.lane.b32.xlu0 %v547, 104
        %v885 = vpop.permute.xlu0 %884
        %886 = vrot.lane.b32.xlu0 %v547, 72
        %v887 = vpop.permute.xlu0 %886
        %v889 = vsel %vm550, %v885, 0
        %v892 = vsel %vm550, %v887, 0
        %894 = vmatprep.subr.bf16.mxu0 0
        %895 = vmatpush1.bf16.xpose.msra.mxu0 %v892
        %896 = vmatprep.subr.bf16.mxu0 0
        %897 = vmatpush1.bf16.xpose.msra.mxu0 0
        %898 = vmatprep.subr.bf16.mxu0 0
        %899 = vmatpush1.bf16.xpose.msra.mxu0 0
        %900 = vmatprep.subr.bf16.mxu0 0
        %901 = vmatpush1.bf16.xpose.msra.mxu0 0
        %902 = vmatprep.subr.bf16.mxu0 0
        %903 = vmatpush1.bf16.xpose.msra.mxu0 0
        %904 = vmatprep.subr.bf16.mxu0 0
        %905 = vmatpush1.bf16.xpose.msra.mxu0 0
        %906 = vmatprep.subr.bf16.mxu0 0
        %907 = vmatpush1.bf16.xpose.msra.mxu0 0
        %908 = vmatprep.subr.bf16.mxu0 0
        %909 = vmatpush1.bf16.xpose.msra.mxu0 0
        %910 = vmatprep.subr.bf16.mxu0 0
        %911 = vmatpush1.bf16.xpose.msra.mxu0 0
        %912 = vmatprep.subr.bf16.mxu0 0
        %913 = vmatpush1.bf16.xpose.msra.mxu0 0
        %914 = vmatprep.subr.bf16.mxu0 0
        %915 = vmatpush1.bf16.xpose.msra.mxu0 0
        %916 = vmatprep.subr.bf16.mxu0 0
        %917 = vmatpush1.bf16.xpose.msra.mxu0 0
        %918 = vmatprep.subr.bf16.mxu0 0
        %919 = vmatpush1.bf16.xpose.msra.mxu0 0
        %920 = vmatprep.subr.bf16.mxu0 0
        %921 = vmatpush1.bf16.xpose.msra.mxu0 0
        %922 = vmatprep.subr.bf16.mxu0 0
        %923 = vmatpush1.bf16.xpose.msra.mxu0 0
        %924 = vmatprep.subr.bf16.mxu0 0
        %925 = vmatpush1.bf16.xpose.msra.mxu0 0
        %926 = vmatprep.mubr.bf16.mxu0 0
        %927 = vmatmul.mubr.bf16.gmra.mrb[0].mxu0 %v889
        %v928 = vpop.f32.mrb[0].mxu0
        %v929 = vadd.f32 0.0, %v928
        %v930 = vpop.f32.mrb[0].mxu0
        %v931 = vpop.f32.mrb[0].mxu0
        %v932 = vpop.f32.mrb[0].mxu0
        %933 = vdwg.mxu0
        %v934 = vmul.f32 %v929, 0.35355338
        %v935 = vsel %vm543, %v934, -1e+30
        %v936 = vsel %vm550, %v935, -inf
        %937 = vmax.xlane.f32.xlu0 %v936
        %v938 = vpop.xlane.xlu0 %937
        %v939 = vsub.f32 %v935, %v938
        %v940 = vmul.f32 %v939, 1.442695
        %v941 = vpow.pop %v940
        %v942 = vsel %vm550, %v941, 0.0
        %943 = vadd.xlane.f32.xlu0 %v942
        %v944 = vpop.xlane.xlu0 %943
        %v945 = vrcp.pop %v944
        %v946 = vmul.f32 %v941, %v945
        %v947 = vpack.c.bf16 %v946, %v946
        %948 = vrot.lane.b32.xlu0 %v547, 40
        %v949 = vpop.permute.xlu0 %948
        %v951 = vsel %vm550, %v947, 0
        %v954 = vsel %vm616, %v949, 0
        %956 = vmatprep.subr.bf16.mxu0 0
        %957 = vmatpush1.bf16.msra.mxu0 %v954
        %958 = vmatprep.subr.bf16.mxu0 0
        %959 = vmatpush1.bf16.msra.mxu0 0
        %960 = vmatprep.subr.bf16.mxu0 0
        %961 = vmatpush1.bf16.msra.mxu0 0
        %962 = vmatprep.subr.bf16.mxu0 0
        %963 = vmatpush1.bf16.msra.mxu0 0
        %964 = vmatprep.subr.bf16.mxu0 0
        %965 = vmatpush1.bf16.msra.mxu0 0
        %966 = vmatprep.subr.bf16.mxu0 0
        %967 = vmatpush1.bf16.msra.mxu0 0
        %968 = vmatprep.subr.bf16.mxu0 0
        %969 = vmatpush1.bf16.msra.mxu0 0
        %970 = vmatprep.subr.bf16.mxu0 0
        %971 = vmatpush1.bf16.msra.mxu0 0
        %972 = vmatprep.subr.bf16.mxu0 0
        %973 = vmatpush1.bf16.msra.mxu0 0
        %974 = vmatprep.subr.bf16.mxu0 0
        %975 = vmatpush1.bf16.msra.mxu0 0
        %976 = vmatprep.subr.bf16.mxu0 0
        %977 = vmatpush1.bf16.msra.mxu0 0
        %978 = vmatprep.subr.bf16.mxu0 0
        %979 = vmatpush1.bf16.msra.mxu0 0
        %980 = vmatprep.subr.bf16.mxu0 0
        %981 = vmatpush1.bf16.msra.mxu0 0
        %982 = vmatprep.subr.bf16.mxu0 0
        %983 = vmatpush1.bf16.msra.mxu0 0
        %984 = vmatprep.subr.bf16.mxu0 0
        %985 = vmatpush1.bf16.msra.mxu0 0
        %986 = vmatprep.subr.bf16.mxu0 0
        %987 = vmatpush1.bf16.msra.mxu0 0
        %988 = vmatprep.mubr.bf16.mxu0 0
        %989 = vmatmul.mubr.bf16.gmra.mrb[0].mxu0 %v951
        %v990 = vpop.f32.mrb[0].mxu0
        %v991 = vadd.f32 0.0, %v990
        %v992 = vpop.f32.mrb[0].mxu0
        %v993 = vpop.f32.mrb[0].mxu0
        %v994 = vpop.f32.mrb[0].mxu0
        %995 = vdwg.mxu0
        %997 = vrot.lane.b32.xlu0 %v767, 8
        %v998 = vpop.permute.xlu0 %997
        %1001 = vrot.lane.b32.xlu0 %v879, 16
        %v1002 = vpop.permute.xlu0 %1001
        %1005 = vrot.lane.b32.xlu0 %v991, 24
        %v1006 = vpop.permute.xlu0 %1005
        %v1008 = vsel %vm550, %v655, %v998
        %vm1009 = vcmask 130048
        %v1010 = vsel %vm1009, %v1008, %v1002
        %vm1011 = vcmask 195584
        %v1012 = vsel %vm1011, %v1010, %v1006
        %v1013 = vpack.c.bf16 %v1012, %v1012
        %vm1014 = vcmask 257024
        %1015 = vst.msk [vmem:[#allocation3] sm:$0xf] %vm1014, %v1013
        %v1016 = vld [vmem:[#allocation3] sm:$0xf]
        %v1017 = vld [vmem:[%s5] sm:$0xf]
        %v1018 = vld [vmem:[%s5 + $0x4] sm:$0xf]
        %v1019 = vld [vmem:[%s5 + $0x8] sm:$0xf]
        %v1020 = vld [vmem:[%s5 + $0xc] sm:$0xf]
        %v1021 = vld [vmem:[%s6] sm:$0x1]
        %v1023 = vlaneseq
        %v1024 = vshrl.u32 %v1023, 7
        %v1025 = vsub.s32 0, %v1024
        %v1026 = vrot.slane %v1021, %v1025
        %v1032 = vunpack.c.l.b16 %v1017
        %v1033 = vunpack.c.l.b16 %v1018
        %v1034 = vunpack.c.l.b16 %v1019
        %v1035 = vunpack.c.l.b16 %v1020
        %v1036 = vpack.c.b16 %v1033, %v1032
        %v1037 = vpack.c.b16 %v1035, %v1034
        %v1041 = vsel %vm440, %v1016, 0
        %1043 = vmatprep.subr.bf16.mxu0 0
        %1044 = vmatpush1.bf16.msra.mxu0 %v1036
        %1045 = vmatprep.subr.bf16.mxu0 0
        %1046 = vmatpush1.bf16.msra.mxu0 %v1037
        %1047 = vmatprep.subr.bf16.mxu0 0
        %1048 = vmatpush1.bf16.msra.mxu0 0
        %1049 = vmatprep.subr.bf16.mxu0 0
        %1050 = vmatpush1.bf16.msra.mxu0 0
        %1051 = vmatprep.subr.bf16.mxu0 0
        %1052 = vmatpush1.bf16.msra.mxu0 0
        %1053 = vmatprep.subr.bf16.mxu0 0
        %1054 = vmatpush1.bf16.msra.mxu0 0
        %1055 = vmatprep.subr.bf16.mxu0 0
        %1056 = vmatpush1.bf16.msra.mxu0 0
        %1057 = vmatprep.subr.bf16.mxu0 0
        %1058 = vmatpush1.bf16.msra.mxu0 0
        %1059 = vmatprep.subr.bf16.mxu0 0
        %1060 = vmatpush1.bf16.msra.mxu0 0
        %1061 = vmatprep.subr.bf16.mxu0 0
        %1062 = vmatpush1.bf16.msra.mxu0 0
        %1063 = vmatprep.subr.bf16.mxu0 0
        %1064 = vmatpush1.bf16.msra.mxu0 0
        %1065 = vmatprep.subr.bf16.mxu0 0
        %1066 = vmatpush1.bf16.msra.mxu0 0
        %1067 = vmatprep.subr.bf16.mxu0 0
        %1068 = vmatpush1.bf16.msra.mxu0 0
        %1069 = vmatprep.subr.bf16.mxu0 0
        %1070 = vmatpush1.bf16.msra.mxu0 0
        %1071 = vmatprep.subr.bf16.mxu0 0
        %1072 = vmatpush1.bf16.msra.mxu0 0
        %1073 = vmatprep.subr.bf16.mxu0 0
        %1074 = vmatpush1.bf16.msra.mxu0 0
        %1075 = vmatprep.mubr.bf16.mxu0 0
        %1076 = vmatmul.mubr.bf16.gmra.mrb[0].mxu0 %v1041
        %v1077 = vpop.f32.mrb[0].mxu0
        %v1078 = vadd.f32 %v1026, %v1077
        %v1079 = vpop.f32.mrb[0].mxu0
        %v1080 = vpop.f32.mrb[0].mxu0
        %v1081 = vpop.f32.mrb[0].mxu0
        %1082 = vdwg.mxu0
        %v1083 = vadd.f32 %v437, %v1078
        %v1084 = vld [vmem:[%s7] sm:$0x1]
        %v1085 = vld [vmem:[%s8] sm:$0x1]
        %v1086 = vsel %vm440, %v1083, 0.0
        %1087 = vadd.xlane.f32.xlu0 %v1086
        %v1088 = vpop.xlane.xlu0 %1087
        %v1089 = vmul.f32 %v1088, %v444
        %v1090 = vsub.f32 %v1083, %v1089
        %v1091 = vmul.f32 %v1090, %v1090
        %v1092 = vsel %vm440, %v1091, 0.0
        %1093 = vadd.xlane.f32.xlu0 %v1092
        %v1094 = vpop.xlane.xlu0 %1093
        %v1095 = vmul.f32 %v1094, %v444
        %v1096 = vadd.f32 %v1095, 1e-05
        %v1097 = vrsqrt.pop %v1096
        %v1098 = vmul.f32 %v1090, %v1097
        %v1100 = vlaneseq
        %v1101 = vshrl.u32 %v1100, 7
        %v1102 = vsub.s32 0, %v1101
        %v1103 = vrot.slane %v1084, %v1102
        %v1105 = vmul.f32 %v1098, %v1103
        %v1107 = vlaneseq
        %v1108 = vshrl.u32 %v1107, 7
        %v1109 = vsub.s32 0, %v1108
        %v1110 = vrot.slane %v1085, %v1109
        %v1112 = vadd.f32 %v1105, %v1110
        %v1113 = vpack.c.bf16 %v1112, %v1112
        %v1114 = vld [vmem:[%s9] sm:$0xf]
        %v1115 = vld [vmem:[%s9 + $0x4] sm:$0xf]
        %v1116 = vld [vmem:[%s9 + $0x8] sm:$0xf]
        %v1117 = vld [vmem:[%s9 + $0xc] sm:$0xf]
        %v1118 = vld [vmem:[%s10] sm:$0x1]
        %v1120 = vlaneseq
        %v1121 = vshrl.u32 %v1120, 7
        %v1122 = vsub.s32 0, %v1121
        %v1123 = vrot.slane %v1118, %v1122
        %v1129 = vunpack.c.l.b16 %v1114
        %v1130 = vunpack.c.l.b16 %v1115
        %v1131 = vunpack.c.l.b16 %v1116
        %v1132 = vunpack.c.l.b16 %v1117
        %v1133 = vpack.c.b16 %v1130, %v1129
        %v1134 = vpack.c.b16 %v1132, %v1131
        %v1138 = vsel %vm440, %v1113, 0
        %1140 = vmatprep.subr.bf16.mxu0 0
        %1141 = vmatpush1.bf16.msra.mxu0 %v1133
        %1142 = vmatprep.subr.bf16.mxu0 0
        %1143 = vmatpush1.bf16.msra.mxu0 %v1134
        %1144 = vmatprep.subr.bf16.mxu0 0
        %1145 = vmatpush1.bf16.msra.mxu0 0
        %1146 = vmatprep.subr.bf16.mxu0 0
        %1147 = vmatpush1.bf16.msra.mxu0 0
        %1148 = vmatprep.subr.bf16.mxu0 0
        %1149 = vmatpush1.bf16.msra.mxu0 0
        %1150 = vmatprep.subr.bf16.mxu0 0
        %1151 = vmatpush1.bf16.msra.mxu0 0
        %1152 = vmatprep.subr.bf16.mxu0 0
        %1153 = vmatpush1.bf16.msra.mxu0 0
        %1154 = vmatprep.subr.bf16.mxu0 0
        %1155 = vmatpush1.bf16.msra.mxu0 0
        %1156 = vmatprep.subr.bf16.mxu0 0
        %1157 = vmatpush1.bf16.msra.mxu0 0
        %1158 = vmatprep.subr.bf16.mxu0 0
        %1159 = vmatpush1.bf16.msra.mxu0 0
        %1160 = vmatprep.subr.bf16.mxu0 0
        %1161 = vmatpush1.bf16.msra.mxu0 0
        %1162 = vmatprep.subr.bf16.mxu0 0
        %1163 = vmatpush1.bf16.msra.mxu0 0
        %1164 = vmatprep.subr.bf16.mxu0 0
        %1165 = vmatpush1.bf16.msra.mxu0 0
        %1166 = vmatprep.subr.bf16.mxu0 0
        %1167 = vmatpush1.bf16.msra.mxu0 0
        %1168 = vmatprep.subr.bf16.mxu0 0
        %1169 = vmatpush1.bf16.msra.mxu0 0
        %1170 = vmatprep.subr.bf16.mxu0 0
        %1171 = vmatpush1.bf16.msra.mxu0 0
        %1172 = vmatprep.mubr.bf16.mxu0 0
        %1173 = vmatmul.mubr.bf16.gmra.mrb[0].mxu0 %v1138
        %v1174 = vpop.f32.mrb[0].mxu0
        %v1175 = vadd.f32 %v1123, %v1174
        %v1176 = vpop.f32.mrb[0].mxu0
        %v1177 = vpop.f32.mrb[0].mxu0
        %v1178 = vpop.f32.mrb[0].mxu0
        %1179 = vdwg.mxu0
        %v1180 = vmul.f32 %v1175, 0.5
        %v1181 = vmul.f32 %v1175, %v1175
        %v1182 = vmul.f32 %v1175, %v1181
        %v1183 = vmul.f32 %v1182, 0.044715
        %v1184 = vadd.f32 %v1175, %v1183
        %v1185 = vmul.f32 %v1184, 0.7978846
        %v1186 = vtanh.pop %v1185
        %v1187 = vadd.f32 %v1186, 1.0
        %v1188 = vmul.f32 %v1180, %v1187
        %v1189 = vpack.c.bf16 %v1188, %v1188
        %v1190 = vld [vmem:[%s11] sm:$0xf]
        %v1191 = vld [vmem:[%s11 + $0x4] sm:$0xf]
        %v1192 = vld [vmem:[%s11 + $0x8] sm:$0xf]
        %v1193 = vld [vmem:[%s11 + $0xc] sm:$0xf]
        %v1194 = vld [vmem:[%s11 + $0x10] sm:$0xf]
        %v1195 = vld [vmem:[%s11 + $0x14] sm:$0xf]
        %v1196 = vld [vmem:[%s11 + $0x18] sm:$0xf]
        %v1197 = vld [vmem:[%s11 + $0x1c] sm:$0xf]
        %v1198 = vld [vmem:[%s11 + $0x20] sm:$0xf]
        %v1199 = vld [vmem:[%s11 + $0x24] sm:$0xf]
        %v1200 = vld [vmem:[%s11 + $0x28] sm:$0xf]
        %v1201 = vld [vmem:[%s11 + $0x2c] sm:$0xf]
        %v1202 = vld [vmem:[%s11 + $0x30] sm:$0xf]
        %v1203 = vld [vmem:[%s11 + $0x34] sm:$0xf]
        %v1204 = vld [vmem:[%s11 + $0x38] sm:$0xf]
        %v1205 = vld [vmem:[%s11 + $0x3c] sm:$0xf]
        %v1222 = vunpack.c.l.b16 %v1190
        %v1223 = vunpack.c.l.b16 %v1191
        %v1224 = vunpack.c.l.b16 %v1192
        %v1225 = vunpack.c.l.b16 %v1193
        %v1226 = vunpack.c.l.b16 %v1194
        %v1227 = vunpack.c.l.b16 %v1195
        %v1228 = vunpack.c.l.b16 %v1196
        %v1229 = vunpack.c.l.b16 %v1197
        %v1230 = vunpack.c.l.b16 %v1198
        %v1231 = vunpack.c.l.b16 %v1199
        %v1232 = vunpack.c.l.b16 %v1200
        %v1233 = vunpack.c.l.b16 %v1201
        %v1234 = vunpack.c.l.b16 %v1202
        %v1235 = vunpack.c.l.b16 %v1203
        %v1236 = vunpack.c.l.b16 %v1204
        %v1237 = vunpack.c.l.b16 %v1205
        %v1238 = vpack.c.b16 %v1223, %v1222
        %v1239 = vpack.c.b16 %v1225, %v1224
        %v1240 = vpack.c.b16 %v1227, %v1226
        %v1241 = vpack.c.b16 %v1229, %v1228
        %v1242 = vpack.c.b16 %v1231, %v1230
        %v1243 = vpack.c.b16 %v1233, %v1232
        %v1244 = vpack.c.b16 %v1235, %v1234
        %v1245 = vpack.c.b16 %v1237, %v1236
        %1254 = vmatprep.subr.bf16.mxu0 0
        %1255 = vmatpush1.bf16.msra.mxu0 %v1238
        %1256 = vmatprep.subr.bf16.mxu0 0
        %1257 = vmatpush1.bf16.msra.mxu0 %v1239
        %1258 = vmatprep.subr.bf16.mxu0 0
        %1259 = vmatpush1.bf16.msra.mxu0 %v1240
        %1260 = vmatprep.subr.bf16.mxu0 0
        %1261 = vmatpush1.bf16.msra.mxu0 %v1241
        %1262 = vmatprep.subr.bf16.mxu0 0
        %1263 = vmatpush1.bf16.msra.mxu0 %v1242
        %1264 = vmatprep.subr.bf16.mxu0 0
        %1265 = vmatpush1.bf16.msra.mxu0 %v1243
        %1266 = vmatprep.subr.bf16.mxu0 0
        %1267 = vmatpush1.bf16.msra.mxu0 %v1244
        %1268 = vmatprep.subr.bf16.mxu0 0
        %1269 = vmatpush1.bf16.msra.mxu0 %v1245
        %1270 = vmatprep.subr.bf16.mxu0 0
        %1271 = vmatpush1.bf16.msra.mxu0 0
        %1272 = vmatprep.subr.bf16.mxu0 0
        %1273 = vmatpush1.bf16.msra.mxu0 0
        %1274 = vmatprep.subr.bf16.mxu0 0
        %1275 = vmatpush1.bf16.msra.mxu0 0
        %1276 = vmatprep.subr.bf16.mxu0 0
        %1277 = vmatpush1.bf16.msra.mxu0 0
        %1278 = vmatprep.subr.bf16.mxu0 0
        %1279 = vmatpush1.bf16.msra.mxu0 0
        %1280 = vmatprep.subr.bf16.mxu0 0
        %1281 = vmatpush1.bf16.msra.mxu0 0
        %1282 = vmatprep.subr.bf16.mxu0 0
        %1283 = vmatpush1.bf16.msra.mxu0 0
        %1284 = vmatprep.subr.bf16.mxu0 0
        %1285 = vmatpush1.bf16.msra.mxu0 0
        %1286 = vmatprep.mubr.bf16.mxu0 0
        %1287 = vmatmul.mubr.bf16.gmra.mrb[0].mxu0 %v1189
        %v1288 = vpop.f32.mrb[0].mxu0
        %v1289 = vadd.f32 0.0, %v1288
        %v1290 = vpop.f32.mrb[0].mxu0
        %v1291 = vpop.f32.mrb[0].mxu0
        %v1292 = vpop.f32.mrb[0].mxu0
        %1293 = vdwg.mxu0
        %v1294 = vadd.f32 %v1083, %v1289
        %v1295 = vld [vmem:[%s12] sm:$0x1]
        %v1297 = vlaneseq
        %v1298 = vshrl.u32 %v1297, 7
        %v1299 = vsub.s32 0, %v1298
        %v1300 = vrot.slane %v1295, %v1299
        %v1302 = vadd.f32 %v1294, %v1300
        %1303 = vst.msk [vmem:[%s431] sm:$0xff] %vm440, %v1302
        %s1304 = sand.u32 %s313, 1
        %s1305 = scalar_lea.sflag [#allocation5], %s1304
        %s1306 = sand.u32 %s313, 1
        %s1307 = smul.addr %s1306, 8
        %s1308 = scalar_lea.vmem [#allocation4], %s1307
        // Predicated region
        $region73: #{tpu_custom_call.1} parent=71 // pred_check
          %p1309 = pneg %p323
        $region74: #{tpu_custom_call.1} parent=71 // pred_check_branch
          %1311 = sbr.rel (%p1309) target = $region76
        $region75: #{tpu_custom_call.1} parent=71 // pred_region
          %s1313 = ssub.s32 128, 128
          %1314 = vsyncadd %s1305, %s1313
          %s1315 = smul.addr %s27, 128
          %s1316 = scalar_lea.hbm %s13, %s1315
          %s1318 = sshll.u32 %s1308, 4
          %s1319 = int_to_ptr.vmem [resolvable:$true] %s1318
          %1321 = dma.vmem_to_hbm [thread:$0]  %s1319, 128, %s1316, %s1305
        $region76: #{tpu_custom_call.1} parent=71 // pred_fallthru
          _
      $region72: #{tpu_custom_call.1} parent=5 // pred_fallthru
        _
      %p1322 = scmp.le.s32.totalorder 2, %s22
      // Predicated region
      $region77: #{tpu_custom_call.1} parent=5 // pred_check
        %p1323 = pneg %p1322
      $region78: #{tpu_custom_call.1} parent=5 // pred_check_branch
        %1325 = sbr.rel (%p1323) target = $region80
      $region79: #{tpu_custom_call.1} parent=5 // pred_region
        %s1326 = ssub.s32 %s22, 2
        // Predicated region
        $region81: #{tpu_custom_call.1} parent=79 // pred_check
          %p1327 = pneg %p329
        $region82: #{tpu_custom_call.1} parent=79 // pred_check_branch
          %1329 = sbr.rel (%p1327) target = $region84
        $region83: #{tpu_custom_call.1} parent=79 // pred_region
          %s1330 = sand.u32 %s314, 1
          %s1331 = scalar_lea.sflag [#allocation5], %s1330
          %s1332 = sand.u32 %s314, 1
          %s1333 = smul.addr %s1332, 8
          %s1334 = scalar_lea.vmem [#allocation4], %s1333
          %1335 = dma.done %s1331, 128
        $region84: #{tpu_custom_call.1} parent=79 // pred_fallthru
          _
      $region80: #{tpu_custom_call.1} parent=5 // pred_fallthru
        _
    $region6: #{tpu_custom_call.1} parent=1 // loop_footer
      %s26 = sadd.s32 1, %s22
    $region7: #{tpu_custom_call.1} parent=1 // loop_footer_branch
      %21 = sbr.rel target = $region3
    $region8: #{tpu_custom_call.1} parent=1 // loop_exit
      _
    %1336 = vsyncpa [#allocation5], 1
    %s1337 = scalar_lea.sflag [#allocation5], 1
    %1338 = vsyncpa %s1337, 1

// kernel: tpu_custom_call.1
$region0: #{tpu_custom_call.1}
  #allocation0 [shape = 'u32[]', space=smem, size = 0x4, offset = 0x4, fixed_abs, tag = 'smem constant byte address 0x4 - core index']
  #allocation1 [shape = 'u32[144,128]{1,0:T(1,128)}', space=vmem, size = 0x12000, scoped, tag = 'internal scratch']
  #allocation2 [shape = 'bf16[8,96]{1,0:T(8,128)(2,1)}', space=vmem, size = 0x800, scoped, tag = 'scratch operand']
  #allocation3 [shape = 'bf16[8,32]{1,0:T(8,128)(2,1)}', space=vmem, size = 0x800, scoped, tag = 'scratch operand']
  %s0 = inlined_call_operand.vmem [shape: f32[2,8,32], index: 0, kind: input, shape index: {}]
  %s1 = inlined_call_operand.vmem [shape: f32[1,32], index: 1, kind: input, shape index: {}]
  %s2 = inlined_call_operand.vmem [shape: f32[1,32], index: 2, kind: input, shape index: {}]
  %s3 = inlined_call_operand.vmem [shape: bf16[32,96], index: 3, kind: input, shape index: {}]
  %s4 = inlined_call_operand.vmem [shape: f32[1,96], index: 4, kind: input, shape index: {}]
  %s5 = inlined_call_operand.vmem [shape: bf16[32,32], index: 5, kind: input, shape index: {}]
  %s6 = inlined_call_operand.vmem [shape: f32[1,32], index: 6, kind: input, shape index: {}]
  %s7 = inlined_call_operand.vmem [shape: f32[1,32], index: 7, kind: input, shape index: {}]
  %s8 = inlined_call_operand.vmem [shape: f32[1,32], index: 8, kind: input, shape index: {}]
  %s9 = inlined_call_operand.vmem [shape: bf16[32,128], index: 9, kind: input, shape index: {}]
  %s10 = inlined_call_operand.vmem [shape: f32[1,128], index: 10, kind: input, shape index: {}]
  %s11 = inlined_call_operand.vmem [shape: bf16[128,32], index: 11, kind: input, shape index: {}]
  %s12 = inlined_call_operand.vmem [shape: f32[1,32], index: 12, kind: input, shape index: {}]
  %s13 = inlined_call_operand.hbm [shape: f32[2,8,32], index: 13, kind: output, shape index: {}]
  %s14 = sld [smem:[#allocation0]]
  $region85: #{tpu_custom_call.1} parent=0
    _
  %s16 = ssub.s32 1, %s14
  %s17 = scalar_select 0, %s16, %s14
  $region1: #{tpu_custom_call.1} parent=0
    #allocation4 [shape = 'u8[8192]{0}', space=vmem, size = 0x2000, scoped, tag = 'output window, operand 0']
    #allocation5 [shape = 's32[2]{0}', space=sflag, size = 0x8, scoped, tag = 'scoped memory for tpu_custom_call.1']
    %18 = vsyncpa [#allocation5], 0
    %s19 = scalar_lea.sflag [#allocation5], 1
    %20 = vsyncpa %s19, 0
    loop: start=0, step=1, limit=4
    $region2: #{tpu_custom_call.1} parent=1 // loop_pre_header
      _
    $region3: #{tpu_custom_call.1} parent=1 // loop_header
      %s22 = sphi 0, %s26
      %p23 = scmp.ge.s32.totalorder %s22, 4
      %s32 = sphi 0, %s34
      %s35 = sphi 0, %s32
      %s36 = sphi 0, %s35
      %s52 = sphi 0, %s36
      %s56 = sphi 0, %s56
      %s58 = sphi 0, %s56
      %s59 = sphi 0, %s58
      %s73 = sphi 0, %s59
      %s77 = sphi 0, %s77
      %s79 = sphi 0, %s77
      %s80 = sphi 0, %s79
      %s94 = sphi 0, %s80
      %s98 = sphi 0, %s98
      %s100 = sphi 0, %s98
      %s101 = sphi 0, %s100
      %s115 = sphi 0, %s101
      %s119 = sphi 0, %s119
      %s121 = sphi 0, %s119
      %s122 = sphi 0, %s121
      %s136 = sphi 0, %s122
      %s140 = sphi 0, %s140
      %s142 = sphi 0, %s140
      %s143 = sphi 0, %s142
      %s157 = sphi 0, %s143
      %s161 = sphi 0, %s161
      %s163 = sphi 0, %s161
      %s164 = sphi 0, %s163
      %s178 = sphi 0, %s164
      %s182 = sphi 0, %s182
      %s184 = sphi 0, %s182
      %s185 = sphi 0, %s184
      %s199 = sphi 0, %s185
      %s203 = sphi 0, %s203
      %s205 = sphi 0, %s203
      %s206 = sphi 0, %s205
      %s220 = sphi 0, %s206
      %s224 = sphi 0, %s224
      %s226 = sphi 0, %s224
      %s227 = sphi 0, %s226
      %s241 = sphi 0, %s227
      %s245 = sphi 0, %s245
      %s247 = sphi 0, %s245
      %s248 = sphi 0, %s247
      %s262 = sphi 0, %s248
      %s266 = sphi 0, %s266
      %s268 = sphi 0, %s266
      %s269 = sphi 0, %s268
      %s283 = sphi 0, %s269
      %s287 = sphi 0, %s287
      %s289 = sphi 0, %s287
      %s290 = sphi 0, %s289
      %s304 = sphi 0, %s290
      %s310 = sphi 0, %s312
      %s313 = sphi 0, %s310
      %s314 = sphi 0, %s313
      %s330 = sphi 0, %s314
    $region4: #{tpu_custom_call.1} parent=1 // loop_header_branch
      %25 = sbr.rel (%p23) target = $region8
    $region5: #{tpu_custom_call.1} parent=1 // loop_body
      %s27 = ssub.s32 %s22, 1
      %s28 = ssub.s32 %s22, 2
      %s29 = sadd.s32 %s22, 1
      %s30 = ssub.s32 %s22, %s29
      %p31 = scmp.eq.s32.totalorder %s30, 0
      %s33 = sadd.s32 %s32, 1
      %s34 = scalar_select %p31, %s32, %s33
      %p37 = pneg %p31
      %p38 = scmp.eq.s32.totalorder %s22, 1
      %p39 = por %p37, %p38
      %p40 = scmp.ne.s32.totalorder %s32, %s35
      %p41 = scmp.eq.s32.totalorder %s22, 0
      %p42 = por %p40, %p41
      %p43 = scmp.ne.s32.totalorder %s32, %s35
      %p44 = scmp.eq.s32.totalorder %s27, 1
      %p45 = por %p43, %p44
      %p46 = scmp.ne.s32.totalorder %s35, %s36
      %p47 = scmp.eq.s32.totalorder %s27, 0
      %p48 = por %p46, %p47
      %p49 = scmp.ne.s32.totalorder %s35, %s36
      %p50 = scmp.eq.s32.totalorder %s28, 1
      %p51 = por %p49, %p50
      %p53 = scmp.ne.s32.totalorder %s36, %s52
      %p54 = scmp.eq.s32.totalorder %s28, 0
      %p55 = por %p53, %p54
      %s57 = sadd.s32 %s56, 1
      %p60 = scmp.eq.s32.totalorder %s22, 1
      %p61 = scmp.ne.s32.totalorder %s56, %s58
      %p62 = scmp.eq.s32.totalorder %s22, 0
      %p63 = por %p61, %p62
      %p64 = scmp.ne.s32.totalorder %s56, %s58
      %p65 = scmp.eq.s32.totalorder %s27, 1
      %p66 = por %p64, %p65
      %p67 = scmp.ne.s32.totalorder %s58, %s59
      %p68 = scmp.eq.s32.totalorder %s27, 0
      %p69 = por %p67, %p68
      %p70 = scmp.ne.s32.totalorder %s58, %s59
      %p71 = scmp.eq.s32.totalorder %s28, 1
      %p72 = por %p70, %p71
      %p74 = scmp.ne.s32.totalorder %s59, %s73
      %p75 = scmp.eq.s32.totalorder %s28, 0
      %p76 = por %p74, %p75
      %s78 = sadd.s32 %s77, 1
      %p81 = scmp.eq.s32.totalorder %s22, 1
      %p82 = scmp.ne.s32.totalorder %s77, %s79
      %p83 = scmp.eq.s32.totalorder %s22, 0
      %p84 = por %p82, %p83
      %p85 = scmp.ne.s32.totalorder %s77, %s79
      %p86 = scmp.eq.s32.totalorder %s27, 1
      %p87 = por %p85, %p86
      %p88 = scmp.ne.s32.totalorder %s79, %s80
      %p89 = scmp.eq.s32.totalorder %s27, 0
      %p90 = por %p88, %p89
      %p91 = scmp.ne.s32.totalorder %s79, %s80
      %p92 = scmp.eq.s32.totalorder %s28, 1
      %p93 = por %p91, %p92
      %p95 = scmp.ne.s32.totalorder %s80, %s94
      %p96 = scmp.eq.s32.totalorder %s28, 0
      %p97 = por %p95, %p96
      %s99 = sadd.s32 %s98, 1
      %p102 = scmp.eq.s32.totalorder %s22, 1
      %p103 = scmp.ne.s32.totalorder %s98, %s100
      %p104 = scmp.eq.s32.totalorder %s22, 0
      %p105 = por %p103, %p104
      %p106 = scmp.ne.s32.totalorder %s98, %s100
      %p107 = scmp.eq.s32.totalorder %s27, 1
      %p108 = por %p106, %p107
      %p109 = scmp.ne.s32.totalorder %s100, %s101
      %p110 = scmp.eq.s32.totalorder %s27, 0
      %p111 = por %p109, %p110
      %p112 = scmp.ne.s32.totalorder %s100, %s101
      %p113 = scmp.eq.s32.totalorder %s28, 1
      %p114 = por %p112, %p113
      %p116 = scmp.ne.s32.totalorder %s101, %s115
      %p117 = scmp.eq.s32.totalorder %s28, 0
      %p118 = por %p116, %p117
      %s120 = sadd.s32 %s119, 1
      %p123 = scmp.eq.s32.totalorder %s22, 1
      %p124 = scmp.ne.s32.totalorder %s119, %s121
      %p125 = scmp.eq.s32.totalorder %s22, 0
      %p126 = por %p124, %p125
      %p127 = scmp.ne.s32.totalorder %s119, %s121
      %p128 = scmp.eq.s32.totalorder %s27, 1
      %p129 = por %p127, %p128
      %p130 = scmp.ne.s32.totalorder %s121, %s122
      %p131 = scmp.eq.s32.totalorder %s27, 0
      %p132 = por %p130, %p131
      %p133 = scmp.ne.s32.totalorder %s121, %s122
      %p134 = scmp.eq.s32.totalorder %s28, 1
      %p135 = por %p133, %p134
      %p137 = scmp.ne.s32.totalorder %s122, %s136
      %p138 = scmp.eq.s32.totalorder %s28, 0
      %p139 = por %p137, %p138
      %s141 = sadd.s32 %s140, 1
      %p144 = scmp.eq.s32.totalorder %s22, 1
      %p145 = scmp.ne.s32.totalorder %s140, %s142
      %p146 = scmp.eq.s32.totalorder %s22, 0
      %p147 = por %p145, %p146
      %p148 = scmp.ne.s32.totalorder %s140, %s142
      %p149 = scmp.eq.s32.totalorder %s27, 1
      %p150 = por %p148, %p149
      %p151 = scmp.ne.s32.totalorder %s142, %s143
      %p152 = scmp.eq.s32.totalorder %s27, 0
      %p153 = por %p151, %p152
      %p154 = scmp.ne.s32.totalorder %s142, %s143
      %p155 = scmp.eq.s32.totalorder %s28, 1
      %p156 = por %p154, %p155
      %p158 = scmp.ne.s32.totalorder %s143, %s157
      %p159 = scmp.eq.s32.totalorder %s28, 0
      %p160 = por %p158, %p159
      %s162 = sadd.s32 %s161, 1
      %p165 = scmp.eq.s32.totalorder %s22, 1
      %p166 = scmp.ne.s32.totalorder %s161, %s163
      %p167 = scmp.eq.s32.totalorder %s22, 0
      %p168 = por %p166, %p167
      %p169 = scmp.ne.s32.totalorder %s161, %s163
      %p170 = scmp.eq.s32.totalorder %s27, 1
      %p171 = por %p169, %p170
      %p172 = scmp.ne.s32.totalorder %s163, %s164
      %p173 = scmp.eq.s32.totalorder %s27, 0
      %p174 = por %p172, %p173
      %p175 = scmp.ne.s32.totalorder %s163, %s164
      %p176 = scmp.eq.s32.totalorder %s28, 1
      %p177 = por %p175, %p176
      %p179 = scmp.ne.s32.totalorder %s164, %s178
      %p180 = scmp.eq.s32.totalorder %s28, 0
      %p181 = por %p179, %p180
      %s183 = sadd.s32 %s182, 1
      %p186 = scmp.eq.s32.totalorder %s22, 1
      %p187 = scmp.ne.s32.totalorder %s182, %s184
      %p188 = scmp.eq.s32.totalorder %s22, 0
      %p189 = por %p187, %p188
      %p190 = scmp.ne.s32.totalorder %s182, %s184
      %p191 = scmp.eq.s32.totalorder %s27, 1
      %p192 = por %p190, %p191
      %p193 = scmp.ne.s32.totalorder %s184, %s185
      %p194 = scmp.eq.s32.totalorder %s27, 0
      %p195 = por %p193, %p194
      %p196 = scmp.ne.s32.totalorder %s184, %s185
      %p197 = scmp.eq.s32.totalorder %s28, 1
      %p198 = por %p196, %p197
      %p200 = scmp.ne.s32.totalorder %s185, %s199
      %p201 = scmp.eq.s32.totalorder %s28, 0
      %p202 = por %p200, %p201
      %s204 = sadd.s32 %s203, 1
      %p207 = scmp.eq.s32.totalorder %s22, 1
      %p208 = scmp.ne.s32.totalorder %s203, %s205
      %p209 = scmp.eq.s32.totalorder %s22, 0
      %p210 = por %p208, %p209
      %p211 = scmp.ne.s32.totalorder %s203, %s205
      %p212 = scmp.eq.s32.totalorder %s27, 1
      %p213 = por %p211, %p212
      %p214 = scmp.ne.s32.totalorder %s205, %s206
      %p215 = scmp.eq.s32.totalorder %s27, 0
      %p216 = por %p214, %p215
      %p217 = scmp.ne.s32.totalorder %s205, %s206
      %p218 = scmp.eq.s32.totalorder %s28, 1
      %p219 = por %p217, %p218
      %p221 = scmp.ne.s32.totalorder %s206, %s220
      %p222 = scmp.eq.s32.totalorder %s28, 0
      %p223 = por %p221, %p222
      %s225 = sadd.s32 %s224, 1
      %p228 = scmp.eq.s32.totalorder %s22, 1
      %p229 = scmp.ne.s32.totalorder %s224, %s226
      %p230 = scmp.eq.s32.totalorder %s22, 0
      %p231 = por %p229, %p230
      %p232 = scmp.ne.s32.totalorder %s224, %s226
      %p233 = scmp.eq.s32.totalorder %s27, 1
      %p234 = por %p232, %p233
      %p235 = scmp.ne.s32.totalorder %s226, %s227
      %p236 = scmp.eq.s32.totalorder %s27, 0
      %p237 = por %p235, %p236
      %p238 = scmp.ne.s32.totalorder %s226, %s227
      %p239 = scmp.eq.s32.totalorder %s28, 1
      %p240 = por %p238, %p239
      %p242 = scmp.ne.s32.totalorder %s227, %s241
      %p243 = scmp.eq.s32.totalorder %s28, 0
      %p244 = por %p242, %p243
      %s246 = sadd.s32 %s245, 1
      %p249 = scmp.eq.s32.totalorder %s22, 1
      %p250 = scmp.ne.s32.totalorder %s245, %s247
      %p251 = scmp.eq.s32.totalorder %s22, 0
      %p252 = por %p250, %p251
      %p253 = scmp.ne.s32.totalorder %s245, %s247
      %p254 = scmp.eq.s32.totalorder %s27, 1
      %p255 = por %p253, %p254
      %p256 = scmp.ne.s32.totalorder %s247, %s248
      %p257 = scmp.eq.s32.totalorder %s27, 0
      %p258 = por %p256, %p257
      %p259 = scmp.ne.s32.totalorder %s247, %s248
      %p260 = scmp.eq.s32.totalorder %s28, 1
      %p261 = por %p259, %p260
      %p263 = scmp.ne.s32.totalorder %s248, %s262
      %p264 = scmp.eq.s32.totalorder %s28, 0
      %p265 = por %p263, %p264
      %s267 = sadd.s32 %s266, 1
      %p270 = scmp.eq.s32.totalorder %s22, 1
      %p271 = scmp.ne.s32.totalorder %s266, %s268
      %p272 = scmp.eq.s32.totalorder %s22, 0
      %p273 = por %p271, %p272
      %p274 = scmp.ne.s32.totalorder %s266, %s268
      %p275 = scmp.eq.s32.totalorder %s27, 1
      %p276 = por %p274, %p275
      %p277 = scmp.ne.s32.totalorder %s268, %s269
      %p278 = scmp.eq.s32.totalorder %s27, 0
      %p279 = por %p277, %p278
      %p280 = scmp.ne.s32.totalorder %s268, %s269
      %p281 = scmp.eq.s32.totalorder %s28, 1
      %p282 = por %p280, %p281
      %p284 = scmp.ne.s32.totalorder %s269, %s283
      %p285 = scmp.eq.s32.totalorder %s28, 0
      %p286 = por %p284, %p285
      %s288 = sadd.s32 %s287, 1
      %p291 = scmp.eq.s32.totalorder %s22, 1
      %p292 = scmp.ne.s32.totalorder %s287, %s289
      %p293 = scmp.eq.s32.totalorder %s22, 0
      %p294 = por %p292, %p293
      %p295 = scmp.ne.s32.totalorder %s287, %s289
      %p296 = scmp.eq.s32.totalorder %s27, 1
      %p297 = por %p295, %p296
      %p298 = scmp.ne.s32.totalorder %s289, %s290
      %p299 = scmp.eq.s32.totalorder %s27, 0
      %p300 = por %p298, %p299
      %p301 = scmp.ne.s32.totalorder %s289, %s290
      %p302 = scmp.eq.s32.totalorder %s28, 1
      %p303 = por %p301, %p302
      %p305 = scmp.ne.s32.totalorder %s290, %s304
      %p306 = scmp.eq.s32.totalorder %s28, 0
      %p307 = por %p305, %p306
      %s308 = ssub.s32 %s22, %s29
      %p309 = scmp.eq.s32.totalorder %s308, 0
      %s311 = sadd.s32 %s310, 1
      %s312 = scalar_select %p309, %s310, %s311
      %p315 = pneg %p309
      %p316 = scmp.eq.s32.totalorder %s22, 1
      %p317 = por %p315, %p316
      %p318 = scmp.ne.s32.totalorder %s310, %s313
      %p319 = scmp.eq.s32.totalorder %s22, 0
      %p320 = por %p318, %p319
      %p321 = scmp.ne.s32.totalorder %s310, %s313
      %p322 = scmp.eq.s32.totalorder %s27, 1
      %p323 = por %p321, %p322
      %p324 = scmp.ne.s32.totalorder %s313, %s314
      %p325 = scmp.eq.s32.totalorder %s27, 0
      %p326 = por %p324, %p325
      %p327 = scmp.ne.s32.totalorder %s313, %s314
      %p328 = scmp.eq.s32.totalorder %s28, 1
      %p329 = por %p327, %p328
      %p331 = scmp.ne.s32.totalorder %s314, %s330
      %p332 = scmp.eq.s32.totalorder %s28, 0
      %p333 = por %p331, %p332
      %p334 = scmp.le.s32.totalorder 1, %s22
      %p335 = scmp.lt.s32.totalorder %s22, 3
      %p336 = pnand %p334, %p335
      %p337 = pneg %p336
      // Predicated region
      $region9: #{tpu_custom_call.1} parent=5 // pred_check
        _
      $region10: #{tpu_custom_call.1} parent=5 // pred_check_branch
        %339 = sbr.rel (%p336) target = $region12
      $region11: #{tpu_custom_call.1} parent=5 // pred_region
        %s340 = ssub.s32 %s22, 1
        // Predicated region
        $region13: #{tpu_custom_call.1} parent=11 // pred_check
          %p341 = pneg %p69
        $region14: #{tpu_custom_call.1} parent=11 // pred_check_branch
          %343 = sbr.rel (%p341) target = $region16
        $region15: #{tpu_custom_call.1} parent=11 // pred_region
          _
        $region16: #{tpu_custom_call.1} parent=11 // pred_fallthru
          _
        // Predicated region
        $region17: #{tpu_custom_call.1} parent=11 // pred_check
          %p344 = pneg %p90
        $region18: #{tpu_custom_call.1} parent=11 // pred_check_branch
          %346 = sbr.rel (%p344) target = $region20
        $region19: #{tpu_custom_call.1} parent=11 // pred_region
          _
        $region20: #{tpu_custom_call.1} parent=11 // pred_fallthru
          _
        // Predicated region
        $region21: #{tpu_custom_call.1} parent=11 // pred_check
          %p347 = pneg %p111
        $region22: #{tpu_custom_call.1} parent=11 // pred_check_branch
          %349 = sbr.rel (%p347) target = $region24
        $region23: #{tpu_custom_call.1} parent=11 // pred_region
          _
        $region24: #{tpu_custom_call.1} parent=11 // pred_fallthru
          _
        // Predicated region
        $region25: #{tpu_custom_call.1} parent=11 // pred_check
          %p350 = pneg %p132
        $region26: #{tpu_custom_call.1} parent=11 // pred_check_branch
          %352 = sbr.rel (%p350) target = $region28
        $region27: #{tpu_custom_call.1} parent=11 // pred_region
          _
        $region28: #{tpu_custom_call.1} parent=11 // pred_fallthru
          _
        // Predicated region
        $region29: #{tpu_custom_call.1} parent=11 // pred_check
          %p353 = pneg %p153
        $region30: #{tpu_custom_call.1} parent=11 // pred_check_branch
          %355 = sbr.rel (%p353) target = $region32
        $region31: #{tpu_custom_call.1} parent=11 // pred_region
          _
        $region32: #{tpu_custom_call.1} parent=11 // pred_fallthru
          _
        // Predicated region
        $region33: #{tpu_custom_call.1} parent=11 // pred_check
          %p356 = pneg %p174
        $region34: #{tpu_custom_call.1} parent=11 // pred_check_branch
          %358 = sbr.rel (%p356) target = $region36
        $region35: #{tpu_custom_call.1} parent=11 // pred_region
          _
        $region36: #{tpu_custom_call.1} parent=11 // pred_fallthru
          _
        // Predicated region
        $region37: #{tpu_custom_call.1} parent=11 // pred_check
          %p359 = pneg %p195
        $region38: #{tpu_custom_call.1} parent=11 // pred_check_branch
          %361 = sbr.rel (%p359) target = $region40
        $region39: #{tpu_custom_call.1} parent=11 // pred_region
          _
        $region40: #{tpu_custom_call.1} parent=11 // pred_fallthru
          _
        // Predicated region
        $region41: #{tpu_custom_call.1} parent=11 // pred_check
          %p362 = pneg %p216
        $region42: #{tpu_custom_call.1} parent=11 // pred_check_branch
          %364 = sbr.rel (%p362) target = $region44
        $region43: #{tpu_custom_call.1} parent=11 // pred_region
          _
        $region44: #{tpu_custom_call.1} parent=11 // pred_fallthru
          _
        // Predicated region
        $region45: #{tpu_custom_call.1} parent=11 // pred_check
          %p365 = pneg %p237
        $region46: #{tpu_custom_call.1} parent=11 // pred_check_branch
          %367 = sbr.rel (%p365) target = $region48
        $region47: #{tpu_custom_call.1} parent=11 // pred_region
          _
        $region48: #{tpu_custom_call.1} parent=11 // pred_fallthru
          _
        // Predicated region
        $region49: #{tpu_custom_call.1} parent=11 // pred_check
          %p368 = pneg %p258
        $region50: #{tpu_custom_call.1} parent=11 // pred_check_branch
          %370 = sbr.rel (%p368) target = $region52
        $region51: #{tpu_custom_call.1} parent=11 // pred_region
          _
        $region52: #{tpu_custom_call.1} parent=11 // pred_fallthru
          _
        // Predicated region
        $region53: #{tpu_custom_call.1} parent=11 // pred_check
          %p371 = pneg %p279
        $region54: #{tpu_custom_call.1} parent=11 // pred_check_branch
          %373 = sbr.rel (%p371) target = $region56
        $region55: #{tpu_custom_call.1} parent=11 // pred_region
          _
        $region56: #{tpu_custom_call.1} parent=11 // pred_fallthru
          _
        // Predicated region
        $region57: #{tpu_custom_call.1} parent=11 // pred_check
          %p374 = pneg %p300
        $region58: #{tpu_custom_call.1} parent=11 // pred_check_branch
          %376 = sbr.rel (%p374) target = $region60
        $region59: #{tpu_custom_call.1} parent=11 // pred_region
          _
        $region60: #{tpu_custom_call.1} parent=11 // pred_fallthru
          _
      $region12: #{tpu_custom_call.1} parent=5 // pred_fallthru
        _
      %p377 = scmp.lt.s32.totalorder %s22, 2
      // Predicated region
      $region61: #{tpu_custom_call.1} parent=5 // pred_check
        %p378 = pneg %p377
      $region62: #{tpu_custom_call.1} parent=5 // pred_check_branch
        %380 = sbr.rel (%p378) target = $region64
      $region63: #{tpu_custom_call.1} parent=5 // pred_region
        // Predicated region
        $region65: #{tpu_custom_call.1} parent=63 // pred_check
          %p381 = pneg %p42
        $region66: #{tpu_custom_call.1} parent=63 // pred_check_branch
          %383 = sbr.rel (%p381) target = $region68
        $region67: #{tpu_custom_call.1} parent=63 // pred_region
          %p384 = scmp.lt.s32.totalorder %s22, 1
          %s385 = scalar_select %p384, %s22, 1
          %s386 = smul.addr %s385, 8
          %s387 = scalar_lea.vmem %s0, %s386
        $region68: #{tpu_custom_call.1} parent=63 // pred_fallthru
          _
      $region64: #{tpu_custom_call.1} parent=5 // pred_fallthru
        _
      %p388 = scmp.le.s32.totalorder 1, %s22
      %p389 = scmp.lt.s32.totalorder %s22, 3
      %p390 = pnand %p388, %p389
      %p391 = pneg %p390
      // Predicated region
      $region69: #{tpu_custom_call.1} parent=5 // pred_check
        _
      $region70: #{tpu_custom_call.1} parent=5 // pred_check_branch
        %393 = sbr.rel (%p390) target = $region72
      $region71: #{tpu_custom_call.1} parent=5 // pred_region
        %s394 = ssub.s32 %s22, 1
        %p395 = scmp.lt.s32.totalorder %s27, 1
        %s396 = scalar_select %p395, %s27, 1
        %s397 = smul.addr %s396, 8
        %s398 = scalar_lea.vmem %s0, %s397
        %p399 = pneg %p48
        %p400 = pneg %p45
        %p401 = pneg %p69
        %p402 = pneg %p66
        %p403 = pneg %p90
        %p404 = pneg %p87
        %p405 = pneg %p111
        %p406 = pneg %p108
        %p407 = pneg %p132
        %p408 = pneg %p129
        %p409 = pneg %p153
        %p410 = pneg %p150
        %p411 = pneg %p174
        %p412 = pneg %p171
        %p413 = pneg %p195
        %p414 = pneg %p192
        %p415 = pneg %p216
        %p416 = pneg %p213
        %p417 = pneg %p237
        %p418 = pneg %p234
        %p419 = pneg %p258
        %p420 = pneg %p255
        %p421 = pneg %p279
        %p422 = pneg %p276
        %p423 = pneg %p300
        %p424 = pneg %p297
        %p425 = pneg %p326
        %p426 = pneg %p323
        %s427 = sand.u32 %s313, 1
        %s428 = scalar_lea.sflag [#allocation5], %s427
        %s429 = sand.u32 %s313, 1
        %s430 = smul.addr %s429, 8
        %s431 = scalar_lea.vmem [#allocation4], %s430
        %p432 = scmp.lt.s32.totalorder %s27, 1
        %s433 = scalar_select %p432, %s27, 1
        %s434 = smul.addr %s433, 8
        %s435 = scalar_lea.vmem %s0, %s434
        %v437 = vld [vmem:[%s435] sm:$0xff]
        %v438 = vld [vmem:[%s1] sm:$0x1]
        %v439 = vld [vmem:[%s2] sm:$0x1]
        %vm440 = vcmask 261120
        %v441 = vsel %vm440, %v437, 0.0
        %442 = vadd.xlane.f32.xlu0 %v441
        %v443 = vpop.xlane.xlu0 %442
        %v444 = vrcp.pop 32.0
        %v445 = vmul.f32 %v443, %v444
        %v446 = vsub.f32 %v437, %v445
        %v447 = vmul.f32 %v446, %v446
        %v448 = vsel %vm440, %v447, 0.0
        %449 = vadd.xlane.f32.xlu0 %v448
        %v450 = vpop.xlane.xlu0 %449
        %v451 = vmul.f32 %v450, %v444
        %v452 = vadd.f32 %v451, 1e-05
        %v453 = vrsqrt.pop %v452
        %v454 = vmul.f32 %v446, %v453
        %v456 = vlaneseq
        %v457 = vshrl.u32 %v456, 7
        %v458 = vsub.s32 0, %v457
        %v459 = vrot.slane %v438, %v458
        %v461 = vmul.f32 %v454, %v459
        %v463 = vlaneseq
        %v464 = vshrl.u32 %v463, 7
        %v465 = vsub.s32 0, %v464
        %v466 = vrot.slane %v439, %v465
        %v468 = vadd.f32 %v461, %v466
        %v469 = vpack.c.bf16 %v468, %v468
        %v470 = vld [vmem:[%s3] sm:$0xf]
        %v471 = vld [vmem:[%s3 + $0x4] sm:$0xf]
        %v472 = vld [vmem:[%s3 + $0x8] sm:$0xf]
        %v473 = vld [vmem:[%s3 + $0xc] sm:$0xf]
        %v474 = vld [vmem:[%s4] sm:$0x1]
        %v476 = vlaneseq
        %v477 = vshrl.u32 %v476, 7
        %v478 = vsub.s32 0, %v477
        %v479 = vrot.slane %v474, %v478
        %v485 = vunpack.c.l.b16 %v470
        %v486 = vunpack.c.l.b16 %v471
        %v487 = vunpack.c.l.b16 %v472
        %v488 = vunpack.c.l.b16 %v473
        %v489 = vpack.c.b16 %v486, %v485
        %v490 = vpack.c.b16 %v488, %v487
        %v494 = vsel %vm440, %v469, 0
        %496 = vmatprep.subr.bf16.mxu0 0
        %497 = vmatpush1.bf16.msra.mxu0 %v489
        %498 = vmatprep.subr.bf16.mxu0 0
        %499 = vmatpush1.bf16.msra.mxu0 %v490
        %500 = vmatprep.subr.bf16.mxu0 0
        %501 = vmatpush1.bf16.msra.mxu0 0
        %502 = vmatprep.subr.bf16.mxu0 0
        %503 = vmatpush1.bf16.msra.mxu0 0
        %504 = vmatprep.subr.bf16.mxu0 0
        %505 = vmatpush1.bf16.msra.mxu0 0
        %506 = vmatprep.subr.bf16.mxu0 0
        %507 = vmatpush1.bf16.msra.mxu0 0
        %508 = vmatprep.subr.bf16.mxu0 0
        %509 = vmatpush1.bf16.msra.mxu0 0
        %510 = vmatprep.subr.bf16.mxu0 0
        %511 = vmatpush1.bf16.msra.mxu0 0
        %512 = vmatprep.subr.bf16.mxu0 0
        %513 = vmatpush1.bf16.msra.mxu0 0
        %514 = vmatprep.subr.bf16.mxu0 0
        %515 = vmatpush1.bf16.msra.mxu0 0
        %516 = vmatprep.subr.bf16.mxu0 0
        %517 = vmatpush1.bf16.msra.mxu0 0
        %518 = vmatprep.subr.bf16.mxu0 0
        %519 = vmatpush1.bf16.msra.mxu0 0
        %520 = vmatprep.subr.bf16.mxu0 0
        %521 = vmatpush1.bf16.msra.mxu0 0
        %522 = vmatprep.subr.bf16.mxu0 0
        %523 = vmatpush1.bf16.msra.mxu0 0
        %524 = vmatprep.subr.bf16.mxu0 0
        %525 = vmatpush1.bf16.msra.mxu0 0
        %526 = vmatprep.subr.bf16.mxu0 0
        %527 = vmatpush1.bf16.msra.mxu0 0
        %528 = vmatprep.mubr.bf16.mxu0 0
        %529 = vmatmul.mubr.bf16.gmra.mrb[0].mxu0 %v494
        %v530 = vpop.f32.mrb[0].mxu0
        %v531 = vadd.f32 %v479, %v530
        %v532 = vpop.f32.mrb[0].mxu0
        %v533 = vpop.f32.mrb[0].mxu0
        %v534 = vpop.f32.mrb[0].mxu0
        %535 = vdwg.mxu0
        %v536 = vpack.c.bf16 %v531, %v531
        %vm537 = vcmask 781312
        %538 = vst.msk [vmem:[#allocation2] sm:$0xf] %vm537, %v536
        %v539 = vlaneseq
        %v540 = vshrl.u32 %v539, 7
        %v541 = vlaneseq
        %v542 = vand.u32 %v541, 127
        %vm543 = vcmp.le.s32.totalorder %v542, %v540
        %v544 = vld [vmem:[#allocation2] sm:$0xf]
        %v546 = vunpack.c.l.b16 %v544
        %v547 = vpack.c.b16 %v546, %v546
        %548 = vrot.lane.b32.xlu0 %v547, 96
        %v549 = vpop.permute.xlu0 %548
        %vm550 = vcmask 64512
        %v552 = vsel %vm550, %v544, 0
        %v555 = vsel %vm550, %v549, 0
        %557 = vmatprep.subr.bf16.mxu0 0
        %558 = vmatpush1.bf16.xpose.msra.mxu0 %v555
        %559 = vmatprep.subr.bf16.mxu0 0
        %560 = vmatpush1.bf16.xpose.msra.mxu0 0
        %561 = vmatprep.subr.bf16.mxu0 0
        %562 = vmatpush1.bf16.xpose.msra.mxu0 0
        %563 = vmatprep.subr.bf16.mxu0 0
        %564 = vmatpush1.bf16.xpose.msra.mxu0 0
        %565 = vmatprep.subr.bf16.mxu0 0
        %566 = vmatpush1.bf16.xpose.msra.mxu0 0
        %567 = vmatprep.subr.bf16.mxu0 0
        %568 = vmatpush1.bf16.xpose.msra.mxu0 0
        %569 = vmatprep.subr.bf16.mxu0 0
        %570 = vmatpush1.bf16.xpose.msra.mxu0 0
        %571 = vmatprep.subr.bf16.mxu0 0
        %572 = vmatpush1.bf16.xpose.msra.mxu0 0
        %573 = vmatprep.subr.bf16.mxu0 0
        %574 = vmatpush1.bf16.xpose.msra.mxu0 0
        %575 = vmatprep.subr.bf16.mxu0 0
        %576 = vmatpush1.bf16.xpose.msra.mxu0 0
        %577 = vmatprep.subr.bf16.mxu0 0
        %578 = vmatpush1.bf16.xpose.msra.mxu0 0
        %579 = vmatprep.subr.bf16.mxu0 0
        %580 = vmatpush1.bf16.xpose.msra.mxu0 0
        %581 = vmatprep.subr.bf16.mxu0 0
        %582 = vmatpush1.bf16.xpose.msra.mxu0 0
        %583 = vmatprep.subr.bf16.mxu0 0
        %584 = vmatpush1.bf16.xpose.msra.mxu0 0
        %585 = vmatprep.subr.bf16.mxu0 0
        %586 = vmatpush1.bf16.xpose.msra.mxu0 0
        %587 = vmatprep.subr.bf16.mxu0 0
        %588 = vmatpush1.bf16.xpose.msra.mxu0 0
        %589 = vmatprep.mubr.bf16.mxu0 0
        %590 = vmatmul.mubr.bf16.gmra.mrb[0].mxu0 %v552
        %v591 = vpop.f32.mrb[0].mxu0
        %v592 = vadd.f32 0.0, %v591
        %v593 = vpop.f32.mrb[0].mxu0
        %v594 = vpop.f32.mrb[0].mxu0
        %v595 = vpop.f32.mrb[0].mxu0
        %596 = vdwg.mxu0
        %v597 = vmul.f32 %v592, 0.35355338
        %v598 = vsel %vm543, %v597, -1e+30
        %v599 = vsel %vm550, %v598, -inf
        %600 = vmax.xlane.f32.xlu0 %v599
        %v601 = vpop.xlane.xlu0 %600
        %v602 = vsub.f32 %v598, %v601
        %v603 = vmul.f32 %v602, 1.442695
        %v604 = vpow.pop %v603
        %v605 = vsel %vm550, %v604, 0.0
        %606 = vadd.xlane.f32.xlu0 %v605
        %v607 = vpop.xlane.xlu0 %606
        %v608 = vrcp.pop %v607
        %v609 = vmul.f32 %v604, %v608
        %v610 = vpack.c.bf16 %v609, %v609
        %611 = vrot.lane.b32.xlu0 %v547, 64
        %v612 = vpop.permute.xlu0 %611
        %v614 = vsel %vm550, %v610, 0
        %vm616 = vcmask 1043456
        %v618 = vsel %vm616, %v612, 0
        %620 = vmatprep.subr.bf16.mxu0 0
        %621 = vmatpush1.bf16.msra.mxu0 %v618
        %622 = vmatprep.subr.bf16.mxu0 0
        %623 = vmatpush1.bf16.msra.mxu0 0
        %624 = vmatprep.subr.bf16.mxu0 0
        %625 = vmatpush1.bf16.msra.mxu0 0
        %626 = vmatprep.subr.bf16.mxu0 0
        %627 = vmatpush1.bf16.msra.mxu0 0
        %628 = vmatprep.subr.bf16.mxu0 0
        %629 = vmatpush1.bf16.msra.mxu0 0
        %630 = vmatprep.subr.bf16.mxu0 0
        %631 = vmatpush1.bf16.msra.mxu0 0
        %632 = vmatprep.subr.bf16.mxu0 0
        %633 = vmatpush1.bf16.msra.mxu0 0
        %634 = vmatprep.subr.bf16.mxu0 0
        %635 = vmatpush1.bf16.msra.mxu0 0
        %636 = vmatprep.subr.bf16.mxu0 0
        %637 = vmatpush1.bf16.msra.mxu0 0
        %638 = vmatprep.subr.bf16.mxu0 0
        %639 = vmatpush1.bf16.msra.mxu0 0
        %640 = vmatprep.subr.bf16.mxu0 0
        %641 = vmatpush1.bf16.msra.mxu0 0
        %642 = vmatprep.subr.bf16.mxu0 0
        %643 = vmatpush1.bf16.msra.mxu0 0
        %644 = vmatprep.subr.bf16.mxu0 0
        %645 = vmatpush1.bf16.msra.mxu0 0
        %646 = vmatprep.subr.bf16.mxu0 0
        %647 = vmatpush1.bf16.msra.mxu0 0
        %648 = vmatprep.subr.bf16.mxu0 0
        %649 = vmatpush1.bf16.msra.mxu0 0
        %650 = vmatprep.subr.bf16.mxu0 0
        %651 = vmatpush1.bf16.msra.mxu0 0
        %652 = vmatprep.mubr.bf16.mxu0 0
        %653 = vmatmul.mubr.bf16.gmra.mrb[0].mxu0 %v614
        %v654 = vpop.f32.mrb[0].mxu0
        %v655 = vadd.f32 0.0, %v654
        %v656 = vpop.f32.mrb[0].mxu0
        %v657 = vpop.f32.mrb[0].mxu0
        %v658 = vpop.f32.mrb[0].mxu0
        %659 = vdwg.mxu0
        %660 = vrot.lane.b32.xlu0 %v547, 120
        %v661 = vpop.permute.xlu0 %660
        %662 = vrot.lane.b32.xlu0 %v547, 88
        %v663 = vpop.permute.xlu0 %662
        %v665 = vsel %vm550, %v661, 0
        %v668 = vsel %vm550, %v663, 0
        %670 = vmatprep.subr.bf16.mxu0 0
        %671 = vmatpush1.bf16.xpose.msra.mxu0 %v668
        %672 = vmatprep.subr.bf16.mxu0 0
        %673 = vmatpush1.bf16.xpose.msra.mxu0 0
        %674 = vmatprep.subr.bf16.mxu0 0
        %675 = vmatpush1.bf16.xpose.msra.mxu0 0
        %676 = vmatprep.subr.bf16.mxu0 0
        %677 = vmatpush1.bf16.xpose.msra.mxu0 0
        %678 = vmatprep.subr.bf16.mxu0 0
        %679 = vmatpush1.bf16.xpose.msra.mxu0 0
        %680 = vmatprep.subr.bf16.mxu0 0
        %681 = vmatpush1.bf16.xpose.msra.mxu0 0
        %682 = vmatprep.subr.bf16.mxu0 0
        %683 = vmatpush1.bf16.xpose.msra.mxu0 0
        %684 = vmatprep.subr.bf16.mxu0 0
        %685 = vmatpush1.bf16.xpose.msra.mxu0 0
        %686 = vmatprep.subr.bf16.mxu0 0
        %687 = vmatpush1.bf16.xpose.msra.mxu0 0
        %688 = vmatprep.subr.bf16.mxu0 0
        %689 = vmatpush1.bf16.xpose.msra.mxu0 0
        %690 = vmatprep.subr.bf16.mxu0 0
        %691 = vmatpush1.bf16.xpose.msra.mxu0 0
        %692 = vmatprep.subr.bf16.mxu0 0
        %693 = vmatpush1.bf16.xpose.msra.mxu0 0
        %694 = vmatprep.subr.bf16.mxu0 0
        %695 = vmatpush1.bf16.xpose.msra.mxu0 0
        %696 = vmatprep.subr.bf16.mxu0 0
        %697 = vmatpush1.bf16.xpose.msra.mxu0 0
        %698 = vmatprep.subr.bf16.mxu0 0
        %699 = vmatpush1.bf16.xpose.msra.mxu0 0
        %700 = vmatprep.subr.bf16.mxu0 0
        %701 = vmatpush1.bf16.xpose.msra.mxu0 0
        %702 = vmatprep.mubr.bf16.mxu0 0
        %703 = vmatmul.mubr.bf16.gmra.mrb[0].mxu0 %v665
        %v704 = vpop.f32.mrb[0].mxu0
        %v705 = vadd.f32 0.0, %v704
        %v706 = vpop.f32.mrb[0].mxu0
        %v707 = vpop.f32.mrb[0].mxu0
        %v708 = vpop.f32.mrb[0].mxu0
        %709 = vdwg.mxu0
        %v710 = vmul.f32 %v705, 0.35355338
        %v711 = vsel %vm543, %v710, -1e+30
        %v712 = vsel %vm550, %v711, -inf
        %713 = vmax.xlane.f32.xlu0 %v712
        %v714 = vpop.xlane.xlu0 %713
        %v715 = vsub.f32 %v711, %v714
        %v716 = vmul.f32 %v715, 1.442695
        %v717 = vpow.pop %v716
        %v718 = vsel %vm550, %v717, 0.0
        %719 = vadd.xlane.f32.xlu0 %v718
        %v720 = vpop.xlane.xlu0 %719
        %v721 = vrcp.pop %v720
        %v722 = vmul.f32 %v717, %v721
        %v723 = vpack.c.bf16 %v722, %v722
        %724 = vrot.lane.b32.xlu0 %v547, 56
        %v725 = vpop.permute.xlu0 %724
        %v727 = vsel %vm550, %v723, 0
        %v730 = vsel %vm616, %v725, 0
        %732 = vmatprep.subr.bf16.mxu0 0
        %733 = vmatpush1.bf16.msra.mxu0 %v730
        %734 = vmatprep.subr.bf16.mxu0 0
        %735 = vmatpush1.bf16.msra.mxu0 0
        %736 = vmatprep.subr.bf16.mxu0 0
        %737 = vmatpush1.bf16.msra.mxu0 0
        %738 = vmatprep.subr.bf16.mxu0 0
        %739 = vmatpush1.bf16.msra.mxu0 0
        %740 = vmatprep.subr.bf16.mxu0 0
        %741 = vmatpush1.bf16.msra.mxu0 0
        %742 = vmatprep.subr.bf16.mxu0 0
        %743 = vmatpush1.bf16.msra.mxu0 0
        %744 = vmatprep.subr.bf16.mxu0 0
        %745 = vmatpush1.bf16.msra.mxu0 0
        %746 = vmatprep.subr.bf16.mxu0 0
        %747 = vmatpush1.bf16.msra.mxu0 0
        %748 = vmatprep.subr.bf16.mxu0 0
        %749 = vmatpush1.bf16.msra.mxu0 0
        %750 = vmatprep.subr.bf16.mxu0 0
        %751 = vmatpush1.bf16.msra.mxu0 0
        %752 = vmatprep.subr.bf16.mxu0 0
        %753 = vmatpush1.bf16.msra.mxu0 0
        %754 = vmatprep.subr.bf16.mxu0 0
        %755 = vmatpush1.bf16.msra.mxu0 0
        %756 = vmatprep.subr.bf16.mxu0 0
        %757 = vmatpush1.bf16.msra.mxu0 0
        %758 = vmatprep.subr.bf16.mxu0 0
        %759 = vmatpush1.bf16.msra.mxu0 0
        %760 = vmatprep.subr.bf16.mxu0 0
        %761 = vmatpush1.bf16.msra.mxu0 0
        %762 = vmatprep.subr.bf16.mxu0 0
        %763 = vmatpush1.bf16.msra.mxu0 0
        %764 = vmatprep.mubr.bf16.mxu0 0
        %765 = vmatmul.mubr.bf16.gmra.mrb[0].mxu0 %v727
        %v766 = vpop.f32.mrb[0].mxu0
        %v767 = vadd.f32 0.0, %v766
        %v768 = vpop.f32.mrb[0].mxu0
        %v769 = vpop.f32.mrb[0].mxu0
        %v770 = vpop.f32.mrb[0].mxu0
        %771 = vdwg.mxu0
        %772 = vrot.lane.b32.xlu0 %v547, 112
        %v773 = vpop.permute.xlu0 %772
        %774 = vrot.lane.b32.xlu0 %v547, 80
        %v775 = vpop.permute.xlu0 %774
        %v777 = vsel %vm550, %v773, 0
        %v780 = vsel %vm550, %v775, 0
        %782 = vmatprep.subr.bf16.mxu0 0
        %783 = vmatpush1.bf16.xpose.msra.mxu0 %v780
        %784 = vmatprep.subr.bf16.mxu0 0
        %785 = vmatpush1.bf16.xpose.msra.mxu0 0
        %786 = vmatprep.subr.bf16.mxu0 0
        %787 = vmatpush1.bf16.xpose.msra.mxu0 0
        %788 = vmatprep.subr.bf16.mxu0 0
        %789 = vmatpush1.bf16.xpose.msra.mxu0 0
        %790 = vmatprep.subr.bf16.mxu0 0
        %791 = vmatpush1.bf16.xpose.msra.mxu0 0
        %792 = vmatprep.subr.bf16.mxu0 0
        %793 = vmatpush1.bf16.xpose.msra.mxu0 0
        %794 = vmatprep.subr.bf16.mxu0 0
        %795 = vmatpush1.bf16.xpose.msra.mxu0 0
        %796 = vmatprep.subr.bf16.mxu0 0
        %797 = vmatpush1.bf16.xpose.msra.mxu0 0
        %798 = vmatprep.subr.bf16.mxu0 0
        %799 = vmatpush1.bf16.xpose.msra.mxu0 0
        %800 = vmatprep.subr.bf16.mxu0 0
        %801 = vmatpush1.bf16.xpose.msra.mxu0 0
        %802 = vmatprep.subr.bf16.mxu0 0
        %803 = vmatpush1.bf16.xpose.msra.mxu0 0
        %804 = vmatprep.subr.bf16.mxu0 0
        %805 = vmatpush1.bf16.xpose.msra.mxu0 0
        %806 = vmatprep.subr.bf16.mxu0 0
        %807 = vmatpush1.bf16.xpose.msra.mxu0 0
        %808 = vmatprep.subr.bf16.mxu0 0
        %809 = vmatpush1.bf16.xpose.msra.mxu0 0
        %810 = vmatprep.subr.bf16.mxu0 0
        %811 = vmatpush1.bf16.xpose.msra.mxu0 0
        %812 = vmatprep.subr.bf16.mxu0 0
        %813 = vmatpush1.bf16.xpose.msra.mxu0 0
        %814 = vmatprep.mubr.bf16.mxu0 0
        %815 = vmatmul.mubr.bf16.gmra.mrb[0].mxu0 %v777
        %v816 = vpop.f32.mrb[0].mxu0
        %v817 = vadd.f32 0.0, %v816
        %v818 = vpop.f32.mrb[0].mxu0
        %v819 = vpop.f32.mrb[0].mxu0
        %v820 = vpop.f32.mrb[0].mxu0
        %821 = vdwg.mxu0
        %v822 = vmul.f32 %v817, 0.35355338
        %v823 = vsel %vm543, %v822, -1e+30
        %v824 = vsel %vm550, %v823, -inf
        %825 = vmax.xlane.f32.xlu0 %v824
        %v826 = vpop.xlane.xlu0 %825
        %v827 = vsub.f32 %v823, %v826
        %v828 = vmul.f32 %v827, 1.442695
        %v829 = vpow.pop %v828
        %v830 = vsel %vm550, %v829, 0.0
        %831 = vadd.xlane.f32.xlu0 %v830
        %v832 = vpop.xlane.xlu0 %831
        %v833 = vrcp.pop %v832
        %v834 = vmul.f32 %v829, %v833
        %v835 = vpack.c.bf16 %v834, %v834
        %836 = vrot.lane.b32.xlu0 %v547, 48
        %v837 = vpop.permute.xlu0 %836
        %v839 = vsel %vm550, %v835, 0
        %v842 = vsel %vm616, %v837, 0
        %844 = vmatprep.subr.bf16.mxu0 0
        %845 = vmatpush1.bf16.msra.mxu0 %v842
        %846 = vmatprep.subr.bf16.mxu0 0
        %847 = vmatpush1.bf16.msra.mxu0 0
        %848 = vmatprep.subr.bf16.mxu0 0
        %849 = vmatpush1.bf16.msra.mxu0 0
        %850 = vmatprep.subr.bf16.mxu0 0
        %851 = vmatpush1.bf16.msra.mxu0 0
        %852 = vmatprep.subr.bf16.mxu0 0
        %853 = vmatpush1.bf16.msra.mxu0 0
        %854 = vmatprep.subr.bf16.mxu0 0
        %855 = vmatpush1.bf16.msra.mxu0 0
        %856 = vmatprep.subr.bf16.mxu0 0
        %857 = vmatpush1.bf16.msra.mxu0 0
        %858 = vmatprep.subr.bf16.mxu0 0
        %859 = vmatpush1.bf16.msra.mxu0 0
        %860 = vmatprep.subr.bf16.mxu0 0
        %861 = vmatpush1.bf16.msra.mxu0 0
        %862 = vmatprep.subr.bf16.mxu0 0
        %863 = vmatpush1.bf16.msra.mxu0 0
        %864 = vmatprep.subr.bf16.mxu0 0
        %865 = vmatpush1.bf16.msra.mxu0 0
        %866 = vmatprep.subr.bf16.mxu0 0
        %867 = vmatpush1.bf16.msra.mxu0 0
        %868 = vmatprep.subr.bf16.mxu0 0
        %869 = vmatpush1.bf16.msra.mxu0 0
        %870 = vmatprep.subr.bf16.mxu0 0
        %871 = vmatpush1.bf16.msra.mxu0 0
        %872 = vmatprep.subr.bf16.mxu0 0
        %873 = vmatpush1.bf16.msra.mxu0 0
        %874 = vmatprep.subr.bf16.mxu0 0
        %875 = vmatpush1.bf16.msra.mxu0 0
        %876 = vmatprep.mubr.bf16.mxu0 0
        %877 = vmatmul.mubr.bf16.gmra.mrb[0].mxu0 %v839
        %v878 = vpop.f32.mrb[0].mxu0
        %v879 = vadd.f32 0.0, %v878
        %v880 = vpop.f32.mrb[0].mxu0
        %v881 = vpop.f32.mrb[0].mxu0
        %v882 = vpop.f32.mrb[0].mxu0
        %883 = vdwg.mxu0
        %884 = vrot.lane.b32.xlu0 %v547, 104
        %v885 = vpop.permute.xlu0 %884
        %886 = vrot.lane.b32.xlu0 %v547, 72
        %v887 = vpop.permute.xlu0 %886
        %v889 = vsel %vm550, %v885, 0
        %v892 = vsel %vm550, %v887, 0
        %894 = vmatprep.subr.bf16.mxu0 0
        %895 = vmatpush1.bf16.xpose.msra.mxu0 %v892
        %896 = vmatprep.subr.bf16.mxu0 0
        %897 = vmatpush1.bf16.xpose.msra.mxu0 0
        %898 = vmatprep.subr.bf16.mxu0 0
        %899 = vmatpush1.bf16.xpose.msra.mxu0 0
        %900 = vmatprep.subr.bf16.mxu0 0
        %901 = vmatpush1.bf16.xpose.msra.mxu0 0
        %902 = vmatprep.subr.bf16.mxu0 0
        %903 = vmatpush1.bf16.xpose.msra.mxu0 0
        %904 = vmatprep.subr.bf16.mxu0 0
        %905 = vmatpush1.bf16.xpose.msra.mxu0 0
        %906 = vmatprep.subr.bf16.mxu0 0
        %907 = vmatpush1.bf16.xpose.msra.mxu0 0
        %908 = vmatprep.subr.bf16.mxu0 0
        %909 = vmatpush1.bf16.xpose.msra.mxu0 0
        %910 = vmatprep.subr.bf16.mxu0 0
        %911 = vmatpush1.bf16.xpose.msra.mxu0 0
        %912 = vmatprep.subr.bf16.mxu0 0
        %913 = vmatpush1.bf16.xpose.msra.mxu0 0
        %914 = vmatprep.subr.bf16.mxu0 0
        %915 = vmatpush1.bf16.xpose.msra.mxu0 0
        %916 = vmatprep.subr.bf16.mxu0 0
        %917 = vmatpush1.bf16.xpose.msra.mxu0 0
        %918 = vmatprep.subr.bf16.mxu0 0
        %919 = vmatpush1.bf16.xpose.msra.mxu0 0
        %920 = vmatprep.subr.bf16.mxu0 0
        %921 = vmatpush1.bf16.xpose.msra.mxu0 0
        %922 = vmatprep.subr.bf16.mxu0 0
        %923 = vmatpush1.bf16.xpose.msra.mxu0 0
        %924 = vmatprep.subr.bf16.mxu0 0
        %925 = vmatpush1.bf16.xpose.msra.mxu0 0
        %926 = vmatprep.mubr.bf16.mxu0 0
        %927 = vmatmul.mubr.bf16.gmra.mrb[0].mxu0 %v889
        %v928 = vpop.f32.mrb[0].mxu0
        %v929 = vadd.f32 0.0, %v928
        %v930 = vpop.f32.mrb[0].mxu0
        %v931 = vpop.f32.mrb[0].mxu0
        %v932 = vpop.f32.mrb[0].mxu0
        %933 = vdwg.mxu0
        %v934 = vmul.f32 %v929, 0.35355338
        %v935 = vsel %vm543, %v934, -1e+30
        %v936 = vsel %vm550, %v935, -inf
        %937 = vmax.xlane.f32.xlu0 %v936
        %v938 = vpop.xlane.xlu0 %937
        %v939 = vsub.f32 %v935, %v938
        %v940 = vmul.f32 %v939, 1.442695
        %v941 = vpow.pop %v940
        %v942 = vsel %vm550, %v941, 0.0
        %943 = vadd.xlane.f32.xlu0 %v942
        %v944 = vpop.xlane.xlu0 %943
        %v945 = vrcp.pop %v944
        %v946 = vmul.f32 %v941, %v945
        %v947 = vpack.c.bf16 %v946, %v946
        %948 = vrot.lane.b32.xlu0 %v547, 40
        %v949 = vpop.permute.xlu0 %948
        %v951 = vsel %vm550, %v947, 0
        %v954 = vsel %vm616, %v949, 0
        %956 = vmatprep.subr.bf16.mxu0 0
        %957 = vmatpush1.bf16.msra.mxu0 %v954
        %958 = vmatprep.subr.bf16.mxu0 0
        %959 = vmatpush1.bf16.msra.mxu0 0
        %960 = vmatprep.subr.bf16.mxu0 0
        %961 = vmatpush1.bf16.msra.mxu0 0
        %962 = vmatprep.subr.bf16.mxu0 0
        %963 = vmatpush1.bf16.msra.mxu0 0
        %964 = vmatprep.subr.bf16.mxu0 0
        %965 = vmatpush1.bf16.msra.mxu0 0
        %966 = vmatprep.subr.bf16.mxu0 0
        %967 = vmatpush1.bf16.msra.mxu0 0
        %968 = vmatprep.subr.bf16.mxu0 0
        %969 = vmatpush1.bf16.msra.mxu0 0
        %970 = vmatprep.subr.bf16.mxu0 0
        %971 = vmatpush1.bf16.msra.mxu0 0
        %972 = vmatprep.subr.bf16.mxu0 0
        %973 = vmatpush1.bf16.msra.mxu0 0
        %974 = vmatprep.subr.bf16.mxu0 0
        %975 = vmatpush1.bf16.msra.mxu0 0
        %976 = vmatprep.subr.bf16.mxu0 0
        %977 = vmatpush1.bf16.msra.mxu0 0
        %978 = vmatprep.subr.bf16.mxu0 0
        %979 = vmatpush1.bf16.msra.mxu0 0
        %980 = vmatprep.subr.bf16.mxu0 0
        %981 = vmatpush1.bf16.msra.mxu0 0
        %982 = vmatprep.subr.bf16.mxu0 0
        %983 = vmatpush1.bf16.msra.mxu0 0
        %984 = vmatprep.subr.bf16.mxu0 0
        %985 = vmatpush1.bf16.msra.mxu0 0
        %986 = vmatprep.subr.bf16.mxu0 0
        %987 = vmatpush1.bf16.msra.mxu0 0
        %988 = vmatprep.mubr.bf16.mxu0 0
        %989 = vmatmul.mubr.bf16.gmra.mrb[0].mxu0 %v951
        %v990 = vpop.f32.mrb[0].mxu0
        %v991 = vadd.f32 0.0, %v990
        %v992 = vpop.f32.mrb[0].mxu0
        %v993 = vpop.f32.mrb[0].mxu0
        %v994 = vpop.f32.mrb[0].mxu0
        %995 = vdwg.mxu0
        %997 = vrot.lane.b32.xlu0 %v767, 8
        %v998 = vpop.permute.xlu0 %997
        %1001 = vrot.lane.b32.xlu0 %v879, 16
        %v1002 = vpop.permute.xlu0 %1001
        %1005 = vrot.lane.b32.xlu0 %v991, 24
        %v1006 = vpop.permute.xlu0 %1005
        %v1008 = vsel %vm550, %v655, %v998
        %vm1009 = vcmask 130048
        %v1010 = vsel %vm1009, %v1008, %v1002
        %vm1011 = vcmask 195584
        %v1012 = vsel %vm1011, %v1010, %v1006
        %v1013 = vpack.c.bf16 %v1012, %v1012
        %vm1014 = vcmask 257024
        %1015 = vst.msk [vmem:[#allocation3] sm:$0xf] %vm1014, %v1013
        %v1016 = vld [vmem:[#allocation3] sm:$0xf]
        %v1017 = vld [vmem:[%s5] sm:$0xf]
        %v1018 = vld [vmem:[%s5 + $0x4] sm:$0xf]
        %v1019 = vld [vmem:[%s5 + $0x8] sm:$0xf]
        %v1020 = vld [vmem:[%s5 + $0xc] sm:$0xf]
        %v1021 = vld [vmem:[%s6] sm:$0x1]
        %v1023 = vlaneseq
        %v1024 = vshrl.u32 %v1023, 7
        %v1025 = vsub.s32 0, %v1024
        %v1026 = vrot.slane %v1021, %v1025
        %v1032 = vunpack.c.l.b16 %v1017
        %v1033 = vunpack.c.l.b16 %v1018
        %v1034 = vunpack.c.l.b16 %v1019
        %v1035 = vunpack.c.l.b16 %v1020
        %v1036 = vpack.c.b16 %v1033, %v1032
        %v1037 = vpack.c.b16 %v1035, %v1034
        %v1041 = vsel %vm440, %v1016, 0
        %1043 = vmatprep.subr.bf16.mxu0 0
        %1044 = vmatpush1.bf16.msra.mxu0 %v1036
        %1045 = vmatprep.subr.bf16.mxu0 0
        %1046 = vmatpush1.bf16.msra.mxu0 %v1037
        %1047 = vmatprep.subr.bf16.mxu0 0
        %1048 = vmatpush1.bf16.msra.mxu0 0
        %1049 = vmatprep.subr.bf16.mxu0 0
        %1050 = vmatpush1.bf16.msra.mxu0 0
        %1051 = vmatprep.subr.bf16.mxu0 0
        %1052 = vmatpush1.bf16.msra.mxu0 0
        %1053 = vmatprep.subr.bf16.mxu0 0
        %1054 = vmatpush1.bf16.msra.mxu0 0
        %1055 = vmatprep.subr.bf16.mxu0 0
        %1056 = vmatpush1.bf16.msra.mxu0 0
        %1057 = vmatprep.subr.bf16.mxu0 0
        %1058 = vmatpush1.bf16.msra.mxu0 0
        %1059 = vmatprep.subr.bf16.mxu0 0
        %1060 = vmatpush1.bf16.msra.mxu0 0
        %1061 = vmatprep.subr.bf16.mxu0 0
        %1062 = vmatpush1.bf16.msra.mxu0 0
        %1063 = vmatprep.subr.bf16.mxu0 0
        %1064 = vmatpush1.bf16.msra.mxu0 0
        %1065 = vmatprep.subr.bf16.mxu0 0
        %1066 = vmatpush1.bf16.msra.mxu0 0
        %1067 = vmatprep.subr.bf16.mxu0 0
        %1068 = vmatpush1.bf16.msra.mxu0 0
        %1069 = vmatprep.subr.bf16.mxu0 0
        %1070 = vmatpush1.bf16.msra.mxu0 0
        %1071 = vmatprep.subr.bf16.mxu0 0
        %1072 = vmatpush1.bf16.msra.mxu0 0
        %1073 = vmatprep.subr.bf16.mxu0 0
        %1074 = vmatpush1.bf16.msra.mxu0 0
        %1075 = vmatprep.mubr.bf16.mxu0 0
        %1076 = vmatmul.mubr.bf16.gmra.mrb[0].mxu0 %v1041
        %v1077 = vpop.f32.mrb[0].mxu0
        %v1078 = vadd.f32 %v1026, %v1077
        %v1079 = vpop.f32.mrb[0].mxu0
        %v1080 = vpop.f32.mrb[0].mxu0
        %v1081 = vpop.f32.mrb[0].mxu0
        %1082 = vdwg.mxu0
        %v1083 = vadd.f32 %v437, %v1078
        %v1084 = vld [vmem:[%s7] sm:$0x1]
        %v1085 = vld [vmem:[%s8] sm:$0x1]
        %v1086 = vsel %vm440, %v1083, 0.0
        %1087 = vadd.xlane.f32.xlu0 %v1086
        %v1088 = vpop.xlane.xlu0 %1087
        %v1089 = vmul.f32 %v1088, %v444
        %v1090 = vsub.f32 %v1083, %v1089
        %v1091 = vmul.f32 %v1090, %v1090
        %v1092 = vsel %vm440, %v1091, 0.0
        %1093 = vadd.xlane.f32.xlu0 %v1092
        %v1094 = vpop.xlane.xlu0 %1093
        %v1095 = vmul.f32 %v1094, %v444
        %v1096 = vadd.f32 %v1095, 1e-05
        %v1097 = vrsqrt.pop %v1096
        %v1098 = vmul.f32 %v1090, %v1097
        %v1100 = vlaneseq
        %v1101 = vshrl.u32 %v1100, 7
        %v1102 = vsub.s32 0, %v1101
        %v1103 = vrot.slane %v1084, %v1102
        %v1105 = vmul.f32 %v1098, %v1103
        %v1107 = vlaneseq
        %v1108 = vshrl.u32 %v1107, 7
        %v1109 = vsub.s32 0, %v1108
        %v1110 = vrot.slane %v1085, %v1109
        %v1112 = vadd.f32 %v1105, %v1110
        %v1113 = vpack.c.bf16 %v1112, %v1112
        %v1114 = vld [vmem:[%s9] sm:$0xf]
        %v1115 = vld [vmem:[%s9 + $0x4] sm:$0xf]
        %v1116 = vld [vmem:[%s9 + $0x8] sm:$0xf]
        %v1117 = vld [vmem:[%s9 + $0xc] sm:$0xf]
        %v1118 = vld [vmem:[%s10] sm:$0x1]
        %v1120 = vlaneseq
        %v1121 = vshrl.u32 %v1120, 7
        %v1122 = vsub.s32 0, %v1121
        %v1123 = vrot.slane %v1118, %v1122
        %v1129 = vunpack.c.l.b16 %v1114
        %v1130 = vunpack.c.l.b16 %v1115
        %v1131 = vunpack.c.l.b16 %v1116
        %v1132 = vunpack.c.l.b16 %v1117
        %v1133 = vpack.c.b16 %v1130, %v1129
        %v1134 = vpack.c.b16 %v1132, %v1131
        %v1138 = vsel %vm440, %v1113, 0
        %1140 = vmatprep.subr.bf16.mxu0 0
        %1141 = vmatpush1.bf16.msra.mxu0 %v1133
        %1142 = vmatprep.subr.bf16.mxu0 0
        %1143 = vmatpush1.bf16.msra.mxu0 %v1134
        %1144 = vmatprep.subr.bf16.mxu0 0
        %1145 = vmatpush1.bf16.msra.mxu0 0
        %1146 = vmatprep.subr.bf16.mxu0 0
        %1147 = vmatpush1.bf16.msra.mxu0 0
        %1148 = vmatprep.subr.bf16.mxu0 0
        %1149 = vmatpush1.bf16.msra.mxu0 0
        %1150 = vmatprep.subr.bf16.mxu0 0
        %1151 = vmatpush1.bf16.msra.mxu0 0
        %1152 = vmatprep.subr.bf16.mxu0 0
        %1153 = vmatpush1.bf16.msra.mxu0 0
        %1154 = vmatprep.subr.bf16.mxu0 0
        %1155 = vmatpush1.bf16.msra.mxu0 0
        %1156 = vmatprep.subr.bf16.mxu0 0
        %1157 = vmatpush1.bf16.msra.mxu0 0
        %1158 = vmatprep.subr.bf16.mxu0 0
        %1159 = vmatpush1.bf16.msra.mxu0 0
        %1160 = vmatprep.subr.bf16.mxu0 0
        %1161 = vmatpush1.bf16.msra.mxu0 0
        %1162 = vmatprep.subr.bf16.mxu0 0
        %1163 = vmatpush1.bf16.msra.mxu0 0
        %1164 = vmatprep.subr.bf16.mxu0 0
        %1165 = vmatpush1.bf16.msra.mxu0 0
        %1166 = vmatprep.subr.bf16.mxu0 0
        %1167 = vmatpush1.bf16.msra.mxu0 0
        %1168 = vmatprep.subr.bf16.mxu0 0
        %1169 = vmatpush1.bf16.msra.mxu0 0
        %1170 = vmatprep.subr.bf16.mxu0 0
        %1171 = vmatpush1.bf16.msra.mxu0 0
        %1172 = vmatprep.mubr.bf16.mxu0 0
        %1173 = vmatmul.mubr.bf16.gmra.mrb[0].mxu0 %v1138
        %v1174 = vpop.f32.mrb[0].mxu0
        %v1175 = vadd.f32 %v1123, %v1174
        %v1176 = vpop.f32.mrb[0].mxu0
        %v1177 = vpop.f32.mrb[0].mxu0
        %v1178 = vpop.f32.mrb[0].mxu0
        %1179 = vdwg.mxu0
        %v1180 = vmul.f32 %v1175, 0.5
        %v1181 = vmul.f32 %v1175, %v1175
        %v1182 = vmul.f32 %v1175, %v1181
        %v1183 = vmul.f32 %v1182, 0.044715
        %v1184 = vadd.f32 %v1175, %v1183
        %v1185 = vmul.f32 %v1184, 0.7978846
        %v1186 = vtanh.pop %v1185
        %v1187 = vadd.f32 %v1186, 1.0
        %v1188 = vmul.f32 %v1180, %v1187
        %v1189 = vpack.c.bf16 %v1188, %v1188
        %v1190 = vld [vmem:[%s11] sm:$0xf]
        %v1191 = vld [vmem:[%s11 + $0x4] sm:$0xf]
        %v1192 = vld [vmem:[%s11 + $0x8] sm:$0xf]
        %v1193 = vld [vmem:[%s11 + $0xc] sm:$0xf]
        %v1194 = vld [vmem:[%s11 + $0x10] sm:$0xf]
        %v1195 = vld [vmem:[%s11 + $0x14] sm:$0xf]
        %v1196 = vld [vmem:[%s11 + $0x18] sm:$0xf]
        %v1197 = vld [vmem:[%s11 + $0x1c] sm:$0xf]
        %v1198 = vld [vmem:[%s11 + $0x20] sm:$0xf]
        %v1199 = vld [vmem:[%s11 + $0x24] sm:$0xf]
        %v1200 = vld [vmem:[%s11 + $0x28] sm:$0xf]
        %v1201 = vld [vmem:[%s11 + $0x2c] sm:$0xf]
        %v1202 = vld [vmem:[%s11 + $0x30] sm:$0xf]
        %v1203 = vld [vmem:[%s11 + $0x34] sm:$0xf]
        %v1204 = vld [vmem:[%s11 + $0x38] sm:$0xf]
        %v1205 = vld [vmem:[%s11 + $0x3c] sm:$0xf]
        %v1222 = vunpack.c.l.b16 %v1190
        %v1223 = vunpack.c.l.b16 %v1191
        %v1224 = vunpack.c.l.b16 %v1192
        %v1225 = vunpack.c.l.b16 %v1193
        %v1226 = vunpack.c.l.b16 %v1194
        %v1227 = vunpack.c.l.b16 %v1195
        %v1228 = vunpack.c.l.b16 %v1196
        %v1229 = vunpack.c.l.b16 %v1197
        %v1230 = vunpack.c.l.b16 %v1198
        %v1231 = vunpack.c.l.b16 %v1199
        %v1232 = vunpack.c.l.b16 %v1200
        %v1233 = vunpack.c.l.b16 %v1201
        %v1234 = vunpack.c.l.b16 %v1202
        %v1235 = vunpack.c.l.b16 %v1203
        %v1236 = vunpack.c.l.b16 %v1204
        %v1237 = vunpack.c.l.b16 %v1205
        %v1238 = vpack.c.b16 %v1223, %v1222
        %v1239 = vpack.c.b16 %v1225, %v1224
        %v1240 = vpack.c.b16 %v1227, %v1226
        %v1241 = vpack.c.b16 %v1229, %v1228
        %v1242 = vpack.c.b16 %v1231, %v1230
        %v1243 = vpack.c.b16 %v1233, %v1232
        %v1244 = vpack.c.b16 %v1235, %v1234
        %v1245 = vpack.c.b16 %v1237, %v1236
        %1254 = vmatprep.subr.bf16.mxu0 0
        %1255 = vmatpush1.bf16.msra.mxu0 %v1238
        %1256 = vmatprep.subr.bf16.mxu0 0
        %1257 = vmatpush1.bf16.msra.mxu0 %v1239
        %1258 = vmatprep.subr.bf16.mxu0 0
        %1259 = vmatpush1.bf16.msra.mxu0 %v1240
        %1260 = vmatprep.subr.bf16.mxu0 0
        %1261 = vmatpush1.bf16.msra.mxu0 %v1241
        %1262 = vmatprep.subr.bf16.mxu0 0
        %1263 = vmatpush1.bf16.msra.mxu0 %v1242
        %1264 = vmatprep.subr.bf16.mxu0 0
        %1265 = vmatpush1.bf16.msra.mxu0 %v1243
        %1266 = vmatprep.subr.bf16.mxu0 0
        %1267 = vmatpush1.bf16.msra.mxu0 %v1244
        %1268 = vmatprep.subr.bf16.mxu0 0
        %1269 = vmatpush1.bf16.msra.mxu0 %v1245
        %1270 = vmatprep.subr.bf16.mxu0 0
        %1271 = vmatpush1.bf16.msra.mxu0 0
        %1272 = vmatprep.subr.bf16.mxu0 0
        %1273 = vmatpush1.bf16.msra.mxu0 0
        %1274 = vmatprep.subr.bf16.mxu0 0
        %1275 = vmatpush1.bf16.msra.mxu0 0
        %1276 = vmatprep.subr.bf16.mxu0 0
        %1277 = vmatpush1.bf16.msra.mxu0 0
        %1278 = vmatprep.subr.bf16.mxu0 0
        %1279 = vmatpush1.bf16.msra.mxu0 0
        %1280 = vmatprep.subr.bf16.mxu0 0
        %1281 = vmatpush1.bf16.msra.mxu0 0
        %1282 = vmatprep.subr.bf16.mxu0 0
        %1283 = vmatpush1.bf16.msra.mxu0 0
        %1284 = vmatprep.subr.bf16.mxu0 0
        %1285 = vmatpush1.bf16.msra.mxu0 0
        %1286 = vmatprep.mubr.bf16.mxu0 0
        %1287 = vmatmul.mubr.bf16.gmra.mrb[0].mxu0 %v1189
        %v1288 = vpop.f32.mrb[0].mxu0
        %v1289 = vadd.f32 0.0, %v1288
        %v1290 = vpop.f32.mrb[0].mxu0
        %v1291 = vpop.f32.mrb[0].mxu0
        %v1292 = vpop.f32.mrb[0].mxu0
        %1293 = vdwg.mxu0
        %v1294 = vadd.f32 %v1083, %v1289
        %v1295 = vld [vmem:[%s12] sm:$0x1]
        %v1297 = vlaneseq
        %v1298 = vshrl.u32 %v1297, 7
        %v1299 = vsub.s32 0, %v1298
        %v1300 = vrot.slane %v1295, %v1299
        %v1302 = vadd.f32 %v1294, %v1300
        %1303 = vst.msk [vmem:[%s431] sm:$0xff] %vm440, %v1302
        %s1304 = sand.u32 %s313, 1
        %s1305 = scalar_lea.sflag [#allocation5], %s1304
        %s1306 = sand.u32 %s313, 1
        %s1307 = smul.addr %s1306, 8
        %s1308 = scalar_lea.vmem [#allocation4], %s1307
        // Predicated region
        $region73: #{tpu_custom_call.1} parent=71 // pred_check
          %p1309 = pneg %p323
        $region74: #{tpu_custom_call.1} parent=71 // pred_check_branch
          %1311 = sbr.rel (%p1309) target = $region76
        $region75: #{tpu_custom_call.1} parent=71 // pred_region
          %s1313 = ssub.s32 128, 128
          %1314 = vsyncadd %s1305, %s1313
          %s1315 = smul.addr %s27, 128
          %s1316 = scalar_lea.hbm %s13, %s1315
          %s1318 = sshll.u32 %s1308, 4
          %s1319 = int_to_ptr.vmem [resolvable:$true] %s1318
          %1321 = dma.vmem_to_hbm [thread:$0]  %s1319, 128, %s1316, %s1305
        $region76: #{tpu_custom_call.1} parent=71 // pred_fallthru
          _
      $region72: #{tpu_custom_call.1} parent=5 // pred_fallthru
        _
      %p1322 = scmp.le.s32.totalorder 2, %s22
      // Predicated region
      $region77: #{tpu_custom_call.1} parent=5 // pred_check
        %p1323 = pneg %p1322
      $region78: #{tpu_custom_call.1} parent=5 // pred_check_branch
        %1325 = sbr.rel (%p1323) target = $region80
      $region79: #{tpu_custom_call.1} parent=5 // pred_region
        %s1326 = ssub.s32 %s22, 2
        // Predicated region
        $region81: #{tpu_custom_call.1} parent=79 // pred_check
          %p1327 = pneg %p329
        $region82: #{tpu_custom_call.1} parent=79 // pred_check_branch
          %1329 = sbr.rel (%p1327) target = $region84
        $region83: #{tpu_custom_call.1} parent=79 // pred_region
          %s1330 = sand.u32 %s314, 1
          %s1331 = scalar_lea.sflag [#allocation5], %s1330
          %s1332 = sand.u32 %s314, 1
          %s1333 = smul.addr %s1332, 8
          %s1334 = scalar_lea.vmem [#allocation4], %s1333
          %1335 = dma.done %s1331, 128
        $region84: #{tpu_custom_call.1} parent=79 // pred_fallthru
          _
      $region80: #{tpu_custom_call.1} parent=5 // pred_fallthru
        _
    $region6: #{tpu_custom_call.1} parent=1 // loop_footer
      %s26 = sadd.s32 1, %s22
    $region7: #{tpu_custom_call.1} parent=1 // loop_footer_branch
      %21 = sbr.rel target = $region3
    $region8: #{tpu_custom_call.1} parent=1 // loop_exit
      _
    %1336 = vsyncpa [#allocation5], 1
    %s1337 = scalar_lea.sflag [#allocation5], 1
    %1338 = vsyncpa %s1337, 1

</llo_original>
